<compile_context>
chip_gen: v7x
topology: tpu7x:2x2x1
jax: 0.10.0
libtpu: 0.0.40
codegen_flags: <defaults>
</compile_context>

<pallas_src>
import functools

import jax
import jax.numpy as jnp
import numpy as np
from jax.experimental import pallas as pl
from jax.experimental.pallas import tpu as pltpu


# ----------------------------------------------------------------------------- kernel


def _make_kernel(nlayers: int, T: int, B: int, HP: int):
    """GRU stack + attention head, single invocation, unrolled time loop.

    Ref order:
      x_flat      (T*B, D)
      w_ih0       (D, 3*HP)              layer-0 input-proj weights (gate blocks 128-aligned)
      [w_ih_rest  (nlayers-1, HP, 3*HP)] only when nlayers > 1
      w_hh_all    (nlayers, HP, 3*HP)
      biases      (2*nlayers, 3*HP)      rows: [b_ih0, b_hh0, b_ih1, b_hh1, ...]
      w_att       (HP, HP)
      bu          (2, HP)                rows: [b_att, u_context]
      out         (B, HP)
    """
    GP = HP  # per-gate padded width (lane-aligned)

    def kernel(*refs):
        idx = 0
        x_ref = refs[idx]; idx += 1
        w_ih0_ref = refs[idx]; idx += 1
        if nlayers > 1:
            w_ih_rest_ref = refs[idx]; idx += 1
        w_hh_ref = refs[idx]; idx += 1
        b_ref = refs[idx]; idx += 1
        w_att_ref = refs[idx]; idx += 1
        bu_ref = refs[idx]; idx += 1
        out_ref = refs[idx]

        # --- time-invariant operands, hoisted out of the recurrence -------------
        w_hh = [w_hh_ref[l] for l in range(nlayers)]
        w_ih_up = [w_ih_rest_ref[l] for l in range(nlayers - 1)] if nlayers > 1 else []
        b_ih = [jnp.broadcast_to(b_ref[2 * l:2 * l + 1], (B, 3 * GP)) for l in range(nlayers)]
        b_hh = [jnp.broadcast_to(b_ref[2 * l + 1:2 * l + 2], (B, 3 * GP)) for l in range(nlayers)]

        # Layer-0 input projection for ALL timesteps in one matmul (no recurrence dep).
        gx0_all = jnp.dot(x_ref[...], w_ih0_ref[...],
                          preferred_element_type=jnp.float32)  # (T*B, 3*GP)

        def gru_cell(gx, gh, h_prev):
            # 128-lane aligned gate slices (free on the lane axis).
            r = jax.nn.sigmoid(gx[:, :GP] + gh[:, :GP])
            z = jax.nn.sigmoid(gx[:, GP:2 * GP] + gh[:, GP:2 * GP])
            n = jnp.tanh(gx[:, 2 * GP:] + r * gh[:, 2 * GP:])
            return (1.0 - z) * n + z * h_prev

        # --- unrolled time loop (T is static & small) ----------------------------
        h = [jnp.zeros((B, HP), jnp.float32) for _ in range(nlayers)]
        for t in range(T):
            # layer 0: only the recurrent matmul remains on the serial path
            gx = gx0_all[t * B:(t + 1) * B, :] + b_ih[0]
            gh = jnp.dot(h[0], w_hh[0], preferred_element_type=jnp.float32) + b_hh[0]
            h[0] = gru_cell(gx, gh, h[0])
            # stacked layers
            for l in range(1, nlayers):
                gx = jnp.dot(h[l - 1], w_ih_up[l - 1],
                             preferred_element_type=jnp.float32) + b_ih[l]
                gh = jnp.dot(h[l], w_hh[l],
                             preferred_element_type=jnp.float32) + b_hh[l]
                h[l] = gru_cell(gx, gh, h[l])

        # --- attention head on last timestep's top-layer hidden state ------------
        last = h[nlayers - 1]                                  # (B, HP), lanes >= H are 0
        h_lin = jnp.tanh(jnp.dot(last, w_att_ref[...],
                                 preferred_element_type=jnp.float32)
                         + jnp.broadcast_to(bu_ref[0:1], (B, HP)))
        out_ref[...] = h_lin * jnp.broadcast_to(bu_ref[1:2], (B, HP))

    return kernel


# ----------------------------------------------------------------------------- packing helpers


def _pack_gate_weight(w, HP):
    """(3H, d_in) torch layout -> (d_in, 3*HP), gate g at lane offset g*HP."""
    H = w.shape[0] // 3
    d_in = w.shape[1]
    out = jnp.zeros((d_in, 3 * HP), jnp.float32)
    for g in range(3):
        out = out.at[:, g * HP:g * HP + H].set(w[g * H:(g + 1) * H, :].T)
    return out


def _pack_gate_bias(b, HP):
    """(3H,) -> (3*HP,), gate g at lane offset g*HP."""
    H = b.shape[0] // 3
    out = jnp.zeros((3 * HP,), jnp.float32)
    for g in range(3):
        out = out.at[g * HP:g * HP + H].set(b[g * H:(g + 1) * H])
    return out


def _pad_rows(m, rows):
    return jnp.zeros((rows, m.shape[1]), jnp.float32).at[:m.shape[0]].set(m)


# ----------------------------------------------------------------------------- wrapper


def han_forward_pallas(x_btd, params, *, nlayers: int, num_hid: int):
    """x_btd: (B, T, D) float32 (PyTorch batch_first layout)."""
    B, T, D = x_btd.shape
    H = num_hid
    HP = ((H + 127) // 128) * 128     # lane-padded hidden / per-gate width
    BP = ((B + 7) // 8) * 8           # sublane-padded batch

    # time-major, batch-padded, flattened for the single layer-0 matmul
    x_tbd = jnp.transpose(x_btd, (1, 0, 2)).astype(jnp.float32)
    if BP != B:
        x_tbd = jnp.pad(x_tbd, ((0, 0), (0, BP - B), (0, 0)))
    x_flat = x_tbd.reshape(T * BP, D)

    # ----- pack parameters into a few lane-aligned slabs -----
    w_ih0 = _pack_gate_weight(params["layers"][0][0], HP)                       # (D, 3HP)
    w_hh_all = jnp.stack(
        [_pad_rows(_pack_gate_weight(params["layers"][l][1], HP), HP)
         for l in range(nlayers)])                                              # (L, HP, 3HP)
    if nlayers > 1:
        w_ih_rest = jnp.stack(
            [_pad_rows(_pack_gate_weight(params["layers"][l][0], HP), HP)
             for l in range(1, nlayers)])                                       # (L-1, HP, 3HP)
    bias_rows = []
    for l in range(nlayers):
        bias_rows.append(_pack_gate_bias(params["layers"][l][2], HP))           # b_ih
        bias_rows.append(_pack_gate_bias(params["layers"][l][3], HP))           # b_hh
    biases = jnp.stack(bias_rows)                                               # (2L, 3HP)

    w_att_p = jnp.zeros((HP, HP), jnp.float32).at[:H, :H].set(params["w_att"].T)
    b_att_p = jnp.zeros((HP,), jnp.float32).at[:H].set(params["b_att"])
    u_ctx_p = jnp.zeros((HP,), jnp.float32).at[:H].set(params["u_ctx"])
    bu = jnp.stack([b_att_p, u_ctx_p])                                          # (2, HP)

    args = [x_flat, w_ih0]
    if nlayers > 1:
        args.append(w_ih_rest)
    args += [w_hh_all, biases, w_att_p, bu]

    kernel = _make_kernel(nlayers, T, BP, HP)
    vmem_spec = pl.BlockSpec(memory_space=pltpu.MemorySpace.VMEM)

    out = pl.pallas_call(
        kernel,
        out_shape=jax.ShapeDtypeStruct((BP, HP), jnp.float32),
        in_specs=[vmem_spec] * len(args),
        out_specs=vmem_spec,
    )(*args)
    return out[:B, :H]


# ----------------------------------------------------------------------------- reference & init


def han_forward_ref(x_btd, params, *, nlayers: int, num_hid: int):
    """Pure-JAX reference mirroring torch.nn.GRU + AttentionLayer early return."""
    B, T, _ = x_btd.shape
    H = num_hid
    out = x_btd
    for l in range(nlayers):
        w_ih, w_hh, b_ih, b_hh = params["layers"][l]
        h = jnp.zeros((B, H), jnp.float32)
        hs = []
        for t in range(T):
            xt = out[:, t]
            gx = xt @ w_ih.T + b_ih
            gh = h @ w_hh.T + b_hh
            r = jax.nn.sigmoid(gx[:, :H] + gh[:, :H])
            z = jax.nn.sigmoid(gx[:, H:2 * H] + gh[:, H:2 * H])
            n = jnp.tanh(gx[:, 2 * H:] + r * gh[:, 2 * H:])
            h = (1.0 - z) * n + z * h
            hs.append(h)
        out = jnp.stack(hs, axis=1)
    last = out[:, -1]
    h_lin = jnp.tanh(last @ params["w_att"].T + params["b_att"])
    return h_lin * params["u_ctx"]


def init_params(key, *, in_dim: int, num_hid: int, nlayers: int):
    """Deterministic init matching the PyTorch parameter shapes."""
    H = num_hid
    params = {"layers": []}
    for l in range(nlayers):
        d_in = in_dim if l == 0 else H
        key, k1, k2, k3, k4 = jax.random.split(key, 5)
        scale = 1.0 / np.sqrt(H)
        params["layers"].append((
            jax.random.uniform(k1, (3 * H, d_in), jnp.float32, -scale, scale),  # W_ih
            jax.random.uniform(k2, (3 * H, H), jnp.float32, -scale, scale),     # W_hh
            jax.random.uniform(k3, (3 * H,), jnp.float32, -scale, scale),       # b_ih
            jax.random.uniform(k4, (3 * H,), jnp.float32, -scale, scale),       # b_hh
        ))
    key, k5, k6, k7 = jax.random.split(key, 4)
    scale = 1.0 / np.sqrt(H)
    params["w_att"] = jax.random.uniform(k5, (H, H), jnp.float32, -scale, scale)
    params["b_att"] = jax.random.uniform(k6, (H,), jnp.float32, -scale, scale)
    params["u_ctx"] = 0.01 * jax.random.normal(k7, (H,), jnp.float32)  # u_context ~ N(0, 0.01)
    return params


if __name__ == "__main__":
    # Module config: HierarchicalAttentionNet(in_dim, num_hid, nlayers, bidirect=False, dropout=0.0)
    IN_DIM, NUM_HID, NLAYERS = 16, 32, 2
    B, T = 8, 8

    key = jax.random.PRNGKey(0)
    key, kx = jax.random.split(key)
    x = jax.random.normal(kx, (B, T, IN_DIM), jnp.float32)

    params = init_params(key, in_dim=IN_DIM, num_hid=NUM_HID, nlayers=NLAYERS)

    run = jax.jit(functools.partial(han_forward_pallas, nlayers=NLAYERS, num_hid=NUM_HID))
    out = jax.block_until_ready(run(x, params))

    ref = jax.block_until_ready(
        han_forward_ref(x, params, nlayers=NLAYERS, num_hid=NUM_HID)
    )
    np.testing.assert_allclose(np.asarray(out), np.asarray(ref), rtol=1e-5, atol=1e-5)
    assert out.shape == (B, NUM_HID)

    print("KERNEL_OK")
</pallas_src>

<mosaic_0001>
module attributes {stable_mosaic.version = 11 : i64} {
  func.func @kernel(%arg0: memref<64x16xf32, #tpu.memory_space<vmem>>, %arg1: memref<16x384xf32, #tpu.memory_space<vmem>>, %arg2: memref<1x128x384xf32, #tpu.memory_space<vmem>>, %arg3: memref<2x128x384xf32, #tpu.memory_space<vmem>>, %arg4: memref<4x384xf32, #tpu.memory_space<vmem>>, %arg5: memref<128x128xf32, #tpu.memory_space<vmem>>, %arg6: memref<2x128xf32, #tpu.memory_space<vmem>>, %arg7: memref<8x128xf32, #tpu.memory_space<vmem>>) attributes {dimension_semantics = [], scalar_prefetch = 0 : i64, scratch_operands = 0 : i64, tpu.core_type = #tpu.core_type<tc>} {
    %c0 = arith.constant 0 : index
    %c0_0 = arith.constant 0 : index
    %c0_1 = arith.constant 0 : index
    %0 = vector.load %arg3[%c0, %c0_0, %c0_1] : memref<2x128x384xf32, #tpu.memory_space<vmem>>, vector<1x128x384xf32>
    %1 = vector.shape_cast %0 : vector<1x128x384xf32> to vector<128x384xf32>
    %c1 = arith.constant 1 : index
    %c0_2 = arith.constant 0 : index
    %c0_3 = arith.constant 0 : index
    %2 = vector.load %arg3[%c1, %c0_2, %c0_3] : memref<2x128x384xf32, #tpu.memory_space<vmem>>, vector<1x128x384xf32>
    %3 = vector.shape_cast %2 : vector<1x128x384xf32> to vector<128x384xf32>
    %c0_4 = arith.constant 0 : index
    %c0_5 = arith.constant 0 : index
    %c0_6 = arith.constant 0 : index
    %4 = vector.load %arg2[%c0_4, %c0_5, %c0_6] : memref<1x128x384xf32, #tpu.memory_space<vmem>>, vector<1x128x384xf32>
    %5 = vector.shape_cast %4 : vector<1x128x384xf32> to vector<128x384xf32>
    %c0_7 = arith.constant 0 : index
    %c0_8 = arith.constant 0 : index
    %6 = vector.load %arg4[%c0_7, %c0_8] : memref<4x384xf32, #tpu.memory_space<vmem>>, vector<1x384xf32>
    %7 = vector.shape_cast %6 : vector<1x384xf32> to vector<1x384xf32>
    %8 = vector.broadcast %7 : vector<1x384xf32> to vector<8x384xf32>
    %c2 = arith.constant 2 : index
    %c0_9 = arith.constant 0 : index
    %9 = vector.load %arg4[%c2, %c0_9] : memref<4x384xf32, #tpu.memory_space<vmem>>, vector<1x384xf32>
    %10 = vector.shape_cast %9 : vector<1x384xf32> to vector<1x384xf32>
    %11 = vector.broadcast %10 : vector<1x384xf32> to vector<8x384xf32>
    %c1_10 = arith.constant 1 : index
    %c0_11 = arith.constant 0 : index
    %12 = vector.load %arg4[%c1_10, %c0_11] : memref<4x384xf32, #tpu.memory_space<vmem>>, vector<1x384xf32>
    %13 = vector.shape_cast %12 : vector<1x384xf32> to vector<1x384xf32>
    %14 = vector.broadcast %13 : vector<1x384xf32> to vector<8x384xf32>
    %c3 = arith.constant 3 : index
    %c0_12 = arith.constant 0 : index
    %15 = vector.load %arg4[%c3, %c0_12] : memref<4x384xf32, #tpu.memory_space<vmem>>, vector<1x384xf32>
    %16 = vector.shape_cast %15 : vector<1x384xf32> to vector<1x384xf32>
    %17 = vector.broadcast %16 : vector<1x384xf32> to vector<8x384xf32>
    %c0_13 = arith.constant 0 : index
    %c0_14 = arith.constant 0 : index
    %18 = vector.load %arg0[%c0_13, %c0_14] : memref<64x16xf32, #tpu.memory_space<vmem>>, vector<64x16xf32>
    %c0_15 = arith.constant 0 : index
    %c0_16 = arith.constant 0 : index
    %19 = vector.load %arg1[%c0_15, %c0_16] : memref<16x384xf32, #tpu.memory_space<vmem>>, vector<16x384xf32>
    %cst = arith.constant dense<0.000000e+00> : vector<64x384xf32>
    %20 = tpu.matmul %18, %19, %cst {dimension_numbers = #tpu.dot_dimension_numbers<[1], [0], [0], [1], [0, 0, 1, 1], [], []>} : vector<64x16xf32>, vector<16x384xf32>, vector<64x384xf32> -> vector<64x384xf32>
    %cst_17 = arith.constant 0.000000e+00 : f32
    %21 = vector.broadcast %cst_17 : f32 to vector<8x128xf32>
    %cst_18 = arith.constant 0.000000e+00 : f32
    %22 = vector.broadcast %cst_18 : f32 to vector<8x128xf32>
    %23 = vector.extract_strided_slice %20 {offsets = [0, 0], sizes = [8, 384], strides = [1, 1]} : vector<64x384xf32> to vector<8x384xf32>
    %24 = arith.addf %23, %8 : vector<8x384xf32>
    %cst_19 = arith.constant dense<0.000000e+00> : vector<8x384xf32>
    %25 = tpu.matmul %21, %1, %cst_19 {dimension_numbers = #tpu.dot_dimension_numbers<[1], [0], [0], [1], [0, 0, 1, 1], [], []>} : vector<8x128xf32>, vector<128x384xf32>, vector<8x384xf32> -> vector<8x384xf32>
    %26 = arith.addf %25, %14 : vector<8x384xf32>
    %27 = vector.extract_strided_slice %24 {offsets = [0, 0], sizes = [8, 128], strides = [1, 1]} : vector<8x384xf32> to vector<8x128xf32>
    %28 = vector.extract_strided_slice %26 {offsets = [0, 0], sizes = [8, 128], strides = [1, 1]} : vector<8x384xf32> to vector<8x128xf32>
    %29 = arith.addf %27, %28 : vector<8x128xf32>
    %30 = arith.negf %29 : vector<8x128xf32>
    %31 = math.exp %30 : vector<8x128xf32>
    %cst_20 = arith.constant 1.000000e+00 : f32
    %32 = vector.broadcast %cst_20 : f32 to vector<8x128xf32>
    %33 = arith.addf %32, %31 : vector<8x128xf32>
    %34 = arith.divf %32, %33 : vector<8x128xf32>
    %35 = vector.extract_strided_slice %24 {offsets = [0, 128], sizes = [8, 128], strides = [1, 1]} : vector<8x384xf32> to vector<8x128xf32>
    %36 = vector.extract_strided_slice %26 {offsets = [0, 128], sizes = [8, 128], strides = [1, 1]} : vector<8x384xf32> to vector<8x128xf32>
    %37 = arith.addf %35, %36 : vector<8x128xf32>
    %38 = arith.negf %37 : vector<8x128xf32>
    %39 = math.exp %38 : vector<8x128xf32>
    %cst_21 = arith.constant 1.000000e+00 : f32
    %40 = vector.broadcast %cst_21 : f32 to vector<8x128xf32>
    %41 = arith.addf %40, %39 : vector<8x128xf32>
    %42 = arith.divf %40, %41 : vector<8x128xf32>
    %43 = vector.extract_strided_slice %24 {offsets = [0, 256], sizes = [8, 128], strides = [1, 1]} : vector<8x384xf32> to vector<8x128xf32>
    %44 = vector.extract_strided_slice %26 {offsets = [0, 256], sizes = [8, 128], strides = [1, 1]} : vector<8x384xf32> to vector<8x128xf32>
    %45 = arith.mulf %34, %44 : vector<8x128xf32>
    %46 = arith.addf %43, %45 : vector<8x128xf32>
    %47 = math.tanh %46 : vector<8x128xf32>
    %cst_22 = arith.constant 1.000000e+00 : f32
    %48 = vector.broadcast %cst_22 : f32 to vector<8x128xf32>
    %49 = arith.subf %48, %42 : vector<8x128xf32>
    %50 = arith.mulf %49, %47 : vector<8x128xf32>
    %51 = arith.mulf %42, %21 : vector<8x128xf32>
    %52 = arith.addf %50, %51 : vector<8x128xf32>
    %cst_23 = arith.constant dense<0.000000e+00> : vector<8x384xf32>
    %53 = tpu.matmul %52, %5, %cst_23 {dimension_numbers = #tpu.dot_dimension_numbers<[1], [0], [0], [1], [0, 0, 1, 1], [], []>} : vector<8x128xf32>, vector<128x384xf32>, vector<8x384xf32> -> vector<8x384xf32>
    %54 = arith.addf %53, %11 : vector<8x384xf32>
    %cst_24 = arith.constant dense<0.000000e+00> : vector<8x384xf32>
    %55 = tpu.matmul %22, %3, %cst_24 {dimension_numbers = #tpu.dot_dimension_numbers<[1], [0], [0], [1], [0, 0, 1, 1], [], []>} : vector<8x128xf32>, vector<128x384xf32>, vector<8x384xf32> -> vector<8x384xf32>
    %56 = arith.addf %55, %17 : vector<8x384xf32>
    %57 = vector.extract_strided_slice %54 {offsets = [0, 0], sizes = [8, 128], strides = [1, 1]} : vector<8x384xf32> to vector<8x128xf32>
    %58 = vector.extract_strided_slice %56 {offsets = [0, 0], sizes = [8, 128], strides = [1, 1]} : vector<8x384xf32> to vector<8x128xf32>
    %59 = arith.addf %57, %58 : vector<8x128xf32>
    %60 = arith.negf %59 : vector<8x128xf32>
    %61 = math.exp %60 : vector<8x128xf32>
    %cst_25 = arith.constant 1.000000e+00 : f32
    %62 = vector.broadcast %cst_25 : f32 to vector<8x128xf32>
    %63 = arith.addf %62, %61 : vector<8x128xf32>
    %64 = arith.divf %62, %63 : vector<8x128xf32>
    %65 = vector.extract_strided_slice %54 {offsets = [0, 128], sizes = [8, 128], strides = [1, 1]} : vector<8x384xf32> to vector<8x128xf32>
    %66 = vector.extract_strided_slice %56 {offsets = [0, 128], sizes = [8, 128], strides = [1, 1]} : vector<8x384xf32> to vector<8x128xf32>
    %67 = arith.addf %65, %66 : vector<8x128xf32>
    %68 = arith.negf %67 : vector<8x128xf32>
    %69 = math.exp %68 : vector<8x128xf32>
    %cst_26 = arith.constant 1.000000e+00 : f32
    %70 = vector.broadcast %cst_26 : f32 to vector<8x128xf32>
    %71 = arith.addf %70, %69 : vector<8x128xf32>
    %72 = arith.divf %70, %71 : vector<8x128xf32>
    %73 = vector.extract_strided_slice %54 {offsets = [0, 256], sizes = [8, 128], strides = [1, 1]} : vector<8x384xf32> to vector<8x128xf32>
    %74 = vector.extract_strided_slice %56 {offsets = [0, 256], sizes = [8, 128], strides = [1, 1]} : vector<8x384xf32> to vector<8x128xf32>
    %75 = arith.mulf %64, %74 : vector<8x128xf32>
    %76 = arith.addf %73, %75 : vector<8x128xf32>
    %77 = math.tanh %76 : vector<8x128xf32>
    %cst_27 = arith.constant 1.000000e+00 : f32
    %78 = vector.broadcast %cst_27 : f32 to vector<8x128xf32>
    %79 = arith.subf %78, %72 : vector<8x128xf32>
    %80 = arith.mulf %79, %77 : vector<8x128xf32>
    %81 = arith.mulf %72, %22 : vector<8x128xf32>
    %82 = arith.addf %80, %81 : vector<8x128xf32>
    %83 = vector.extract_strided_slice %20 {offsets = [8, 0], sizes = [8, 384], strides = [1, 1]} : vector<64x384xf32> to vector<8x384xf32>
    %84 = arith.addf %83, %8 : vector<8x384xf32>
    %cst_28 = arith.constant dense<0.000000e+00> : vector<8x384xf32>
    %85 = tpu.matmul %52, %1, %cst_28 {dimension_numbers = #tpu.dot_dimension_numbers<[1], [0], [0], [1], [0, 0, 1, 1], [], []>} : vector<8x128xf32>, vector<128x384xf32>, vector<8x384xf32> -> vector<8x384xf32>
    %86 = arith.addf %85, %14 : vector<8x384xf32>
    %87 = vector.extract_strided_slice %84 {offsets = [0, 0], sizes = [8, 128], strides = [1, 1]} : vector<8x384xf32> to vector<8x128xf32>
    %88 = vector.extract_strided_slice %86 {offsets = [0, 0], sizes = [8, 128], strides = [1, 1]} : vector<8x384xf32> to vector<8x128xf32>
    %89 = arith.addf %87, %88 : vector<8x128xf32>
    %90 = arith.negf %89 : vector<8x128xf32>
    %91 = math.exp %90 : vector<8x128xf32>
    %cst_29 = arith.constant 1.000000e+00 : f32
    %92 = vector.broadcast %cst_29 : f32 to vector<8x128xf32>
    %93 = arith.addf %92, %91 : vector<8x128xf32>
    %94 = arith.divf %92, %93 : vector<8x128xf32>
    %95 = vector.extract_strided_slice %84 {offsets = [0, 128], sizes = [8, 128], strides = [1, 1]} : vector<8x384xf32> to vector<8x128xf32>
    %96 = vector.extract_strided_slice %86 {offsets = [0, 128], sizes = [8, 128], strides = [1, 1]} : vector<8x384xf32> to vector<8x128xf32>
    %97 = arith.addf %95, %96 : vector<8x128xf32>
    %98 = arith.negf %97 : vector<8x128xf32>
    %99 = math.exp %98 : vector<8x128xf32>
    %cst_30 = arith.constant 1.000000e+00 : f32
    %100 = vector.broadcast %cst_30 : f32 to vector<8x128xf32>
    %101 = arith.addf %100, %99 : vector<8x128xf32>
    %102 = arith.divf %100, %101 : vector<8x128xf32>
    %103 = vector.extract_strided_slice %84 {offsets = [0, 256], sizes = [8, 128], strides = [1, 1]} : vector<8x384xf32> to vector<8x128xf32>
    %104 = vector.extract_strided_slice %86 {offsets = [0, 256], sizes = [8, 128], strides = [1, 1]} : vector<8x384xf32> to vector<8x128xf32>
    %105 = arith.mulf %94, %104 : vector<8x128xf32>
    %106 = arith.addf %103, %105 : vector<8x128xf32>
    %107 = math.tanh %106 : vector<8x128xf32>
    %cst_31 = arith.constant 1.000000e+00 : f32
    %108 = vector.broadcast %cst_31 : f32 to vector<8x128xf32>
    %109 = arith.subf %108, %102 : vector<8x128xf32>
    %110 = arith.mulf %109, %107 : vector<8x128xf32>
    %111 = arith.mulf %102, %52 : vector<8x128xf32>
    %112 = arith.addf %110, %111 : vector<8x128xf32>
    %cst_32 = arith.constant dense<0.000000e+00> : vector<8x384xf32>
    %113 = tpu.matmul %112, %5, %cst_32 {dimension_numbers = #tpu.dot_dimension_numbers<[1], [0], [0], [1], [0, 0, 1, 1], [], []>} : vector<8x128xf32>, vector<128x384xf32>, vector<8x384xf32> -> vector<8x384xf32>
    %114 = arith.addf %113, %11 : vector<8x384xf32>
    %cst_33 = arith.constant dense<0.000000e+00> : vector<8x384xf32>
    %115 = tpu.matmul %82, %3, %cst_33 {dimension_numbers = #tpu.dot_dimension_numbers<[1], [0], [0], [1], [0, 0, 1, 1], [], []>} : vector<8x128xf32>, vector<128x384xf32>, vector<8x384xf32> -> vector<8x384xf32>
    %116 = arith.addf %115, %17 : vector<8x384xf32>
    %117 = vector.extract_strided_slice %114 {offsets = [0, 0], sizes = [8, 128], strides = [1, 1]} : vector<8x384xf32> to vector<8x128xf32>
    %118 = vector.extract_strided_slice %116 {offsets = [0, 0], sizes = [8, 128], strides = [1, 1]} : vector<8x384xf32> to vector<8x128xf32>
    %119 = arith.addf %117, %118 : vector<8x128xf32>
    %120 = arith.negf %119 : vector<8x128xf32>
    %121 = math.exp %120 : vector<8x128xf32>
    %cst_34 = arith.constant 1.000000e+00 : f32
    %122 = vector.broadcast %cst_34 : f32 to vector<8x128xf32>
    %123 = arith.addf %122, %121 : vector<8x128xf32>
    %124 = arith.divf %122, %123 : vector<8x128xf32>
    %125 = vector.extract_strided_slice %114 {offsets = [0, 128], sizes = [8, 128], strides = [1, 1]} : vector<8x384xf32> to vector<8x128xf32>
    %126 = vector.extract_strided_slice %116 {offsets = [0, 128], sizes = [8, 128], strides = [1, 1]} : vector<8x384xf32> to vector<8x128xf32>
    %127 = arith.addf %125, %126 : vector<8x128xf32>
    %128 = arith.negf %127 : vector<8x128xf32>
    %129 = math.exp %128 : vector<8x128xf32>
    %cst_35 = arith.constant 1.000000e+00 : f32
    %130 = vector.broadcast %cst_35 : f32 to vector<8x128xf32>
    %131 = arith.addf %130, %129 : vector<8x128xf32>
    %132 = arith.divf %130, %131 : vector<8x128xf32>
    %133 = vector.extract_strided_slice %114 {offsets = [0, 256], sizes = [8, 128], strides = [1, 1]} : vector<8x384xf32> to vector<8x128xf32>
    %134 = vector.extract_strided_slice %116 {offsets = [0, 256], sizes = [8, 128], strides = [1, 1]} : vector<8x384xf32> to vector<8x128xf32>
    %135 = arith.mulf %124, %134 : vector<8x128xf32>
    %136 = arith.addf %133, %135 : vector<8x128xf32>
    %137 = math.tanh %136 : vector<8x128xf32>
    %cst_36 = arith.constant 1.000000e+00 : f32
    %138 = vector.broadcast %cst_36 : f32 to vector<8x128xf32>
    %139 = arith.subf %138, %132 : vector<8x128xf32>
    %140 = arith.mulf %139, %137 : vector<8x128xf32>
    %141 = arith.mulf %132, %82 : vector<8x128xf32>
    %142 = arith.addf %140, %141 : vector<8x128xf32>
    %143 = vector.extract_strided_slice %20 {offsets = [16, 0], sizes = [8, 384], strides = [1, 1]} : vector<64x384xf32> to vector<8x384xf32>
    %144 = arith.addf %143, %8 : vector<8x384xf32>
    %cst_37 = arith.constant dense<0.000000e+00> : vector<8x384xf32>
    %145 = tpu.matmul %112, %1, %cst_37 {dimension_numbers = #tpu.dot_dimension_numbers<[1], [0], [0], [1], [0, 0, 1, 1], [], []>} : vector<8x128xf32>, vector<128x384xf32>, vector<8x384xf32> -> vector<8x384xf32>
    %146 = arith.addf %145, %14 : vector<8x384xf32>
    %147 = vector.extract_strided_slice %144 {offsets = [0, 0], sizes = [8, 128], strides = [1, 1]} : vector<8x384xf32> to vector<8x128xf32>
    %148 = vector.extract_strided_slice %146 {offsets = [0, 0], sizes = [8, 128], strides = [1, 1]} : vector<8x384xf32> to vector<8x128xf32>
    %149 = arith.addf %147, %148 : vector<8x128xf32>
    %150 = arith.negf %149 : vector<8x128xf32>
    %151 = math.exp %150 : vector<8x128xf32>
    %cst_38 = arith.constant 1.000000e+00 : f32
    %152 = vector.broadcast %cst_38 : f32 to vector<8x128xf32>
    %153 = arith.addf %152, %151 : vector<8x128xf32>
    %154 = arith.divf %152, %153 : vector<8x128xf32>
    %155 = vector.extract_strided_slice %144 {offsets = [0, 128], sizes = [8, 128], strides = [1, 1]} : vector<8x384xf32> to vector<8x128xf32>
    %156 = vector.extract_strided_slice %146 {offsets = [0, 128], sizes = [8, 128], strides = [1, 1]} : vector<8x384xf32> to vector<8x128xf32>
    %157 = arith.addf %155, %156 : vector<8x128xf32>
    %158 = arith.negf %157 : vector<8x128xf32>
    %159 = math.exp %158 : vector<8x128xf32>
    %cst_39 = arith.constant 1.000000e+00 : f32
    %160 = vector.broadcast %cst_39 : f32 to vector<8x128xf32>
    %161 = arith.addf %160, %159 : vector<8x128xf32>
    %162 = arith.divf %160, %161 : vector<8x128xf32>
    %163 = vector.extract_strided_slice %144 {offsets = [0, 256], sizes = [8, 128], strides = [1, 1]} : vector<8x384xf32> to vector<8x128xf32>
    %164 = vector.extract_strided_slice %146 {offsets = [0, 256], sizes = [8, 128], strides = [1, 1]} : vector<8x384xf32> to vector<8x128xf32>
    %165 = arith.mulf %154, %164 : vector<8x128xf32>
    %166 = arith.addf %163, %165 : vector<8x128xf32>
    %167 = math.tanh %166 : vector<8x128xf32>
    %cst_40 = arith.constant 1.000000e+00 : f32
    %168 = vector.broadcast %cst_40 : f32 to vector<8x128xf32>
    %169 = arith.subf %168, %162 : vector<8x128xf32>
    %170 = arith.mulf %169, %167 : vector<8x128xf32>
    %171 = arith.mulf %162, %112 : vector<8x128xf32>
    %172 = arith.addf %170, %171 : vector<8x128xf32>
    %cst_41 = arith.constant dense<0.000000e+00> : vector<8x384xf32>
    %173 = tpu.matmul %172, %5, %cst_41 {dimension_numbers = #tpu.dot_dimension_numbers<[1], [0], [0], [1], [0, 0, 1, 1], [], []>} : vector<8x128xf32>, vector<128x384xf32>, vector<8x384xf32> -> vector<8x384xf32>
    %174 = arith.addf %173, %11 : vector<8x384xf32>
    %cst_42 = arith.constant dense<0.000000e+00> : vector<8x384xf32>
    %175 = tpu.matmul %142, %3, %cst_42 {dimension_numbers = #tpu.dot_dimension_numbers<[1], [0], [0], [1], [0, 0, 1, 1], [], []>} : vector<8x128xf32>, vector<128x384xf32>, vector<8x384xf32> -> vector<8x384xf32>
    %176 = arith.addf %175, %17 : vector<8x384xf32>
    %177 = vector.extract_strided_slice %174 {offsets = [0, 0], sizes = [8, 128], strides = [1, 1]} : vector<8x384xf32> to vector<8x128xf32>
    %178 = vector.extract_strided_slice %176 {offsets = [0, 0], sizes = [8, 128], strides = [1, 1]} : vector<8x384xf32> to vector<8x128xf32>
    %179 = arith.addf %177, %178 : vector<8x128xf32>
    %180 = arith.negf %179 : vector<8x128xf32>
    %181 = math.exp %180 : vector<8x128xf32>
    %cst_43 = arith.constant 1.000000e+00 : f32
    %182 = vector.broadcast %cst_43 : f32 to vector<8x128xf32>
    %183 = arith.addf %182, %181 : vector<8x128xf32>
    %184 = arith.divf %182, %183 : vector<8x128xf32>
    %185 = vector.extract_strided_slice %174 {offsets = [0, 128], sizes = [8, 128], strides = [1, 1]} : vector<8x384xf32> to vector<8x128xf32>
    %186 = vector.extract_strided_slice %176 {offsets = [0, 128], sizes = [8, 128], strides = [1, 1]} : vector<8x384xf32> to vector<8x128xf32>
    %187 = arith.addf %185, %186 : vector<8x128xf32>
    %188 = arith.negf %187 : vector<8x128xf32>
    %189 = math.exp %188 : vector<8x128xf32>
    %cst_44 = arith.constant 1.000000e+00 : f32
    %190 = vector.broadcast %cst_44 : f32 to vector<8x128xf32>
    %191 = arith.addf %190, %189 : vector<8x128xf32>
    %192 = arith.divf %190, %191 : vector<8x128xf32>
    %193 = vector.extract_strided_slice %174 {offsets = [0, 256], sizes = [8, 128], strides = [1, 1]} : vector<8x384xf32> to vector<8x128xf32>
    %194 = vector.extract_strided_slice %176 {offsets = [0, 256], sizes = [8, 128], strides = [1, 1]} : vector<8x384xf32> to vector<8x128xf32>
    %195 = arith.mulf %184, %194 : vector<8x128xf32>
    %196 = arith.addf %193, %195 : vector<8x128xf32>
    %197 = math.tanh %196 : vector<8x128xf32>
    %cst_45 = arith.constant 1.000000e+00 : f32
    %198 = vector.broadcast %cst_45 : f32 to vector<8x128xf32>
    %199 = arith.subf %198, %192 : vector<8x128xf32>
    %200 = arith.mulf %199, %197 : vector<8x128xf32>
    %201 = arith.mulf %192, %142 : vector<8x128xf32>
    %202 = arith.addf %200, %201 : vector<8x128xf32>
    %203 = vector.extract_strided_slice %20 {offsets = [24, 0], sizes = [8, 384], strides = [1, 1]} : vector<64x384xf32> to vector<8x384xf32>
    %204 = arith.addf %203, %8 : vector<8x384xf32>
    %cst_46 = arith.constant dense<0.000000e+00> : vector<8x384xf32>
    %205 = tpu.matmul %172, %1, %cst_46 {dimension_numbers = #tpu.dot_dimension_numbers<[1], [0], [0], [1], [0, 0, 1, 1], [], []>} : vector<8x128xf32>, vector<128x384xf32>, vector<8x384xf32> -> vector<8x384xf32>
    %206 = arith.addf %205, %14 : vector<8x384xf32>
    %207 = vector.extract_strided_slice %204 {offsets = [0, 0], sizes = [8, 128], strides = [1, 1]} : vector<8x384xf32> to vector<8x128xf32>
    %208 = vector.extract_strided_slice %206 {offsets = [0, 0], sizes = [8, 128], strides = [1, 1]} : vector<8x384xf32> to vector<8x128xf32>
    %209 = arith.addf %207, %208 : vector<8x128xf32>
    %210 = arith.negf %209 : vector<8x128xf32>
    %211 = math.exp %210 : vector<8x128xf32>
    %cst_47 = arith.constant 1.000000e+00 : f32
    %212 = vector.broadcast %cst_47 : f32 to vector<8x128xf32>
    %213 = arith.addf %212, %211 : vector<8x128xf32>
    %214 = arith.divf %212, %213 : vector<8x128xf32>
    %215 = vector.extract_strided_slice %204 {offsets = [0, 128], sizes = [8, 128], strides = [1, 1]} : vector<8x384xf32> to vector<8x128xf32>
    %216 = vector.extract_strided_slice %206 {offsets = [0, 128], sizes = [8, 128], strides = [1, 1]} : vector<8x384xf32> to vector<8x128xf32>
    %217 = arith.addf %215, %216 : vector<8x128xf32>
    %218 = arith.negf %217 : vector<8x128xf32>
    %219 = math.exp %218 : vector<8x128xf32>
    %cst_48 = arith.constant 1.000000e+00 : f32
    %220 = vector.broadcast %cst_48 : f32 to vector<8x128xf32>
    %221 = arith.addf %220, %219 : vector<8x128xf32>
    %222 = arith.divf %220, %221 : vector<8x128xf32>
    %223 = vector.extract_strided_slice %204 {offsets = [0, 256], sizes = [8, 128], strides = [1, 1]} : vector<8x384xf32> to vector<8x128xf32>
    %224 = vector.extract_strided_slice %206 {offsets = [0, 256], sizes = [8, 128], strides = [1, 1]} : vector<8x384xf32> to vector<8x128xf32>
    %225 = arith.mulf %214, %224 : vector<8x128xf32>
    %226 = arith.addf %223, %225 : vector<8x128xf32>
    %227 = math.tanh %226 : vector<8x128xf32>
    %cst_49 = arith.constant 1.000000e+00 : f32
    %228 = vector.broadcast %cst_49 : f32 to vector<8x128xf32>
    %229 = arith.subf %228, %222 : vector<8x128xf32>
    %230 = arith.mulf %229, %227 : vector<8x128xf32>
    %231 = arith.mulf %222, %172 : vector<8x128xf32>
    %232 = arith.addf %230, %231 : vector<8x128xf32>
    %cst_50 = arith.constant dense<0.000000e+00> : vector<8x384xf32>
    %233 = tpu.matmul %232, %5, %cst_50 {dimension_numbers = #tpu.dot_dimension_numbers<[1], [0], [0], [1], [0, 0, 1, 1], [], []>} : vector<8x128xf32>, vector<128x384xf32>, vector<8x384xf32> -> vector<8x384xf32>
    %234 = arith.addf %233, %11 : vector<8x384xf32>
    %cst_51 = arith.constant dense<0.000000e+00> : vector<8x384xf32>
    %235 = tpu.matmul %202, %3, %cst_51 {dimension_numbers = #tpu.dot_dimension_numbers<[1], [0], [0], [1], [0, 0, 1, 1], [], []>} : vector<8x128xf32>, vector<128x384xf32>, vector<8x384xf32> -> vector<8x384xf32>
    %236 = arith.addf %235, %17 : vector<8x384xf32>
    %237 = vector.extract_strided_slice %234 {offsets = [0, 0], sizes = [8, 128], strides = [1, 1]} : vector<8x384xf32> to vector<8x128xf32>
    %238 = vector.extract_strided_slice %236 {offsets = [0, 0], sizes = [8, 128], strides = [1, 1]} : vector<8x384xf32> to vector<8x128xf32>
    %239 = arith.addf %237, %238 : vector<8x128xf32>
    %240 = arith.negf %239 : vector<8x128xf32>
    %241 = math.exp %240 : vector<8x128xf32>
    %cst_52 = arith.constant 1.000000e+00 : f32
    %242 = vector.broadcast %cst_52 : f32 to vector<8x128xf32>
    %243 = arith.addf %242, %241 : vector<8x128xf32>
    %244 = arith.divf %242, %243 : vector<8x128xf32>
    %245 = vector.extract_strided_slice %234 {offsets = [0, 128], sizes = [8, 128], strides = [1, 1]} : vector<8x384xf32> to vector<8x128xf32>
    %246 = vector.extract_strided_slice %236 {offsets = [0, 128], sizes = [8, 128], strides = [1, 1]} : vector<8x384xf32> to vector<8x128xf32>
    %247 = arith.addf %245, %246 : vector<8x128xf32>
    %248 = arith.negf %247 : vector<8x128xf32>
    %249 = math.exp %248 : vector<8x128xf32>
    %cst_53 = arith.constant 1.000000e+00 : f32
    %250 = vector.broadcast %cst_53 : f32 to vector<8x128xf32>
    %251 = arith.addf %250, %249 : vector<8x128xf32>
    %252 = arith.divf %250, %251 : vector<8x128xf32>
    %253 = vector.extract_strided_slice %234 {offsets = [0, 256], sizes = [8, 128], strides = [1, 1]} : vector<8x384xf32> to vector<8x128xf32>
    %254 = vector.extract_strided_slice %236 {offsets = [0, 256], sizes = [8, 128], strides = [1, 1]} : vector<8x384xf32> to vector<8x128xf32>
    %255 = arith.mulf %244, %254 : vector<8x128xf32>
    %256 = arith.addf %253, %255 : vector<8x128xf32>
    %257 = math.tanh %256 : vector<8x128xf32>
    %cst_54 = arith.constant 1.000000e+00 : f32
    %258 = vector.broadcast %cst_54 : f32 to vector<8x128xf32>
    %259 = arith.subf %258, %252 : vector<8x128xf32>
    %260 = arith.mulf %259, %257 : vector<8x128xf32>
    %261 = arith.mulf %252, %202 : vector<8x128xf32>
    %262 = arith.addf %260, %261 : vector<8x128xf32>
    %263 = vector.extract_strided_slice %20 {offsets = [32, 0], sizes = [8, 384], strides = [1, 1]} : vector<64x384xf32> to vector<8x384xf32>
    %264 = arith.addf %263, %8 : vector<8x384xf32>
    %cst_55 = arith.constant dense<0.000000e+00> : vector<8x384xf32>
    %265 = tpu.matmul %232, %1, %cst_55 {dimension_numbers = #tpu.dot_dimension_numbers<[1], [0], [0], [1], [0, 0, 1, 1], [], []>} : vector<8x128xf32>, vector<128x384xf32>, vector<8x384xf32> -> vector<8x384xf32>
    %266 = arith.addf %265, %14 : vector<8x384xf32>
    %267 = vector.extract_strided_slice %264 {offsets = [0, 0], sizes = [8, 128], strides = [1, 1]} : vector<8x384xf32> to vector<8x128xf32>
    %268 = vector.extract_strided_slice %266 {offsets = [0, 0], sizes = [8, 128], strides = [1, 1]} : vector<8x384xf32> to vector<8x128xf32>
    %269 = arith.addf %267, %268 : vector<8x128xf32>
    %270 = arith.negf %269 : vector<8x128xf32>
    %271 = math.exp %270 : vector<8x128xf32>
    %cst_56 = arith.constant 1.000000e+00 : f32
    %272 = vector.broadcast %cst_56 : f32 to vector<8x128xf32>
    %273 = arith.addf %272, %271 : vector<8x128xf32>
    %274 = arith.divf %272, %273 : vector<8x128xf32>
    %275 = vector.extract_strided_slice %264 {offsets = [0, 128], sizes = [8, 128], strides = [1, 1]} : vector<8x384xf32> to vector<8x128xf32>
    %276 = vector.extract_strided_slice %266 {offsets = [0, 128], sizes = [8, 128], strides = [1, 1]} : vector<8x384xf32> to vector<8x128xf32>
    %277 = arith.addf %275, %276 : vector<8x128xf32>
    %278 = arith.negf %277 : vector<8x128xf32>
    %279 = math.exp %278 : vector<8x128xf32>
    %cst_57 = arith.constant 1.000000e+00 : f32
    %280 = vector.broadcast %cst_57 : f32 to vector<8x128xf32>
    %281 = arith.addf %280, %279 : vector<8x128xf32>
    %282 = arith.divf %280, %281 : vector<8x128xf32>
    %283 = vector.extract_strided_slice %264 {offsets = [0, 256], sizes = [8, 128], strides = [1, 1]} : vector<8x384xf32> to vector<8x128xf32>
    %284 = vector.extract_strided_slice %266 {offsets = [0, 256], sizes = [8, 128], strides = [1, 1]} : vector<8x384xf32> to vector<8x128xf32>
    %285 = arith.mulf %274, %284 : vector<8x128xf32>
    %286 = arith.addf %283, %285 : vector<8x128xf32>
    %287 = math.tanh %286 : vector<8x128xf32>
    %cst_58 = arith.constant 1.000000e+00 : f32
    %288 = vector.broadcast %cst_58 : f32 to vector<8x128xf32>
    %289 = arith.subf %288, %282 : vector<8x128xf32>
    %290 = arith.mulf %289, %287 : vector<8x128xf32>
    %291 = arith.mulf %282, %232 : vector<8x128xf32>
    %292 = arith.addf %290, %291 : vector<8x128xf32>
    %cst_59 = arith.constant dense<0.000000e+00> : vector<8x384xf32>
    %293 = tpu.matmul %292, %5, %cst_59 {dimension_numbers = #tpu.dot_dimension_numbers<[1], [0], [0], [1], [0, 0, 1, 1], [], []>} : vector<8x128xf32>, vector<128x384xf32>, vector<8x384xf32> -> vector<8x384xf32>
    %294 = arith.addf %293, %11 : vector<8x384xf32>
    %cst_60 = arith.constant dense<0.000000e+00> : vector<8x384xf32>
    %295 = tpu.matmul %262, %3, %cst_60 {dimension_numbers = #tpu.dot_dimension_numbers<[1], [0], [0], [1], [0, 0, 1, 1], [], []>} : vector<8x128xf32>, vector<128x384xf32>, vector<8x384xf32> -> vector<8x384xf32>
    %296 = arith.addf %295, %17 : vector<8x384xf32>
    %297 = vector.extract_strided_slice %294 {offsets = [0, 0], sizes = [8, 128], strides = [1, 1]} : vector<8x384xf32> to vector<8x128xf32>
    %298 = vector.extract_strided_slice %296 {offsets = [0, 0], sizes = [8, 128], strides = [1, 1]} : vector<8x384xf32> to vector<8x128xf32>
    %299 = arith.addf %297, %298 : vector<8x128xf32>
    %300 = arith.negf %299 : vector<8x128xf32>
    %301 = math.exp %300 : vector<8x128xf32>
    %cst_61 = arith.constant 1.000000e+00 : f32
    %302 = vector.broadcast %cst_61 : f32 to vector<8x128xf32>
    %303 = arith.addf %302, %301 : vector<8x128xf32>
    %304 = arith.divf %302, %303 : vector<8x128xf32>
    %305 = vector.extract_strided_slice %294 {offsets = [0, 128], sizes = [8, 128], strides = [1, 1]} : vector<8x384xf32> to vector<8x128xf32>
    %306 = vector.extract_strided_slice %296 {offsets = [0, 128], sizes = [8, 128], strides = [1, 1]} : vector<8x384xf32> to vector<8x128xf32>
    %307 = arith.addf %305, %306 : vector<8x128xf32>
    %308 = arith.negf %307 : vector<8x128xf32>
    %309 = math.exp %308 : vector<8x128xf32>
    %cst_62 = arith.constant 1.000000e+00 : f32
    %310 = vector.broadcast %cst_62 : f32 to vector<8x128xf32>
    %311 = arith.addf %310, %309 : vector<8x128xf32>
    %312 = arith.divf %310, %311 : vector<8x128xf32>
    %313 = vector.extract_strided_slice %294 {offsets = [0, 256], sizes = [8, 128], strides = [1, 1]} : vector<8x384xf32> to vector<8x128xf32>
    %314 = vector.extract_strided_slice %296 {offsets = [0, 256], sizes = [8, 128], strides = [1, 1]} : vector<8x384xf32> to vector<8x128xf32>
    %315 = arith.mulf %304, %314 : vector<8x128xf32>
    %316 = arith.addf %313, %315 : vector<8x128xf32>
    %317 = math.tanh %316 : vector<8x128xf32>
    %cst_63 = arith.constant 1.000000e+00 : f32
    %318 = vector.broadcast %cst_63 : f32 to vector<8x128xf32>
    %319 = arith.subf %318, %312 : vector<8x128xf32>
    %320 = arith.mulf %319, %317 : vector<8x128xf32>
    %321 = arith.mulf %312, %262 : vector<8x128xf32>
    %322 = arith.addf %320, %321 : vector<8x128xf32>
    %323 = vector.extract_strided_slice %20 {offsets = [40, 0], sizes = [8, 384], strides = [1, 1]} : vector<64x384xf32> to vector<8x384xf32>
    %324 = arith.addf %323, %8 : vector<8x384xf32>
    %cst_64 = arith.constant dense<0.000000e+00> : vector<8x384xf32>
    %325 = tpu.matmul %292, %1, %cst_64 {dimension_numbers = #tpu.dot_dimension_numbers<[1], [0], [0], [1], [0, 0, 1, 1], [], []>} : vector<8x128xf32>, vector<128x384xf32>, vector<8x384xf32> -> vector<8x384xf32>
    %326 = arith.addf %325, %14 : vector<8x384xf32>
    %327 = vector.extract_strided_slice %324 {offsets = [0, 0], sizes = [8, 128], strides = [1, 1]} : vector<8x384xf32> to vector<8x128xf32>
    %328 = vector.extract_strided_slice %326 {offsets = [0, 0], sizes = [8, 128], strides = [1, 1]} : vector<8x384xf32> to vector<8x128xf32>
    %329 = arith.addf %327, %328 : vector<8x128xf32>
    %330 = arith.negf %329 : vector<8x128xf32>
    %331 = math.exp %330 : vector<8x128xf32>
    %cst_65 = arith.constant 1.000000e+00 : f32
    %332 = vector.broadcast %cst_65 : f32 to vector<8x128xf32>
    %333 = arith.addf %332, %331 : vector<8x128xf32>
    %334 = arith.divf %332, %333 : vector<8x128xf32>
    %335 = vector.extract_strided_slice %324 {offsets = [0, 128], sizes = [8, 128], strides = [1, 1]} : vector<8x384xf32> to vector<8x128xf32>
    %336 = vector.extract_strided_slice %326 {offsets = [0, 128], sizes = [8, 128], strides = [1, 1]} : vector<8x384xf32> to vector<8x128xf32>
    %337 = arith.addf %335, %336 : vector<8x128xf32>
    %338 = arith.negf %337 : vector<8x128xf32>
    %339 = math.exp %338 : vector<8x128xf32>
    %cst_66 = arith.constant 1.000000e+00 : f32
    %340 = vector.broadcast %cst_66 : f32 to vector<8x128xf32>
    %341 = arith.addf %340, %339 : vector<8x128xf32>
    %342 = arith.divf %340, %341 : vector<8x128xf32>
    %343 = vector.extract_strided_slice %324 {offsets = [0, 256], sizes = [8, 128], strides = [1, 1]} : vector<8x384xf32> to vector<8x128xf32>
    %344 = vector.extract_strided_slice %326 {offsets = [0, 256], sizes = [8, 128], strides = [1, 1]} : vector<8x384xf32> to vector<8x128xf32>
    %345 = arith.mulf %334, %344 : vector<8x128xf32>
    %346 = arith.addf %343, %345 : vector<8x128xf32>
    %347 = math.tanh %346 : vector<8x128xf32>
    %cst_67 = arith.constant 1.000000e+00 : f32
    %348 = vector.broadcast %cst_67 : f32 to vector<8x128xf32>
    %349 = arith.subf %348, %342 : vector<8x128xf32>
    %350 = arith.mulf %349, %347 : vector<8x128xf32>
    %351 = arith.mulf %342, %292 : vector<8x128xf32>
    %352 = arith.addf %350, %351 : vector<8x128xf32>
    %cst_68 = arith.constant dense<0.000000e+00> : vector<8x384xf32>
    %353 = tpu.matmul %352, %5, %cst_68 {dimension_numbers = #tpu.dot_dimension_numbers<[1], [0], [0], [1], [0, 0, 1, 1], [], []>} : vector<8x128xf32>, vector<128x384xf32>, vector<8x384xf32> -> vector<8x384xf32>
    %354 = arith.addf %353, %11 : vector<8x384xf32>
    %cst_69 = arith.constant dense<0.000000e+00> : vector<8x384xf32>
    %355 = tpu.matmul %322, %3, %cst_69 {dimension_numbers = #tpu.dot_dimension_numbers<[1], [0], [0], [1], [0, 0, 1, 1], [], []>} : vector<8x128xf32>, vector<128x384xf32>, vector<8x384xf32> -> vector<8x384xf32>
    %356 = arith.addf %355, %17 : vector<8x384xf32>
    %357 = vector.extract_strided_slice %354 {offsets = [0, 0], sizes = [8, 128], strides = [1, 1]} : vector<8x384xf32> to vector<8x128xf32>
    %358 = vector.extract_strided_slice %356 {offsets = [0, 0], sizes = [8, 128], strides = [1, 1]} : vector<8x384xf32> to vector<8x128xf32>
    %359 = arith.addf %357, %358 : vector<8x128xf32>
    %360 = arith.negf %359 : vector<8x128xf32>
    %361 = math.exp %360 : vector<8x128xf32>
    %cst_70 = arith.constant 1.000000e+00 : f32
    %362 = vector.broadcast %cst_70 : f32 to vector<8x128xf32>
    %363 = arith.addf %362, %361 : vector<8x128xf32>
    %364 = arith.divf %362, %363 : vector<8x128xf32>
    %365 = vector.extract_strided_slice %354 {offsets = [0, 128], sizes = [8, 128], strides = [1, 1]} : vector<8x384xf32> to vector<8x128xf32>
    %366 = vector.extract_strided_slice %356 {offsets = [0, 128], sizes = [8, 128], strides = [1, 1]} : vector<8x384xf32> to vector<8x128xf32>
    %367 = arith.addf %365, %366 : vector<8x128xf32>
    %368 = arith.negf %367 : vector<8x128xf32>
    %369 = math.exp %368 : vector<8x128xf32>
    %cst_71 = arith.constant 1.000000e+00 : f32
    %370 = vector.broadcast %cst_71 : f32 to vector<8x128xf32>
    %371 = arith.addf %370, %369 : vector<8x128xf32>
    %372 = arith.divf %370, %371 : vector<8x128xf32>
    %373 = vector.extract_strided_slice %354 {offsets = [0, 256], sizes = [8, 128], strides = [1, 1]} : vector<8x384xf32> to vector<8x128xf32>
    %374 = vector.extract_strided_slice %356 {offsets = [0, 256], sizes = [8, 128], strides = [1, 1]} : vector<8x384xf32> to vector<8x128xf32>
    %375 = arith.mulf %364, %374 : vector<8x128xf32>
    %376 = arith.addf %373, %375 : vector<8x128xf32>
    %377 = math.tanh %376 : vector<8x128xf32>
    %cst_72 = arith.constant 1.000000e+00 : f32
    %378 = vector.broadcast %cst_72 : f32 to vector<8x128xf32>
    %379 = arith.subf %378, %372 : vector<8x128xf32>
    %380 = arith.mulf %379, %377 : vector<8x128xf32>
    %381 = arith.mulf %372, %322 : vector<8x128xf32>
    %382 = arith.addf %380, %381 : vector<8x128xf32>
    %383 = vector.extract_strided_slice %20 {offsets = [48, 0], sizes = [8, 384], strides = [1, 1]} : vector<64x384xf32> to vector<8x384xf32>
    %384 = arith.addf %383, %8 : vector<8x384xf32>
    %cst_73 = arith.constant dense<0.000000e+00> : vector<8x384xf32>
    %385 = tpu.matmul %352, %1, %cst_73 {dimension_numbers = #tpu.dot_dimension_numbers<[1], [0], [0], [1], [0, 0, 1, 1], [], []>} : vector<8x128xf32>, vector<128x384xf32>, vector<8x384xf32> -> vector<8x384xf32>
    %386 = arith.addf %385, %14 : vector<8x384xf32>
    %387 = vector.extract_strided_slice %384 {offsets = [0, 0], sizes = [8, 128], strides = [1, 1]} : vector<8x384xf32> to vector<8x128xf32>
    %388 = vector.extract_strided_slice %386 {offsets = [0, 0], sizes = [8, 128], strides = [1, 1]} : vector<8x384xf32> to vector<8x128xf32>
    %389 = arith.addf %387, %388 : vector<8x128xf32>
    %390 = arith.negf %389 : vector<8x128xf32>
    %391 = math.exp %390 : vector<8x128xf32>
    %cst_74 = arith.constant 1.000000e+00 : f32
    %392 = vector.broadcast %cst_74 : f32 to vector<8x128xf32>
    %393 = arith.addf %392, %391 : vector<8x128xf32>
    %394 = arith.divf %392, %393 : vector<8x128xf32>
    %395 = vector.extract_strided_slice %384 {offsets = [0, 128], sizes = [8, 128], strides = [1, 1]} : vector<8x384xf32> to vector<8x128xf32>
    %396 = vector.extract_strided_slice %386 {offsets = [0, 128], sizes = [8, 128], strides = [1, 1]} : vector<8x384xf32> to vector<8x128xf32>
    %397 = arith.addf %395, %396 : vector<8x128xf32>
    %398 = arith.negf %397 : vector<8x128xf32>
    %399 = math.exp %398 : vector<8x128xf32>
    %cst_75 = arith.constant 1.000000e+00 : f32
    %400 = vector.broadcast %cst_75 : f32 to vector<8x128xf32>
    %401 = arith.addf %400, %399 : vector<8x128xf32>
    %402 = arith.divf %400, %401 : vector<8x128xf32>
    %403 = vector.extract_strided_slice %384 {offsets = [0, 256], sizes = [8, 128], strides = [1, 1]} : vector<8x384xf32> to vector<8x128xf32>
    %404 = vector.extract_strided_slice %386 {offsets = [0, 256], sizes = [8, 128], strides = [1, 1]} : vector<8x384xf32> to vector<8x128xf32>
    %405 = arith.mulf %394, %404 : vector<8x128xf32>
    %406 = arith.addf %403, %405 : vector<8x128xf32>
    %407 = math.tanh %406 : vector<8x128xf32>
    %cst_76 = arith.constant 1.000000e+00 : f32
    %408 = vector.broadcast %cst_76 : f32 to vector<8x128xf32>
    %409 = arith.subf %408, %402 : vector<8x128xf32>
    %410 = arith.mulf %409, %407 : vector<8x128xf32>
    %411 = arith.mulf %402, %352 : vector<8x128xf32>
    %412 = arith.addf %410, %411 : vector<8x128xf32>
    %cst_77 = arith.constant dense<0.000000e+00> : vector<8x384xf32>
    %413 = tpu.matmul %412, %5, %cst_77 {dimension_numbers = #tpu.dot_dimension_numbers<[1], [0], [0], [1], [0, 0, 1, 1], [], []>} : vector<8x128xf32>, vector<128x384xf32>, vector<8x384xf32> -> vector<8x384xf32>
    %414 = arith.addf %413, %11 : vector<8x384xf32>
    %cst_78 = arith.constant dense<0.000000e+00> : vector<8x384xf32>
    %415 = tpu.matmul %382, %3, %cst_78 {dimension_numbers = #tpu.dot_dimension_numbers<[1], [0], [0], [1], [0, 0, 1, 1], [], []>} : vector<8x128xf32>, vector<128x384xf32>, vector<8x384xf32> -> vector<8x384xf32>
    %416 = arith.addf %415, %17 : vector<8x384xf32>
    %417 = vector.extract_strided_slice %414 {offsets = [0, 0], sizes = [8, 128], strides = [1, 1]} : vector<8x384xf32> to vector<8x128xf32>
    %418 = vector.extract_strided_slice %416 {offsets = [0, 0], sizes = [8, 128], strides = [1, 1]} : vector<8x384xf32> to vector<8x128xf32>
    %419 = arith.addf %417, %418 : vector<8x128xf32>
    %420 = arith.negf %419 : vector<8x128xf32>
    %421 = math.exp %420 : vector<8x128xf32>
    %cst_79 = arith.constant 1.000000e+00 : f32
    %422 = vector.broadcast %cst_79 : f32 to vector<8x128xf32>
    %423 = arith.addf %422, %421 : vector<8x128xf32>
    %424 = arith.divf %422, %423 : vector<8x128xf32>
    %425 = vector.extract_strided_slice %414 {offsets = [0, 128], sizes = [8, 128], strides = [1, 1]} : vector<8x384xf32> to vector<8x128xf32>
    %426 = vector.extract_strided_slice %416 {offsets = [0, 128], sizes = [8, 128], strides = [1, 1]} : vector<8x384xf32> to vector<8x128xf32>
    %427 = arith.addf %425, %426 : vector<8x128xf32>
    %428 = arith.negf %427 : vector<8x128xf32>
    %429 = math.exp %428 : vector<8x128xf32>
    %cst_80 = arith.constant 1.000000e+00 : f32
    %430 = vector.broadcast %cst_80 : f32 to vector<8x128xf32>
    %431 = arith.addf %430, %429 : vector<8x128xf32>
    %432 = arith.divf %430, %431 : vector<8x128xf32>
    %433 = vector.extract_strided_slice %414 {offsets = [0, 256], sizes = [8, 128], strides = [1, 1]} : vector<8x384xf32> to vector<8x128xf32>
    %434 = vector.extract_strided_slice %416 {offsets = [0, 256], sizes = [8, 128], strides = [1, 1]} : vector<8x384xf32> to vector<8x128xf32>
    %435 = arith.mulf %424, %434 : vector<8x128xf32>
    %436 = arith.addf %433, %435 : vector<8x128xf32>
    %437 = math.tanh %436 : vector<8x128xf32>
    %cst_81 = arith.constant 1.000000e+00 : f32
    %438 = vector.broadcast %cst_81 : f32 to vector<8x128xf32>
    %439 = arith.subf %438, %432 : vector<8x128xf32>
    %440 = arith.mulf %439, %437 : vector<8x128xf32>
    %441 = arith.mulf %432, %382 : vector<8x128xf32>
    %442 = arith.addf %440, %441 : vector<8x128xf32>
    %443 = vector.extract_strided_slice %20 {offsets = [56, 0], sizes = [8, 384], strides = [1, 1]} : vector<64x384xf32> to vector<8x384xf32>
    %444 = arith.addf %443, %8 : vector<8x384xf32>
    %cst_82 = arith.constant dense<0.000000e+00> : vector<8x384xf32>
    %445 = tpu.matmul %412, %1, %cst_82 {dimension_numbers = #tpu.dot_dimension_numbers<[1], [0], [0], [1], [0, 0, 1, 1], [], []>} : vector<8x128xf32>, vector<128x384xf32>, vector<8x384xf32> -> vector<8x384xf32>
    %446 = arith.addf %445, %14 : vector<8x384xf32>
    %447 = vector.extract_strided_slice %444 {offsets = [0, 0], sizes = [8, 128], strides = [1, 1]} : vector<8x384xf32> to vector<8x128xf32>
    %448 = vector.extract_strided_slice %446 {offsets = [0, 0], sizes = [8, 128], strides = [1, 1]} : vector<8x384xf32> to vector<8x128xf32>
    %449 = arith.addf %447, %448 : vector<8x128xf32>
    %450 = arith.negf %449 : vector<8x128xf32>
    %451 = math.exp %450 : vector<8x128xf32>
    %cst_83 = arith.constant 1.000000e+00 : f32
    %452 = vector.broadcast %cst_83 : f32 to vector<8x128xf32>
    %453 = arith.addf %452, %451 : vector<8x128xf32>
    %454 = arith.divf %452, %453 : vector<8x128xf32>
    %455 = vector.extract_strided_slice %444 {offsets = [0, 128], sizes = [8, 128], strides = [1, 1]} : vector<8x384xf32> to vector<8x128xf32>
    %456 = vector.extract_strided_slice %446 {offsets = [0, 128], sizes = [8, 128], strides = [1, 1]} : vector<8x384xf32> to vector<8x128xf32>
    %457 = arith.addf %455, %456 : vector<8x128xf32>
    %458 = arith.negf %457 : vector<8x128xf32>
    %459 = math.exp %458 : vector<8x128xf32>
    %cst_84 = arith.constant 1.000000e+00 : f32
    %460 = vector.broadcast %cst_84 : f32 to vector<8x128xf32>
    %461 = arith.addf %460, %459 : vector<8x128xf32>
    %462 = arith.divf %460, %461 : vector<8x128xf32>
    %463 = vector.extract_strided_slice %444 {offsets = [0, 256], sizes = [8, 128], strides = [1, 1]} : vector<8x384xf32> to vector<8x128xf32>
    %464 = vector.extract_strided_slice %446 {offsets = [0, 256], sizes = [8, 128], strides = [1, 1]} : vector<8x384xf32> to vector<8x128xf32>
    %465 = arith.mulf %454, %464 : vector<8x128xf32>
    %466 = arith.addf %463, %465 : vector<8x128xf32>
    %467 = math.tanh %466 : vector<8x128xf32>
    %cst_85 = arith.constant 1.000000e+00 : f32
    %468 = vector.broadcast %cst_85 : f32 to vector<8x128xf32>
    %469 = arith.subf %468, %462 : vector<8x128xf32>
    %470 = arith.mulf %469, %467 : vector<8x128xf32>
    %471 = arith.mulf %462, %412 : vector<8x128xf32>
    %472 = arith.addf %470, %471 : vector<8x128xf32>
    %cst_86 = arith.constant dense<0.000000e+00> : vector<8x384xf32>
    %473 = tpu.matmul %472, %5, %cst_86 {dimension_numbers = #tpu.dot_dimension_numbers<[1], [0], [0], [1], [0, 0, 1, 1], [], []>} : vector<8x128xf32>, vector<128x384xf32>, vector<8x384xf32> -> vector<8x384xf32>
    %474 = arith.addf %473, %11 : vector<8x384xf32>
    %cst_87 = arith.constant dense<0.000000e+00> : vector<8x384xf32>
    %475 = tpu.matmul %442, %3, %cst_87 {dimension_numbers = #tpu.dot_dimension_numbers<[1], [0], [0], [1], [0, 0, 1, 1], [], []>} : vector<8x128xf32>, vector<128x384xf32>, vector<8x384xf32> -> vector<8x384xf32>
    %476 = arith.addf %475, %17 : vector<8x384xf32>
    %477 = vector.extract_strided_slice %474 {offsets = [0, 0], sizes = [8, 128], strides = [1, 1]} : vector<8x384xf32> to vector<8x128xf32>
    %478 = vector.extract_strided_slice %476 {offsets = [0, 0], sizes = [8, 128], strides = [1, 1]} : vector<8x384xf32> to vector<8x128xf32>
    %479 = arith.addf %477, %478 : vector<8x128xf32>
    %480 = arith.negf %479 : vector<8x128xf32>
    %481 = math.exp %480 : vector<8x128xf32>
    %cst_88 = arith.constant 1.000000e+00 : f32
    %482 = vector.broadcast %cst_88 : f32 to vector<8x128xf32>
    %483 = arith.addf %482, %481 : vector<8x128xf32>
    %484 = arith.divf %482, %483 : vector<8x128xf32>
    %485 = vector.extract_strided_slice %474 {offsets = [0, 128], sizes = [8, 128], strides = [1, 1]} : vector<8x384xf32> to vector<8x128xf32>
    %486 = vector.extract_strided_slice %476 {offsets = [0, 128], sizes = [8, 128], strides = [1, 1]} : vector<8x384xf32> to vector<8x128xf32>
    %487 = arith.addf %485, %486 : vector<8x128xf32>
    %488 = arith.negf %487 : vector<8x128xf32>
    %489 = math.exp %488 : vector<8x128xf32>
    %cst_89 = arith.constant 1.000000e+00 : f32
    %490 = vector.broadcast %cst_89 : f32 to vector<8x128xf32>
    %491 = arith.addf %490, %489 : vector<8x128xf32>
    %492 = arith.divf %490, %491 : vector<8x128xf32>
    %493 = vector.extract_strided_slice %474 {offsets = [0, 256], sizes = [8, 128], strides = [1, 1]} : vector<8x384xf32> to vector<8x128xf32>
    %494 = vector.extract_strided_slice %476 {offsets = [0, 256], sizes = [8, 128], strides = [1, 1]} : vector<8x384xf32> to vector<8x128xf32>
    %495 = arith.mulf %484, %494 : vector<8x128xf32>
    %496 = arith.addf %493, %495 : vector<8x128xf32>
    %497 = math.tanh %496 : vector<8x128xf32>
    %cst_90 = arith.constant 1.000000e+00 : f32
    %498 = vector.broadcast %cst_90 : f32 to vector<8x128xf32>
    %499 = arith.subf %498, %492 : vector<8x128xf32>
    %500 = arith.mulf %499, %497 : vector<8x128xf32>
    %501 = arith.mulf %492, %442 : vector<8x128xf32>
    %502 = arith.addf %500, %501 : vector<8x128xf32>
    %c0_91 = arith.constant 0 : index
    %c0_92 = arith.constant 0 : index
    %503 = vector.load %arg5[%c0_91, %c0_92] : memref<128x128xf32, #tpu.memory_space<vmem>>, vector<128x128xf32>
    %cst_93 = arith.constant dense<0.000000e+00> : vector<8x128xf32>
    %504 = tpu.matmul %502, %503, %cst_93 {dimension_numbers = #tpu.dot_dimension_numbers<[1], [0], [0], [1], [0, 0, 1, 1], [], []>} : vector<8x128xf32>, vector<128x128xf32>, vector<8x128xf32> -> vector<8x128xf32>
    %c0_94 = arith.constant 0 : index
    %c0_95 = arith.constant 0 : index
    %505 = vector.load %arg6[%c0_94, %c0_95] : memref<2x128xf32, #tpu.memory_space<vmem>>, vector<1x128xf32>
    %506 = vector.shape_cast %505 : vector<1x128xf32> to vector<1x128xf32>
    %507 = vector.broadcast %506 : vector<1x128xf32> to vector<8x128xf32>
    %508 = arith.addf %504, %507 : vector<8x128xf32>
    %509 = math.tanh %508 : vector<8x128xf32>
    %c1_96 = arith.constant 1 : index
    %c0_97 = arith.constant 0 : index
    %510 = vector.load %arg6[%c1_96, %c0_97] : memref<2x128xf32, #tpu.memory_space<vmem>>, vector<1x128xf32>
    %511 = vector.shape_cast %510 : vector<1x128xf32> to vector<1x128xf32>
    %512 = vector.broadcast %511 : vector<1x128xf32> to vector<8x128xf32>
    %513 = arith.mulf %509, %512 : vector<8x128xf32>
    %c0_98 = arith.constant 0 : index
    %c0_99 = arith.constant 0 : index
    %514 = vector.load %arg7[%c0_98, %c0_99] : memref<8x128xf32, #tpu.memory_space<vmem>>, vector<8x128xf32>
    tpu.vector_store %arg7[%c0_98, %c0_99], %513 {strides = array<i32>} : memref<8x128xf32, #tpu.memory_space<vmem>>, vector<8x128xf32>,
    return
  }
}

</mosaic_0001>

<llo_original>
// kernel: han_forward_pallas.1
$region0: #{han_forward_pallas.1}
  #allocation0 [shape = 'u32[]', space=smem, size = 0x4, offset = 0x4, fixed_abs, tag = 'smem constant byte address 0x4 - core index']
  #allocation1 [shape = 'u32[144,128]{1,0:T(1,128)}', space=vmem, size = 0x12000, scoped, tag = 'internal scratch']
  %s0 = inlined_call_operand.vmem [shape: f32[64,16], index: 0, kind: input, shape index: {}]
  %s1 = inlined_call_operand.vmem [shape: f32[16,384], index: 1, kind: input, shape index: {}]
  %s2 = inlined_call_operand.vmem [shape: f32[1,128,384], index: 2, kind: input, shape index: {}]
  %s3 = inlined_call_operand.vmem [shape: f32[2,128,384], index: 3, kind: input, shape index: {}]
  %s4 = inlined_call_operand.vmem [shape: f32[4,384], index: 4, kind: input, shape index: {}]
  %s5 = inlined_call_operand.vmem [shape: f32[128,128], index: 5, kind: input, shape index: {}]
  %s6 = inlined_call_operand.vmem [shape: f32[2,128], index: 6, kind: input, shape index: {}]
  %s7 = inlined_call_operand.hbm [shape: f32[8,128], index: 7, kind: output, shape index: {}]
  %s8 = sld [smem:[#allocation0]]
  $region38: #{han_forward_pallas.1} parent=0
    _
  %s10 = ssub.s32 1, %s8
  %s11 = scalar_select 0, %s10, %s8
  $region1: #{han_forward_pallas.1} parent=0
    #allocation2 [shape = 'u8[4096]{0}', space=vmem, size = 0x1000, scoped, tag = 'output window, operand 0, single buffered']
    #allocation3 [shape = 's32[1]{0}', space=sflag, size = 0x4, scoped, tag = 'scoped memory for han_forward_pallas.1']
    %12 = vsyncpa [#allocation3], 0
    // Predicated region
    $region2: #{han_forward_pallas.1} parent=1 // pred_check
      _
    $region3: #{han_forward_pallas.1} parent=1 // pred_check_branch
      %14 = sbr.rel (0) target = $region5
    $region4: #{han_forward_pallas.1} parent=1 // pred_region
      _
    $region5: #{han_forward_pallas.1} parent=1 // pred_fallthru
      _
    // Predicated region
    $region6: #{han_forward_pallas.1} parent=1 // pred_check
      _
    $region7: #{han_forward_pallas.1} parent=1 // pred_check_branch
      %16 = sbr.rel (0) target = $region9
    $region8: #{han_forward_pallas.1} parent=1 // pred_region
      _
    $region9: #{han_forward_pallas.1} parent=1 // pred_fallthru
      _
    // Predicated region
    $region10: #{han_forward_pallas.1} parent=1 // pred_check
      _
    $region11: #{han_forward_pallas.1} parent=1 // pred_check_branch
      %18 = sbr.rel (0) target = $region13
    $region12: #{han_forward_pallas.1} parent=1 // pred_region
      _
    $region13: #{han_forward_pallas.1} parent=1 // pred_fallthru
      _
    // Predicated region
    $region14: #{han_forward_pallas.1} parent=1 // pred_check
      _
    $region15: #{han_forward_pallas.1} parent=1 // pred_check_branch
      %20 = sbr.rel (0) target = $region17
    $region16: #{han_forward_pallas.1} parent=1 // pred_region
      _
    $region17: #{han_forward_pallas.1} parent=1 // pred_fallthru
      _
    // Predicated region
    $region18: #{han_forward_pallas.1} parent=1 // pred_check
      _
    $region19: #{han_forward_pallas.1} parent=1 // pred_check_branch
      %22 = sbr.rel (0) target = $region21
    $region20: #{han_forward_pallas.1} parent=1 // pred_region
      _
    $region21: #{han_forward_pallas.1} parent=1 // pred_fallthru
      _
    // Predicated region
    $region22: #{han_forward_pallas.1} parent=1 // pred_check
      _
    $region23: #{han_forward_pallas.1} parent=1 // pred_check_branch
      %24 = sbr.rel (0) target = $region25
    $region24: #{han_forward_pallas.1} parent=1 // pred_region
      _
    $region25: #{han_forward_pallas.1} parent=1 // pred_fallthru
      _
    // Predicated region
    $region26: #{han_forward_pallas.1} parent=1 // pred_check
      _
    $region27: #{han_forward_pallas.1} parent=1 // pred_check_branch
      %26 = sbr.rel (0) target = $region29
    $region28: #{han_forward_pallas.1} parent=1 // pred_region
      _
    $region29: #{han_forward_pallas.1} parent=1 // pred_fallthru
      _
    %v27 = vld [vmem:[%s3] sm:$0xff]
    %v28 = vld [vmem:[%s3 + $0x8] sm:$0xff]
    %v29 = vld [vmem:[%s3 + $0x10] sm:$0xff]
    %v30 = vld [vmem:[%s3 + $0x18] sm:$0xff]
    %v31 = vld [vmem:[%s3 + $0x20] sm:$0xff]
    %v32 = vld [vmem:[%s3 + $0x28] sm:$0xff]
    %v33 = vld [vmem:[%s3 + $0x30] sm:$0xff]
    %v34 = vld [vmem:[%s3 + $0x38] sm:$0xff]
    %v35 = vld [vmem:[%s3 + $0x40] sm:$0xff]
    %v36 = vld [vmem:[%s3 + $0x48] sm:$0xff]
    %v37 = vld [vmem:[%s3 + $0x50] sm:$0xff]
    %v38 = vld [vmem:[%s3 + $0x58] sm:$0xff]
    %v39 = vld [vmem:[%s3 + $0x60] sm:$0xff]
    %v40 = vld [vmem:[%s3 + $0x68] sm:$0xff]
    %v41 = vld [vmem:[%s3 + $0x70] sm:$0xff]
    %v42 = vld [vmem:[%s3 + $0x78] sm:$0xff]
    %v43 = vld [vmem:[%s3 + $0x80] sm:$0xff]
    %v44 = vld [vmem:[%s3 + $0x88] sm:$0xff]
    %v45 = vld [vmem:[%s3 + $0x90] sm:$0xff]
    %v46 = vld [vmem:[%s3 + $0x98] sm:$0xff]
    %v47 = vld [vmem:[%s3 + $0xa0] sm:$0xff]
    %v48 = vld [vmem:[%s3 + $0xa8] sm:$0xff]
    %v49 = vld [vmem:[%s3 + $0xb0] sm:$0xff]
    %v50 = vld [vmem:[%s3 + $0xb8] sm:$0xff]
    %v51 = vld [vmem:[%s3 + $0xc0] sm:$0xff]
    %v52 = vld [vmem:[%s3 + $0xc8] sm:$0xff]
    %v53 = vld [vmem:[%s3 + $0xd0] sm:$0xff]
    %v54 = vld [vmem:[%s3 + $0xd8] sm:$0xff]
    %v55 = vld [vmem:[%s3 + $0xe0] sm:$0xff]
    %v56 = vld [vmem:[%s3 + $0xe8] sm:$0xff]
    %v57 = vld [vmem:[%s3 + $0xf0] sm:$0xff]
    %v58 = vld [vmem:[%s3 + $0xf8] sm:$0xff]
    %v59 = vld [vmem:[%s3 + $0x100] sm:$0xff]
    %v60 = vld [vmem:[%s3 + $0x108] sm:$0xff]
    %v61 = vld [vmem:[%s3 + $0x110] sm:$0xff]
    %v62 = vld [vmem:[%s3 + $0x118] sm:$0xff]
    %v63 = vld [vmem:[%s3 + $0x120] sm:$0xff]
    %v64 = vld [vmem:[%s3 + $0x128] sm:$0xff]
    %v65 = vld [vmem:[%s3 + $0x130] sm:$0xff]
    %v66 = vld [vmem:[%s3 + $0x138] sm:$0xff]
    %v67 = vld [vmem:[%s3 + $0x140] sm:$0xff]
    %v68 = vld [vmem:[%s3 + $0x148] sm:$0xff]
    %v69 = vld [vmem:[%s3 + $0x150] sm:$0xff]
    %v70 = vld [vmem:[%s3 + $0x158] sm:$0xff]
    %v71 = vld [vmem:[%s3 + $0x160] sm:$0xff]
    %v72 = vld [vmem:[%s3 + $0x168] sm:$0xff]
    %v73 = vld [vmem:[%s3 + $0x170] sm:$0xff]
    %v74 = vld [vmem:[%s3 + $0x178] sm:$0xff]
    %s75 = scalar_lea.vmem %s3, 384
    %v76 = vld [vmem:[%s75] sm:$0xff]
    %v77 = vld [vmem:[%s75 + $0x8] sm:$0xff]
    %v78 = vld [vmem:[%s75 + $0x10] sm:$0xff]
    %v79 = vld [vmem:[%s75 + $0x18] sm:$0xff]
    %v80 = vld [vmem:[%s75 + $0x20] sm:$0xff]
    %v81 = vld [vmem:[%s75 + $0x28] sm:$0xff]
    %v82 = vld [vmem:[%s75 + $0x30] sm:$0xff]
    %v83 = vld [vmem:[%s75 + $0x38] sm:$0xff]
    %v84 = vld [vmem:[%s75 + $0x40] sm:$0xff]
    %v85 = vld [vmem:[%s75 + $0x48] sm:$0xff]
    %v86 = vld [vmem:[%s75 + $0x50] sm:$0xff]
    %v87 = vld [vmem:[%s75 + $0x58] sm:$0xff]
    %v88 = vld [vmem:[%s75 + $0x60] sm:$0xff]
    %v89 = vld [vmem:[%s75 + $0x68] sm:$0xff]
    %v90 = vld [vmem:[%s75 + $0x70] sm:$0xff]
    %v91 = vld [vmem:[%s75 + $0x78] sm:$0xff]
    %v92 = vld [vmem:[%s75 + $0x80] sm:$0xff]
    %v93 = vld [vmem:[%s75 + $0x88] sm:$0xff]
    %v94 = vld [vmem:[%s75 + $0x90] sm:$0xff]
    %v95 = vld [vmem:[%s75 + $0x98] sm:$0xff]
    %v96 = vld [vmem:[%s75 + $0xa0] sm:$0xff]
    %v97 = vld [vmem:[%s75 + $0xa8] sm:$0xff]
    %v98 = vld [vmem:[%s75 + $0xb0] sm:$0xff]
    %v99 = vld [vmem:[%s75 + $0xb8] sm:$0xff]
    %v100 = vld [vmem:[%s75 + $0xc0] sm:$0xff]
    %v101 = vld [vmem:[%s75 + $0xc8] sm:$0xff]
    %v102 = vld [vmem:[%s75 + $0xd0] sm:$0xff]
    %v103 = vld [vmem:[%s75 + $0xd8] sm:$0xff]
    %v104 = vld [vmem:[%s75 + $0xe0] sm:$0xff]
    %v105 = vld [vmem:[%s75 + $0xe8] sm:$0xff]
    %v106 = vld [vmem:[%s75 + $0xf0] sm:$0xff]
    %v107 = vld [vmem:[%s75 + $0xf8] sm:$0xff]
    %v108 = vld [vmem:[%s75 + $0x100] sm:$0xff]
    %v109 = vld [vmem:[%s75 + $0x108] sm:$0xff]
    %v110 = vld [vmem:[%s75 + $0x110] sm:$0xff]
    %v111 = vld [vmem:[%s75 + $0x118] sm:$0xff]
    %v112 = vld [vmem:[%s75 + $0x120] sm:$0xff]
    %v113 = vld [vmem:[%s75 + $0x128] sm:$0xff]
    %v114 = vld [vmem:[%s75 + $0x130] sm:$0xff]
    %v115 = vld [vmem:[%s75 + $0x138] sm:$0xff]
    %v116 = vld [vmem:[%s75 + $0x140] sm:$0xff]
    %v117 = vld [vmem:[%s75 + $0x148] sm:$0xff]
    %v118 = vld [vmem:[%s75 + $0x150] sm:$0xff]
    %v119 = vld [vmem:[%s75 + $0x158] sm:$0xff]
    %v120 = vld [vmem:[%s75 + $0x160] sm:$0xff]
    %v121 = vld [vmem:[%s75 + $0x168] sm:$0xff]
    %v122 = vld [vmem:[%s75 + $0x170] sm:$0xff]
    %v123 = vld [vmem:[%s75 + $0x178] sm:$0xff]
    %v124 = vld [vmem:[%s2] sm:$0xff]
    %v125 = vld [vmem:[%s2 + $0x8] sm:$0xff]
    %v126 = vld [vmem:[%s2 + $0x10] sm:$0xff]
    %v127 = vld [vmem:[%s2 + $0x18] sm:$0xff]
    %v128 = vld [vmem:[%s2 + $0x20] sm:$0xff]
    %v129 = vld [vmem:[%s2 + $0x28] sm:$0xff]
    %v130 = vld [vmem:[%s2 + $0x30] sm:$0xff]
    %v131 = vld [vmem:[%s2 + $0x38] sm:$0xff]
    %v132 = vld [vmem:[%s2 + $0x40] sm:$0xff]
    %v133 = vld [vmem:[%s2 + $0x48] sm:$0xff]
    %v134 = vld [vmem:[%s2 + $0x50] sm:$0xff]
    %v135 = vld [vmem:[%s2 + $0x58] sm:$0xff]
    %v136 = vld [vmem:[%s2 + $0x60] sm:$0xff]
    %v137 = vld [vmem:[%s2 + $0x68] sm:$0xff]
    %v138 = vld [vmem:[%s2 + $0x70] sm:$0xff]
    %v139 = vld [vmem:[%s2 + $0x78] sm:$0xff]
    %v140 = vld [vmem:[%s2 + $0x80] sm:$0xff]
    %v141 = vld [vmem:[%s2 + $0x88] sm:$0xff]
    %v142 = vld [vmem:[%s2 + $0x90] sm:$0xff]
    %v143 = vld [vmem:[%s2 + $0x98] sm:$0xff]
    %v144 = vld [vmem:[%s2 + $0xa0] sm:$0xff]
    %v145 = vld [vmem:[%s2 + $0xa8] sm:$0xff]
    %v146 = vld [vmem:[%s2 + $0xb0] sm:$0xff]
    %v147 = vld [vmem:[%s2 + $0xb8] sm:$0xff]
    %v148 = vld [vmem:[%s2 + $0xc0] sm:$0xff]
    %v149 = vld [vmem:[%s2 + $0xc8] sm:$0xff]
    %v150 = vld [vmem:[%s2 + $0xd0] sm:$0xff]
    %v151 = vld [vmem:[%s2 + $0xd8] sm:$0xff]
    %v152 = vld [vmem:[%s2 + $0xe0] sm:$0xff]
    %v153 = vld [vmem:[%s2 + $0xe8] sm:$0xff]
    %v154 = vld [vmem:[%s2 + $0xf0] sm:$0xff]
    %v155 = vld [vmem:[%s2 + $0xf8] sm:$0xff]
    %v156 = vld [vmem:[%s2 + $0x100] sm:$0xff]
    %v157 = vld [vmem:[%s2 + $0x108] sm:$0xff]
    %v158 = vld [vmem:[%s2 + $0x110] sm:$0xff]
    %v159 = vld [vmem:[%s2 + $0x118] sm:$0xff]
    %v160 = vld [vmem:[%s2 + $0x120] sm:$0xff]
    %v161 = vld [vmem:[%s2 + $0x128] sm:$0xff]
    %v162 = vld [vmem:[%s2 + $0x130] sm:$0xff]
    %v163 = vld [vmem:[%s2 + $0x138] sm:$0xff]
    %v164 = vld [vmem:[%s2 + $0x140] sm:$0xff]
    %v165 = vld [vmem:[%s2 + $0x148] sm:$0xff]
    %v166 = vld [vmem:[%s2 + $0x150] sm:$0xff]
    %v167 = vld [vmem:[%s2 + $0x158] sm:$0xff]
    %v168 = vld [vmem:[%s2 + $0x160] sm:$0xff]
    %v169 = vld [vmem:[%s2 + $0x168] sm:$0xff]
    %v170 = vld [vmem:[%s2 + $0x170] sm:$0xff]
    %v171 = vld [vmem:[%s2 + $0x178] sm:$0xff]
    %v172 = vld [vmem:[%s4] ss:$4 sm:$0x7]
    %v174 = vlaneseq
    %v175 = vshrl.u32 %v174, 7
    %v176 = vsub.s32 0, %v175
    %v177 = vrot.slane %v172, %v176
    %v178 = vlaneseq
    %v179 = vshrl.u32 %v178, 7
    %v180 = vsub.s32 1, %v179
    %v181 = vrot.slane %v172, %v180
    %v182 = vlaneseq
    %v183 = vshrl.u32 %v182, 7
    %v184 = vsub.s32 2, %v183
    %v185 = vrot.slane %v172, %v184
    %s189 = scalar_lea.vmem %s4, 2
    %v190 = vld [vmem:[%s189] ss:$4 sm:$0x7]
    %v192 = vlaneseq
    %v193 = vshrl.u32 %v192, 7
    %v194 = vsub.s32 0, %v193
    %v195 = vrot.slane %v190, %v194
    %v196 = vlaneseq
    %v197 = vshrl.u32 %v196, 7
    %v198 = vsub.s32 1, %v197
    %v199 = vrot.slane %v190, %v198
    %v200 = vlaneseq
    %v201 = vshrl.u32 %v200, 7
    %v202 = vsub.s32 2, %v201
    %v203 = vrot.slane %v190, %v202
    %s207 = scalar_lea.vmem %s4, 1
    %v208 = vld [vmem:[%s207] ss:$4 sm:$0x7]
    %v210 = vlaneseq
    %v211 = vshrl.u32 %v210, 7
    %v212 = vsub.s32 0, %v211
    %v213 = vrot.slane %v208, %v212
    %v214 = vlaneseq
    %v215 = vshrl.u32 %v214, 7
    %v216 = vsub.s32 1, %v215
    %v217 = vrot.slane %v208, %v216
    %v218 = vlaneseq
    %v219 = vshrl.u32 %v218, 7
    %v220 = vsub.s32 2, %v219
    %v221 = vrot.slane %v208, %v220
    %s225 = scalar_lea.vmem %s4, 3
    %v226 = vld [vmem:[%s225] ss:$4 sm:$0x7]
    %v228 = vlaneseq
    %v229 = vshrl.u32 %v228, 7
    %v230 = vsub.s32 0, %v229
    %v231 = vrot.slane %v226, %v230
    %v232 = vlaneseq
    %v233 = vshrl.u32 %v232, 7
    %v234 = vsub.s32 1, %v233
    %v235 = vrot.slane %v226, %v234
    %v236 = vlaneseq
    %v237 = vshrl.u32 %v236, 7
    %v238 = vsub.s32 2, %v237
    %v239 = vrot.slane %v226, %v238
    %v243 = vld [vmem:[%s0] sm:$0xff]
    %v244 = vld [vmem:[%s0 + $0x8] sm:$0xff]
    %v245 = vld [vmem:[%s0 + $0x10] sm:$0xff]
    %v246 = vld [vmem:[%s0 + $0x18] sm:$0xff]
    %v247 = vld [vmem:[%s0 + $0x20] sm:$0xff]
    %v248 = vld [vmem:[%s0 + $0x28] sm:$0xff]
    %v249 = vld [vmem:[%s0 + $0x30] sm:$0xff]
    %v250 = vld [vmem:[%s0 + $0x38] sm:$0xff]
    %v251 = vld [vmem:[%s1] sm:$0xff]
    %v252 = vld [vmem:[%s1 + $0x8] sm:$0xff]
    %v253 = vld [vmem:[%s1 + $0x10] sm:$0xff]
    %v254 = vld [vmem:[%s1 + $0x18] sm:$0xff]
    %v255 = vld [vmem:[%s1 + $0x20] sm:$0xff]
    %v256 = vld [vmem:[%s1 + $0x28] sm:$0xff]
    %vm257 = vcmask 130048
    %v259 = vsel %vm257, %v243, 0
    %v262 = vsel %vm257, %v244, 0
    %v265 = vsel %vm257, %v245, 0
    %v268 = vsel %vm257, %v246, 0
    %v271 = vsel %vm257, %v247, 0
    %v274 = vsel %vm257, %v248, 0
    %v277 = vsel %vm257, %v249, 0
    %v280 = vsel %vm257, %v250, 0
    %282 = vmatprep.subr.mxu0 %v252
    %283 = vmatpush1.msra.mxu0 %v251
    %284 = vmatprep.subr.mxu0 %v255
    %285 = vmatpush1.msra.mxu0 %v254
    %286 = vmatprep.subr.mxu0 0.0
    %287 = vmatpush1.msra.mxu0 0.0
    %288 = vmatprep.subr.mxu0 0.0
    %289 = vmatpush1.msra.mxu0 0.0
    %290 = vmatprep.subr.mxu0 0.0
    %291 = vmatpush1.msra.mxu0 0.0
    %292 = vmatprep.subr.mxu0 0.0
    %293 = vmatpush1.msra.mxu0 0.0
    %294 = vmatprep.subr.mxu0 0.0
    %295 = vmatpush1.msra.mxu0 0.0
    %296 = vmatprep.subr.mxu0 0.0
    %297 = vmatpush1.msra.mxu0 0.0
    %298 = vmatprep.subr.mxu0 0.0
    %299 = vmatpush1.msra.mxu0 0.0
    %300 = vmatprep.subr.mxu0 0.0
    %301 = vmatpush1.msra.mxu0 0.0
    %302 = vmatprep.subr.mxu0 0.0
    %303 = vmatpush1.msra.mxu0 0.0
    %304 = vmatprep.subr.mxu0 0.0
    %305 = vmatpush1.msra.mxu0 0.0
    %306 = vmatprep.subr.mxu0 0.0
    %307 = vmatpush1.msra.mxu0 0.0
    %308 = vmatprep.subr.mxu0 0.0
    %309 = vmatpush1.msra.mxu0 0.0
    %310 = vmatprep.subr.mxu0 0.0
    %311 = vmatpush1.msra.mxu0 0.0
    %312 = vmatprep.subr.mxu0 0.0
    %313 = vmatpush1.msra.mxu0 0.0
    %314 = vmatprep.subr.mxu0 0.0
    %315 = vmatpush1.msra.mxu0 0.0
    %316 = vmatprep.subr.mxu0 0.0
    %317 = vmatpush1.msra.mxu0 0.0
    %318 = vmatprep.subr.mxu0 0.0
    %319 = vmatpush1.msra.mxu0 0.0
    %320 = vmatprep.subr.mxu0 0.0
    %321 = vmatpush1.msra.mxu0 0.0
    %322 = vmatprep.subr.mxu0 0.0
    %323 = vmatpush1.msra.mxu0 0.0
    %324 = vmatprep.subr.mxu0 0.0
    %325 = vmatpush1.msra.mxu0 0.0
    %326 = vmatprep.subr.mxu0 0.0
    %327 = vmatpush1.msra.mxu0 0.0
    %328 = vmatprep.subr.mxu0 0.0
    %329 = vmatpush1.msra.mxu0 0.0
    %330 = vmatprep.subr.mxu0 0.0
    %331 = vmatpush1.msra.mxu0 0.0
    %332 = vmatprep.subr.mxu0 0.0
    %333 = vmatpush1.msra.mxu0 0.0
    %334 = vmatprep.subr.mxu0 0.0
    %335 = vmatpush1.msra.mxu0 0.0
    %336 = vmatprep.subr.mxu0 0.0
    %337 = vmatpush1.msra.mxu0 0.0
    %338 = vmatprep.subr.mxu0 0.0
    %339 = vmatpush1.msra.mxu0 0.0
    %340 = vmatprep.subr.mxu0 0.0
    %341 = vmatpush1.msra.mxu0 0.0
    %342 = vmatprep.subr.mxu0 0.0
    %343 = vmatpush1.msra.mxu0 0.0
    %344 = vmatprep.subr.mxu0 0.0
    %345 = vmatpush1.msra.mxu0 0.0
    %346 = vmatprep.mubr.f32.mxu0 0.0
    %347 = vmatmul.mubr.f32.gmra.mrb[0].mxu0 %v259
    %v348 = vpop.f32.mrb[0].mxu0
    %v349 = vadd.f32 0.0, %v348
    %v350 = vpop.f32.mrb[0].mxu0
    %v351 = vadd.f32 0.0, %v350
    %352 = vmatprep.mubr.f32.mxu0 0.0
    %353 = vmatmul.mubr.f32.gmra.mrb[0].mxu0 %v262
    %v354 = vpop.f32.mrb[0].mxu0
    %v355 = vadd.f32 0.0, %v354
    %v356 = vpop.f32.mrb[0].mxu0
    %v357 = vadd.f32 0.0, %v356
    %358 = vmatprep.mubr.f32.mxu0 0.0
    %359 = vmatmul.mubr.f32.gmra.mrb[0].mxu0 %v265
    %v360 = vpop.f32.mrb[0].mxu0
    %v361 = vadd.f32 0.0, %v360
    %v362 = vpop.f32.mrb[0].mxu0
    %v363 = vadd.f32 0.0, %v362
    %364 = vmatprep.mubr.f32.mxu0 0.0
    %365 = vmatmul.mubr.f32.gmra.mrb[0].mxu0 %v268
    %v366 = vpop.f32.mrb[0].mxu0
    %v367 = vadd.f32 0.0, %v366
    %v368 = vpop.f32.mrb[0].mxu0
    %v369 = vadd.f32 0.0, %v368
    %370 = vmatprep.mubr.f32.mxu0 0.0
    %371 = vmatmul.mubr.f32.gmra.mrb[0].mxu0 %v271
    %v372 = vpop.f32.mrb[0].mxu0
    %v373 = vadd.f32 0.0, %v372
    %v374 = vpop.f32.mrb[0].mxu0
    %v375 = vadd.f32 0.0, %v374
    %376 = vmatprep.mubr.f32.mxu0 0.0
    %377 = vmatmul.mubr.f32.gmra.mrb[0].mxu0 %v274
    %v378 = vpop.f32.mrb[0].mxu0
    %v379 = vadd.f32 0.0, %v378
    %v380 = vpop.f32.mrb[0].mxu0
    %v381 = vadd.f32 0.0, %v380
    %382 = vmatprep.mubr.f32.mxu0 0.0
    %383 = vmatmul.mubr.f32.gmra.mrb[0].mxu0 %v277
    %v384 = vpop.f32.mrb[0].mxu0
    %v385 = vadd.f32 0.0, %v384
    %v386 = vpop.f32.mrb[0].mxu0
    %v387 = vadd.f32 0.0, %v386
    %388 = vmatprep.mubr.f32.mxu0 0.0
    %389 = vmatmul.mubr.f32.gmra.mrb[0].mxu0 %v280
    %v390 = vpop.f32.mrb[0].mxu0
    %v391 = vadd.f32 0.0, %v390
    %v392 = vpop.f32.mrb[0].mxu0
    %v393 = vadd.f32 0.0, %v392
    %394 = vdwg.mxu0
    %395 = vmatprep.subr.mxu0 0.0
    %396 = vmatpush1.msra.mxu0 %v253
    %397 = vmatprep.subr.mxu0 0.0
    %398 = vmatpush1.msra.mxu0 %v256
    %399 = vmatprep.subr.mxu0 0.0
    %400 = vmatpush1.msra.mxu0 0.0
    %401 = vmatprep.subr.mxu0 0.0
    %402 = vmatpush1.msra.mxu0 0.0
    %403 = vmatprep.subr.mxu0 0.0
    %404 = vmatpush1.msra.mxu0 0.0
    %405 = vmatprep.subr.mxu0 0.0
    %406 = vmatpush1.msra.mxu0 0.0
    %407 = vmatprep.subr.mxu0 0.0
    %408 = vmatpush1.msra.mxu0 0.0
    %409 = vmatprep.subr.mxu0 0.0
    %410 = vmatpush1.msra.mxu0 0.0
    %411 = vmatprep.subr.mxu0 0.0
    %412 = vmatpush1.msra.mxu0 0.0
    %413 = vmatprep.subr.mxu0 0.0
    %414 = vmatpush1.msra.mxu0 0.0
    %415 = vmatprep.subr.mxu0 0.0
    %416 = vmatpush1.msra.mxu0 0.0
    %417 = vmatprep.subr.mxu0 0.0
    %418 = vmatpush1.msra.mxu0 0.0
    %419 = vmatprep.subr.mxu0 0.0
    %420 = vmatpush1.msra.mxu0 0.0
    %421 = vmatprep.subr.mxu0 0.0
    %422 = vmatpush1.msra.mxu0 0.0
    %423 = vmatprep.subr.mxu0 0.0
    %424 = vmatpush1.msra.mxu0 0.0
    %425 = vmatprep.subr.mxu0 0.0
    %426 = vmatpush1.msra.mxu0 0.0
    %427 = vmatprep.subr.mxu0 0.0
    %428 = vmatpush1.msra.mxu0 0.0
    %429 = vmatprep.subr.mxu0 0.0
    %430 = vmatpush1.msra.mxu0 0.0
    %431 = vmatprep.subr.mxu0 0.0
    %432 = vmatpush1.msra.mxu0 0.0
    %433 = vmatprep.subr.mxu0 0.0
    %434 = vmatpush1.msra.mxu0 0.0
    %435 = vmatprep.subr.mxu0 0.0
    %436 = vmatpush1.msra.mxu0 0.0
    %437 = vmatprep.subr.mxu0 0.0
    %438 = vmatpush1.msra.mxu0 0.0
    %439 = vmatprep.subr.mxu0 0.0
    %440 = vmatpush1.msra.mxu0 0.0
    %441 = vmatprep.subr.mxu0 0.0
    %442 = vmatpush1.msra.mxu0 0.0
    %443 = vmatprep.subr.mxu0 0.0
    %444 = vmatpush1.msra.mxu0 0.0
    %445 = vmatprep.subr.mxu0 0.0
    %446 = vmatpush1.msra.mxu0 0.0
    %447 = vmatprep.subr.mxu0 0.0
    %448 = vmatpush1.msra.mxu0 0.0
    %449 = vmatprep.subr.mxu0 0.0
    %450 = vmatpush1.msra.mxu0 0.0
    %451 = vmatprep.subr.mxu0 0.0
    %452 = vmatpush1.msra.mxu0 0.0
    %453 = vmatprep.subr.mxu0 0.0
    %454 = vmatpush1.msra.mxu0 0.0
    %455 = vmatprep.subr.mxu0 0.0
    %456 = vmatpush1.msra.mxu0 0.0
    %457 = vmatprep.subr.mxu0 0.0
    %458 = vmatpush1.msra.mxu0 0.0
    %459 = vmatprep.mubr.f32.mxu0 0.0
    %460 = vmatmul.mubr.f32.gmra.mrb[0].mxu0 %v259
    %v461 = vpop.f32.mrb[0].mxu0
    %v462 = vadd.f32 0.0, %v461
    %v463 = vpop.f32.mrb[0].mxu0
    %464 = vmatprep.mubr.f32.mxu0 0.0
    %465 = vmatmul.mubr.f32.gmra.mrb[0].mxu0 %v262
    %v466 = vpop.f32.mrb[0].mxu0
    %v467 = vadd.f32 0.0, %v466
    %v468 = vpop.f32.mrb[0].mxu0
    %469 = vmatprep.mubr.f32.mxu0 0.0
    %470 = vmatmul.mubr.f32.gmra.mrb[0].mxu0 %v265
    %v471 = vpop.f32.mrb[0].mxu0
    %v472 = vadd.f32 0.0, %v471
    %v473 = vpop.f32.mrb[0].mxu0
    %474 = vmatprep.mubr.f32.mxu0 0.0
    %475 = vmatmul.mubr.f32.gmra.mrb[0].mxu0 %v268
    %v476 = vpop.f32.mrb[0].mxu0
    %v477 = vadd.f32 0.0, %v476
    %v478 = vpop.f32.mrb[0].mxu0
    %479 = vmatprep.mubr.f32.mxu0 0.0
    %480 = vmatmul.mubr.f32.gmra.mrb[0].mxu0 %v271
    %v481 = vpop.f32.mrb[0].mxu0
    %v482 = vadd.f32 0.0, %v481
    %v483 = vpop.f32.mrb[0].mxu0
    %484 = vmatprep.mubr.f32.mxu0 0.0
    %485 = vmatmul.mubr.f32.gmra.mrb[0].mxu0 %v274
    %v486 = vpop.f32.mrb[0].mxu0
    %v487 = vadd.f32 0.0, %v486
    %v488 = vpop.f32.mrb[0].mxu0
    %489 = vmatprep.mubr.f32.mxu0 0.0
    %490 = vmatmul.mubr.f32.gmra.mrb[0].mxu0 %v277
    %v491 = vpop.f32.mrb[0].mxu0
    %v492 = vadd.f32 0.0, %v491
    %v493 = vpop.f32.mrb[0].mxu0
    %494 = vmatprep.mubr.f32.mxu0 0.0
    %495 = vmatmul.mubr.f32.gmra.mrb[0].mxu0 %v280
    %v496 = vpop.f32.mrb[0].mxu0
    %v497 = vadd.f32 0.0, %v496
    %v498 = vpop.f32.mrb[0].mxu0
    %499 = vdwg.mxu0
    %v500 = vadd.f32 %v349, %v177
    %v501 = vadd.f32 %v351, %v181
    %v502 = vadd.f32 %v462, %v185
    %503 = vmatprep.subr.mxu0 %v28
    %504 = vmatpush1.msra.mxu0 %v27
    %505 = vmatprep.subr.mxu0 %v31
    %506 = vmatpush1.msra.mxu0 %v30
    %507 = vmatprep.subr.mxu0 %v34
    %508 = vmatpush1.msra.mxu0 %v33
    %509 = vmatprep.subr.mxu0 %v37
    %510 = vmatpush1.msra.mxu0 %v36
    %511 = vmatprep.subr.mxu0 %v40
    %512 = vmatpush1.msra.mxu0 %v39
    %513 = vmatprep.subr.mxu0 %v43
    %514 = vmatpush1.msra.mxu0 %v42
    %515 = vmatprep.subr.mxu0 %v46
    %516 = vmatpush1.msra.mxu0 %v45
    %517 = vmatprep.subr.mxu0 %v49
    %518 = vmatpush1.msra.mxu0 %v48
    %519 = vmatprep.subr.mxu0 %v52
    %520 = vmatpush1.msra.mxu0 %v51
    %521 = vmatprep.subr.mxu0 %v55
    %522 = vmatpush1.msra.mxu0 %v54
    %523 = vmatprep.subr.mxu0 %v58
    %524 = vmatpush1.msra.mxu0 %v57
    %525 = vmatprep.subr.mxu0 %v61
    %526 = vmatpush1.msra.mxu0 %v60
    %527 = vmatprep.subr.mxu0 %v64
    %528 = vmatpush1.msra.mxu0 %v63
    %529 = vmatprep.subr.mxu0 %v67
    %530 = vmatpush1.msra.mxu0 %v66
    %531 = vmatprep.subr.mxu0 %v70
    %532 = vmatpush1.msra.mxu0 %v69
    %533 = vmatprep.subr.mxu0 %v73
    %534 = vmatpush1.msra.mxu0 %v72
    %535 = vmatprep.subr.mxu0 0.0
    %536 = vmatpush1.msra.mxu0 0.0
    %537 = vmatprep.subr.mxu0 0.0
    %538 = vmatpush1.msra.mxu0 0.0
    %539 = vmatprep.subr.mxu0 0.0
    %540 = vmatpush1.msra.mxu0 0.0
    %541 = vmatprep.subr.mxu0 0.0
    %542 = vmatpush1.msra.mxu0 0.0
    %543 = vmatprep.subr.mxu0 0.0
    %544 = vmatpush1.msra.mxu0 0.0
    %545 = vmatprep.subr.mxu0 0.0
    %546 = vmatpush1.msra.mxu0 0.0
    %547 = vmatprep.subr.mxu0 0.0
    %548 = vmatpush1.msra.mxu0 0.0
    %549 = vmatprep.subr.mxu0 0.0
    %550 = vmatpush1.msra.mxu0 0.0
    %551 = vmatprep.subr.mxu0 0.0
    %552 = vmatpush1.msra.mxu0 0.0
    %553 = vmatprep.subr.mxu0 0.0
    %554 = vmatpush1.msra.mxu0 0.0
    %555 = vmatprep.subr.mxu0 0.0
    %556 = vmatpush1.msra.mxu0 0.0
    %557 = vmatprep.subr.mxu0 0.0
    %558 = vmatpush1.msra.mxu0 0.0
    %559 = vmatprep.subr.mxu0 0.0
    %560 = vmatpush1.msra.mxu0 0.0
    %561 = vmatprep.subr.mxu0 0.0
    %562 = vmatpush1.msra.mxu0 0.0
    %563 = vmatprep.subr.mxu0 0.0
    %564 = vmatpush1.msra.mxu0 0.0
    %565 = vmatprep.subr.mxu0 0.0
    %566 = vmatpush1.msra.mxu0 0.0
    %567 = vmatprep.mubr.f32.mxu0 0.0
    %568 = vmatmul.mubr.f32.gmra.mrb[0].mxu0 0.0
    %v569 = vpop.f32.mrb[0].mxu0
    %v570 = vadd.f32 %v213, %v569
    %v571 = vpop.f32.mrb[0].mxu0
    %v572 = vadd.f32 %v217, %v571
    %573 = vdwg.mxu0
    %574 = vmatprep.subr.mxu0 0.0
    %575 = vmatpush1.msra.mxu0 %v29
    %576 = vmatprep.subr.mxu0 0.0
    %577 = vmatpush1.msra.mxu0 %v32
    %578 = vmatprep.subr.mxu0 0.0
    %579 = vmatpush1.msra.mxu0 %v35
    %580 = vmatprep.subr.mxu0 0.0
    %581 = vmatpush1.msra.mxu0 %v38
    %582 = vmatprep.subr.mxu0 0.0
    %583 = vmatpush1.msra.mxu0 %v41
    %584 = vmatprep.subr.mxu0 0.0
    %585 = vmatpush1.msra.mxu0 %v44
    %586 = vmatprep.subr.mxu0 0.0
    %587 = vmatpush1.msra.mxu0 %v47
    %588 = vmatprep.subr.mxu0 0.0
    %589 = vmatpush1.msra.mxu0 %v50
    %590 = vmatprep.subr.mxu0 0.0
    %591 = vmatpush1.msra.mxu0 %v53
    %592 = vmatprep.subr.mxu0 0.0
    %593 = vmatpush1.msra.mxu0 %v56
    %594 = vmatprep.subr.mxu0 0.0
    %595 = vmatpush1.msra.mxu0 %v59
    %596 = vmatprep.subr.mxu0 0.0
    %597 = vmatpush1.msra.mxu0 %v62
    %598 = vmatprep.subr.mxu0 0.0
    %599 = vmatpush1.msra.mxu0 %v65
    %600 = vmatprep.subr.mxu0 0.0
    %601 = vmatpush1.msra.mxu0 %v68
    %602 = vmatprep.subr.mxu0 0.0
    %603 = vmatpush1.msra.mxu0 %v71
    %604 = vmatprep.subr.mxu0 0.0
    %605 = vmatpush1.msra.mxu0 %v74
    %606 = vmatprep.subr.mxu0 0.0
    %607 = vmatpush1.msra.mxu0 0.0
    %608 = vmatprep.subr.mxu0 0.0
    %609 = vmatpush1.msra.mxu0 0.0
    %610 = vmatprep.subr.mxu0 0.0
    %611 = vmatpush1.msra.mxu0 0.0
    %612 = vmatprep.subr.mxu0 0.0
    %613 = vmatpush1.msra.mxu0 0.0
    %614 = vmatprep.subr.mxu0 0.0
    %615 = vmatpush1.msra.mxu0 0.0
    %616 = vmatprep.subr.mxu0 0.0
    %617 = vmatpush1.msra.mxu0 0.0
    %618 = vmatprep.subr.mxu0 0.0
    %619 = vmatpush1.msra.mxu0 0.0
    %620 = vmatprep.subr.mxu0 0.0
    %621 = vmatpush1.msra.mxu0 0.0
    %622 = vmatprep.subr.mxu0 0.0
    %623 = vmatpush1.msra.mxu0 0.0
    %624 = vmatprep.subr.mxu0 0.0
    %625 = vmatpush1.msra.mxu0 0.0
    %626 = vmatprep.subr.mxu0 0.0
    %627 = vmatpush1.msra.mxu0 0.0
    %628 = vmatprep.subr.mxu0 0.0
    %629 = vmatpush1.msra.mxu0 0.0
    %630 = vmatprep.subr.mxu0 0.0
    %631 = vmatpush1.msra.mxu0 0.0
    %632 = vmatprep.subr.mxu0 0.0
    %633 = vmatpush1.msra.mxu0 0.0
    %634 = vmatprep.subr.mxu0 0.0
    %635 = vmatpush1.msra.mxu0 0.0
    %636 = vmatprep.subr.mxu0 0.0
    %637 = vmatpush1.msra.mxu0 0.0
    %638 = vmatprep.mubr.f32.mxu0 0.0
    %639 = vmatmul.mubr.f32.gmra.mrb[0].mxu0 0.0
    %v640 = vpop.f32.mrb[0].mxu0
    %v641 = vadd.f32 %v221, %v640
    %v642 = vpop.f32.mrb[0].mxu0
    %643 = vdwg.mxu0
    %v644 = vadd.f32 %v500, %v570
    %v645 = vxor.u32 %v644, 2147483648
    %v646 = vmul.f32 %v645, 1.442695
    %v647 = vpow.pop %v646
    %v648 = vadd.f32 %v647, 1.0
    %v649 = vrcp.pop %v648
    %v650 = vmul.f32 1.0, %v649
    %v651 = vadd.f32 %v501, %v572
    %v652 = vxor.u32 %v651, 2147483648
    %v653 = vmul.f32 %v652, 1.442695
    %v654 = vpow.pop %v653
    %v655 = vadd.f32 %v654, 1.0
    %v656 = vrcp.pop %v655
    %v657 = vmul.f32 1.0, %v656
    %v658 = vmul.f32 %v650, %v641
    %v659 = vadd.f32 %v502, %v658
    %v660 = vtanh.pop %v659
    %v661 = vsub.f32 1.0, %v657
    %v662 = vmul.f32 %v661, %v660
    %v663 = vmul.f32 %v657, 0.0
    %v664 = vadd.f32 %v662, %v663
    %665 = vmatprep.subr.mxu0 %v125
    %666 = vmatpush1.msra.mxu0 %v124
    %667 = vmatprep.subr.mxu0 %v128
    %668 = vmatpush1.msra.mxu0 %v127
    %669 = vmatprep.subr.mxu0 %v131
    %670 = vmatpush1.msra.mxu0 %v130
    %671 = vmatprep.subr.mxu0 %v134
    %672 = vmatpush1.msra.mxu0 %v133
    %673 = vmatprep.subr.mxu0 %v137
    %674 = vmatpush1.msra.mxu0 %v136
    %675 = vmatprep.subr.mxu0 %v140
    %676 = vmatpush1.msra.mxu0 %v139
    %677 = vmatprep.subr.mxu0 %v143
    %678 = vmatpush1.msra.mxu0 %v142
    %679 = vmatprep.subr.mxu0 %v146
    %680 = vmatpush1.msra.mxu0 %v145
    %681 = vmatprep.subr.mxu0 %v149
    %682 = vmatpush1.msra.mxu0 %v148
    %683 = vmatprep.subr.mxu0 %v152
    %684 = vmatpush1.msra.mxu0 %v151
    %685 = vmatprep.subr.mxu0 %v155
    %686 = vmatpush1.msra.mxu0 %v154
    %687 = vmatprep.subr.mxu0 %v158
    %688 = vmatpush1.msra.mxu0 %v157
    %689 = vmatprep.subr.mxu0 %v161
    %690 = vmatpush1.msra.mxu0 %v160
    %691 = vmatprep.subr.mxu0 %v164
    %692 = vmatpush1.msra.mxu0 %v163
    %693 = vmatprep.subr.mxu0 %v167
    %694 = vmatpush1.msra.mxu0 %v166
    %695 = vmatprep.subr.mxu0 %v170
    %696 = vmatpush1.msra.mxu0 %v169
    %697 = vmatprep.subr.mxu0 0.0
    %698 = vmatpush1.msra.mxu0 0.0
    %699 = vmatprep.subr.mxu0 0.0
    %700 = vmatpush1.msra.mxu0 0.0
    %701 = vmatprep.subr.mxu0 0.0
    %702 = vmatpush1.msra.mxu0 0.0
    %703 = vmatprep.subr.mxu0 0.0
    %704 = vmatpush1.msra.mxu0 0.0
    %705 = vmatprep.subr.mxu0 0.0
    %706 = vmatpush1.msra.mxu0 0.0
    %707 = vmatprep.subr.mxu0 0.0
    %708 = vmatpush1.msra.mxu0 0.0
    %709 = vmatprep.subr.mxu0 0.0
    %710 = vmatpush1.msra.mxu0 0.0
    %711 = vmatprep.subr.mxu0 0.0
    %712 = vmatpush1.msra.mxu0 0.0
    %713 = vmatprep.subr.mxu0 0.0
    %714 = vmatpush1.msra.mxu0 0.0
    %715 = vmatprep.subr.mxu0 0.0
    %716 = vmatpush1.msra.mxu0 0.0
    %717 = vmatprep.subr.mxu0 0.0
    %718 = vmatpush1.msra.mxu0 0.0
    %719 = vmatprep.subr.mxu0 0.0
    %720 = vmatpush1.msra.mxu0 0.0
    %721 = vmatprep.subr.mxu0 0.0
    %722 = vmatpush1.msra.mxu0 0.0
    %723 = vmatprep.subr.mxu0 0.0
    %724 = vmatpush1.msra.mxu0 0.0
    %725 = vmatprep.subr.mxu0 0.0
    %726 = vmatpush1.msra.mxu0 0.0
    %727 = vmatprep.subr.mxu0 0.0
    %728 = vmatpush1.msra.mxu0 0.0
    %729 = vmatprep.mubr.f32.mxu0 0.0
    %730 = vmatmul.mubr.f32.gmra.mrb[0].mxu0 %v664
    %v731 = vpop.f32.mrb[0].mxu0
    %v732 = vadd.f32 %v195, %v731
    %v733 = vpop.f32.mrb[0].mxu0
    %v734 = vadd.f32 %v199, %v733
    %735 = vdwg.mxu0
    %736 = vmatprep.subr.mxu0 0.0
    %737 = vmatpush1.msra.mxu0 %v126
    %738 = vmatprep.subr.mxu0 0.0
    %739 = vmatpush1.msra.mxu0 %v129
    %740 = vmatprep.subr.mxu0 0.0
    %741 = vmatpush1.msra.mxu0 %v132
    %742 = vmatprep.subr.mxu0 0.0
    %743 = vmatpush1.msra.mxu0 %v135
    %744 = vmatprep.subr.mxu0 0.0
    %745 = vmatpush1.msra.mxu0 %v138
    %746 = vmatprep.subr.mxu0 0.0
    %747 = vmatpush1.msra.mxu0 %v141
    %748 = vmatprep.subr.mxu0 0.0
    %749 = vmatpush1.msra.mxu0 %v144
    %750 = vmatprep.subr.mxu0 0.0
    %751 = vmatpush1.msra.mxu0 %v147
    %752 = vmatprep.subr.mxu0 0.0
    %753 = vmatpush1.msra.mxu0 %v150
    %754 = vmatprep.subr.mxu0 0.0
    %755 = vmatpush1.msra.mxu0 %v153
    %756 = vmatprep.subr.mxu0 0.0
    %757 = vmatpush1.msra.mxu0 %v156
    %758 = vmatprep.subr.mxu0 0.0
    %759 = vmatpush1.msra.mxu0 %v159
    %760 = vmatprep.subr.mxu0 0.0
    %761 = vmatpush1.msra.mxu0 %v162
    %762 = vmatprep.subr.mxu0 0.0
    %763 = vmatpush1.msra.mxu0 %v165
    %764 = vmatprep.subr.mxu0 0.0
    %765 = vmatpush1.msra.mxu0 %v168
    %766 = vmatprep.subr.mxu0 0.0
    %767 = vmatpush1.msra.mxu0 %v171
    %768 = vmatprep.subr.mxu0 0.0
    %769 = vmatpush1.msra.mxu0 0.0
    %770 = vmatprep.subr.mxu0 0.0
    %771 = vmatpush1.msra.mxu0 0.0
    %772 = vmatprep.subr.mxu0 0.0
    %773 = vmatpush1.msra.mxu0 0.0
    %774 = vmatprep.subr.mxu0 0.0
    %775 = vmatpush1.msra.mxu0 0.0
    %776 = vmatprep.subr.mxu0 0.0
    %777 = vmatpush1.msra.mxu0 0.0
    %778 = vmatprep.subr.mxu0 0.0
    %779 = vmatpush1.msra.mxu0 0.0
    %780 = vmatprep.subr.mxu0 0.0
    %781 = vmatpush1.msra.mxu0 0.0
    %782 = vmatprep.subr.mxu0 0.0
    %783 = vmatpush1.msra.mxu0 0.0
    %784 = vmatprep.subr.mxu0 0.0
    %785 = vmatpush1.msra.mxu0 0.0
    %786 = vmatprep.subr.mxu0 0.0
    %787 = vmatpush1.msra.mxu0 0.0
    %788 = vmatprep.subr.mxu0 0.0
    %789 = vmatpush1.msra.mxu0 0.0
    %790 = vmatprep.subr.mxu0 0.0
    %791 = vmatpush1.msra.mxu0 0.0
    %792 = vmatprep.subr.mxu0 0.0
    %793 = vmatpush1.msra.mxu0 0.0
    %794 = vmatprep.subr.mxu0 0.0
    %795 = vmatpush1.msra.mxu0 0.0
    %796 = vmatprep.subr.mxu0 0.0
    %797 = vmatpush1.msra.mxu0 0.0
    %798 = vmatprep.subr.mxu0 0.0
    %799 = vmatpush1.msra.mxu0 0.0
    %800 = vmatprep.mubr.f32.mxu0 0.0
    %801 = vmatmul.mubr.f32.gmra.mrb[0].mxu0 %v664
    %v802 = vpop.f32.mrb[0].mxu0
    %v803 = vadd.f32 %v203, %v802
    %v804 = vpop.f32.mrb[0].mxu0
    %805 = vdwg.mxu0
    %806 = vmatprep.subr.mxu0 %v77
    %807 = vmatpush1.msra.mxu0 %v76
    %808 = vmatprep.subr.mxu0 %v80
    %809 = vmatpush1.msra.mxu0 %v79
    %810 = vmatprep.subr.mxu0 %v83
    %811 = vmatpush1.msra.mxu0 %v82
    %812 = vmatprep.subr.mxu0 %v86
    %813 = vmatpush1.msra.mxu0 %v85
    %814 = vmatprep.subr.mxu0 %v89
    %815 = vmatpush1.msra.mxu0 %v88
    %816 = vmatprep.subr.mxu0 %v92
    %817 = vmatpush1.msra.mxu0 %v91
    %818 = vmatprep.subr.mxu0 %v95
    %819 = vmatpush1.msra.mxu0 %v94
    %820 = vmatprep.subr.mxu0 %v98
    %821 = vmatpush1.msra.mxu0 %v97
    %822 = vmatprep.subr.mxu0 %v101
    %823 = vmatpush1.msra.mxu0 %v100
    %824 = vmatprep.subr.mxu0 %v104
    %825 = vmatpush1.msra.mxu0 %v103
    %826 = vmatprep.subr.mxu0 %v107
    %827 = vmatpush1.msra.mxu0 %v106
    %828 = vmatprep.subr.mxu0 %v110
    %829 = vmatpush1.msra.mxu0 %v109
    %830 = vmatprep.subr.mxu0 %v113
    %831 = vmatpush1.msra.mxu0 %v112
    %832 = vmatprep.subr.mxu0 %v116
    %833 = vmatpush1.msra.mxu0 %v115
    %834 = vmatprep.subr.mxu0 %v119
    %835 = vmatpush1.msra.mxu0 %v118
    %836 = vmatprep.subr.mxu0 %v122
    %837 = vmatpush1.msra.mxu0 %v121
    %838 = vmatprep.subr.mxu0 0.0
    %839 = vmatpush1.msra.mxu0 0.0
    %840 = vmatprep.subr.mxu0 0.0
    %841 = vmatpush1.msra.mxu0 0.0
    %842 = vmatprep.subr.mxu0 0.0
    %843 = vmatpush1.msra.mxu0 0.0
    %844 = vmatprep.subr.mxu0 0.0
    %845 = vmatpush1.msra.mxu0 0.0
    %846 = vmatprep.subr.mxu0 0.0
    %847 = vmatpush1.msra.mxu0 0.0
    %848 = vmatprep.subr.mxu0 0.0
    %849 = vmatpush1.msra.mxu0 0.0
    %850 = vmatprep.subr.mxu0 0.0
    %851 = vmatpush1.msra.mxu0 0.0
    %852 = vmatprep.subr.mxu0 0.0
    %853 = vmatpush1.msra.mxu0 0.0
    %854 = vmatprep.subr.mxu0 0.0
    %855 = vmatpush1.msra.mxu0 0.0
    %856 = vmatprep.subr.mxu0 0.0
    %857 = vmatpush1.msra.mxu0 0.0
    %858 = vmatprep.subr.mxu0 0.0
    %859 = vmatpush1.msra.mxu0 0.0
    %860 = vmatprep.subr.mxu0 0.0
    %861 = vmatpush1.msra.mxu0 0.0
    %862 = vmatprep.subr.mxu0 0.0
    %863 = vmatpush1.msra.mxu0 0.0
    %864 = vmatprep.subr.mxu0 0.0
    %865 = vmatpush1.msra.mxu0 0.0
    %866 = vmatprep.subr.mxu0 0.0
    %867 = vmatpush1.msra.mxu0 0.0
    %868 = vmatprep.subr.mxu0 0.0
    %869 = vmatpush1.msra.mxu0 0.0
    %870 = vmatprep.mubr.f32.mxu0 0.0
    %871 = vmatmul.mubr.f32.gmra.mrb[0].mxu0 0.0
    %v872 = vpop.f32.mrb[0].mxu0
    %v873 = vadd.f32 %v231, %v872
    %v874 = vpop.f32.mrb[0].mxu0
    %v875 = vadd.f32 %v235, %v874
    %876 = vdwg.mxu0
    %877 = vmatprep.subr.mxu0 0.0
    %878 = vmatpush1.msra.mxu0 %v78
    %879 = vmatprep.subr.mxu0 0.0
    %880 = vmatpush1.msra.mxu0 %v81
    %881 = vmatprep.subr.mxu0 0.0
    %882 = vmatpush1.msra.mxu0 %v84
    %883 = vmatprep.subr.mxu0 0.0
    %884 = vmatpush1.msra.mxu0 %v87
    %885 = vmatprep.subr.mxu0 0.0
    %886 = vmatpush1.msra.mxu0 %v90
    %887 = vmatprep.subr.mxu0 0.0
    %888 = vmatpush1.msra.mxu0 %v93
    %889 = vmatprep.subr.mxu0 0.0
    %890 = vmatpush1.msra.mxu0 %v96
    %891 = vmatprep.subr.mxu0 0.0
    %892 = vmatpush1.msra.mxu0 %v99
    %893 = vmatprep.subr.mxu0 0.0
    %894 = vmatpush1.msra.mxu0 %v102
    %895 = vmatprep.subr.mxu0 0.0
    %896 = vmatpush1.msra.mxu0 %v105
    %897 = vmatprep.subr.mxu0 0.0
    %898 = vmatpush1.msra.mxu0 %v108
    %899 = vmatprep.subr.mxu0 0.0
    %900 = vmatpush1.msra.mxu0 %v111
    %901 = vmatprep.subr.mxu0 0.0
    %902 = vmatpush1.msra.mxu0 %v114
    %903 = vmatprep.subr.mxu0 0.0
    %904 = vmatpush1.msra.mxu0 %v117
    %905 = vmatprep.subr.mxu0 0.0
    %906 = vmatpush1.msra.mxu0 %v120
    %907 = vmatprep.subr.mxu0 0.0
    %908 = vmatpush1.msra.mxu0 %v123
    %909 = vmatprep.subr.mxu0 0.0
    %910 = vmatpush1.msra.mxu0 0.0
    %911 = vmatprep.subr.mxu0 0.0
    %912 = vmatpush1.msra.mxu0 0.0
    %913 = vmatprep.subr.mxu0 0.0
    %914 = vmatpush1.msra.mxu0 0.0
    %915 = vmatprep.subr.mxu0 0.0
    %916 = vmatpush1.msra.mxu0 0.0
    %917 = vmatprep.subr.mxu0 0.0
    %918 = vmatpush1.msra.mxu0 0.0
    %919 = vmatprep.subr.mxu0 0.0
    %920 = vmatpush1.msra.mxu0 0.0
    %921 = vmatprep.subr.mxu0 0.0
    %922 = vmatpush1.msra.mxu0 0.0
    %923 = vmatprep.subr.mxu0 0.0
    %924 = vmatpush1.msra.mxu0 0.0
    %925 = vmatprep.subr.mxu0 0.0
    %926 = vmatpush1.msra.mxu0 0.0
    %927 = vmatprep.subr.mxu0 0.0
    %928 = vmatpush1.msra.mxu0 0.0
    %929 = vmatprep.subr.mxu0 0.0
    %930 = vmatpush1.msra.mxu0 0.0
    %931 = vmatprep.subr.mxu0 0.0
    %932 = vmatpush1.msra.mxu0 0.0
    %933 = vmatprep.subr.mxu0 0.0
    %934 = vmatpush1.msra.mxu0 0.0
    %935 = vmatprep.subr.mxu0 0.0
    %936 = vmatpush1.msra.mxu0 0.0
    %937 = vmatprep.subr.mxu0 0.0
    %938 = vmatpush1.msra.mxu0 0.0
    %939 = vmatprep.subr.mxu0 0.0
    %940 = vmatpush1.msra.mxu0 0.0
    %941 = vmatprep.mubr.f32.mxu0 0.0
    %942 = vmatmul.mubr.f32.gmra.mrb[0].mxu0 0.0
    %v943 = vpop.f32.mrb[0].mxu0
    %v944 = vadd.f32 %v239, %v943
    %v945 = vpop.f32.mrb[0].mxu0
    %946 = vdwg.mxu0
    %v947 = vadd.f32 %v732, %v873
    %v948 = vxor.u32 %v947, 2147483648
    %v949 = vmul.f32 %v948, 1.442695
    %v950 = vpow.pop %v949
    %v951 = vadd.f32 %v950, 1.0
    %v952 = vrcp.pop %v951
    %v953 = vmul.f32 1.0, %v952
    %v954 = vadd.f32 %v734, %v875
    %v955 = vxor.u32 %v954, 2147483648
    %v956 = vmul.f32 %v955, 1.442695
    %v957 = vpow.pop %v956
    %v958 = vadd.f32 %v957, 1.0
    %v959 = vrcp.pop %v958
    %v960 = vmul.f32 1.0, %v959
    %v961 = vmul.f32 %v953, %v944
    %v962 = vadd.f32 %v803, %v961
    %v963 = vtanh.pop %v962
    %v964 = vsub.f32 1.0, %v960
    %v965 = vmul.f32 %v964, %v963
    %v966 = vmul.f32 %v960, 0.0
    %v967 = vadd.f32 %v965, %v966
    %v968 = vadd.f32 %v355, %v177
    %v969 = vadd.f32 %v357, %v181
    %v970 = vadd.f32 %v467, %v185
    %971 = vmatprep.subr.mxu0 %v28
    %972 = vmatpush1.msra.mxu0 %v27
    %973 = vmatprep.subr.mxu0 %v31
    %974 = vmatpush1.msra.mxu0 %v30
    %975 = vmatprep.subr.mxu0 %v34
    %976 = vmatpush1.msra.mxu0 %v33
    %977 = vmatprep.subr.mxu0 %v37
    %978 = vmatpush1.msra.mxu0 %v36
    %979 = vmatprep.subr.mxu0 %v40
    %980 = vmatpush1.msra.mxu0 %v39
    %981 = vmatprep.subr.mxu0 %v43
    %982 = vmatpush1.msra.mxu0 %v42
    %983 = vmatprep.subr.mxu0 %v46
    %984 = vmatpush1.msra.mxu0 %v45
    %985 = vmatprep.subr.mxu0 %v49
    %986 = vmatpush1.msra.mxu0 %v48
    %987 = vmatprep.subr.mxu0 %v52
    %988 = vmatpush1.msra.mxu0 %v51
    %989 = vmatprep.subr.mxu0 %v55
    %990 = vmatpush1.msra.mxu0 %v54
    %991 = vmatprep.subr.mxu0 %v58
    %992 = vmatpush1.msra.mxu0 %v57
    %993 = vmatprep.subr.mxu0 %v61
    %994 = vmatpush1.msra.mxu0 %v60
    %995 = vmatprep.subr.mxu0 %v64
    %996 = vmatpush1.msra.mxu0 %v63
    %997 = vmatprep.subr.mxu0 %v67
    %998 = vmatpush1.msra.mxu0 %v66
    %999 = vmatprep.subr.mxu0 %v70
    %1000 = vmatpush1.msra.mxu0 %v69
    %1001 = vmatprep.subr.mxu0 %v73
    %1002 = vmatpush1.msra.mxu0 %v72
    %1003 = vmatprep.subr.mxu0 0.0
    %1004 = vmatpush1.msra.mxu0 0.0
    %1005 = vmatprep.subr.mxu0 0.0
    %1006 = vmatpush1.msra.mxu0 0.0
    %1007 = vmatprep.subr.mxu0 0.0
    %1008 = vmatpush1.msra.mxu0 0.0
    %1009 = vmatprep.subr.mxu0 0.0
    %1010 = vmatpush1.msra.mxu0 0.0
    %1011 = vmatprep.subr.mxu0 0.0
    %1012 = vmatpush1.msra.mxu0 0.0
    %1013 = vmatprep.subr.mxu0 0.0
    %1014 = vmatpush1.msra.mxu0 0.0
    %1015 = vmatprep.subr.mxu0 0.0
    %1016 = vmatpush1.msra.mxu0 0.0
    %1017 = vmatprep.subr.mxu0 0.0
    %1018 = vmatpush1.msra.mxu0 0.0
    %1019 = vmatprep.subr.mxu0 0.0
    %1020 = vmatpush1.msra.mxu0 0.0
    %1021 = vmatprep.subr.mxu0 0.0
    %1022 = vmatpush1.msra.mxu0 0.0
    %1023 = vmatprep.subr.mxu0 0.0
    %1024 = vmatpush1.msra.mxu0 0.0
    %1025 = vmatprep.subr.mxu0 0.0
    %1026 = vmatpush1.msra.mxu0 0.0
    %1027 = vmatprep.subr.mxu0 0.0
    %1028 = vmatpush1.msra.mxu0 0.0
    %1029 = vmatprep.subr.mxu0 0.0
    %1030 = vmatpush1.msra.mxu0 0.0
    %1031 = vmatprep.subr.mxu0 0.0
    %1032 = vmatpush1.msra.mxu0 0.0
    %1033 = vmatprep.subr.mxu0 0.0
    %1034 = vmatpush1.msra.mxu0 0.0
    %1035 = vmatprep.mubr.f32.mxu0 0.0
    %1036 = vmatmul.mubr.f32.gmra.mrb[0].mxu0 %v664
    %v1037 = vpop.f32.mrb[0].mxu0
    %v1038 = vadd.f32 %v213, %v1037
    %v1039 = vpop.f32.mrb[0].mxu0
    %v1040 = vadd.f32 %v217, %v1039
    %1041 = vdwg.mxu0
    %1042 = vmatprep.subr.mxu0 0.0
    %1043 = vmatpush1.msra.mxu0 %v29
    %1044 = vmatprep.subr.mxu0 0.0
    %1045 = vmatpush1.msra.mxu0 %v32
    %1046 = vmatprep.subr.mxu0 0.0
    %1047 = vmatpush1.msra.mxu0 %v35
    %1048 = vmatprep.subr.mxu0 0.0
    %1049 = vmatpush1.msra.mxu0 %v38
    %1050 = vmatprep.subr.mxu0 0.0
    %1051 = vmatpush1.msra.mxu0 %v41
    %1052 = vmatprep.subr.mxu0 0.0
    %1053 = vmatpush1.msra.mxu0 %v44
    %1054 = vmatprep.subr.mxu0 0.0
    %1055 = vmatpush1.msra.mxu0 %v47
    %1056 = vmatprep.subr.mxu0 0.0
    %1057 = vmatpush1.msra.mxu0 %v50
    %1058 = vmatprep.subr.mxu0 0.0
    %1059 = vmatpush1.msra.mxu0 %v53
    %1060 = vmatprep.subr.mxu0 0.0
    %1061 = vmatpush1.msra.mxu0 %v56
    %1062 = vmatprep.subr.mxu0 0.0
    %1063 = vmatpush1.msra.mxu0 %v59
    %1064 = vmatprep.subr.mxu0 0.0
    %1065 = vmatpush1.msra.mxu0 %v62
    %1066 = vmatprep.subr.mxu0 0.0
    %1067 = vmatpush1.msra.mxu0 %v65
    %1068 = vmatprep.subr.mxu0 0.0
    %1069 = vmatpush1.msra.mxu0 %v68
    %1070 = vmatprep.subr.mxu0 0.0
    %1071 = vmatpush1.msra.mxu0 %v71
    %1072 = vmatprep.subr.mxu0 0.0
    %1073 = vmatpush1.msra.mxu0 %v74
    %1074 = vmatprep.subr.mxu0 0.0
    %1075 = vmatpush1.msra.mxu0 0.0
    %1076 = vmatprep.subr.mxu0 0.0
    %1077 = vmatpush1.msra.mxu0 0.0
    %1078 = vmatprep.subr.mxu0 0.0
    %1079 = vmatpush1.msra.mxu0 0.0
    %1080 = vmatprep.subr.mxu0 0.0
    %1081 = vmatpush1.msra.mxu0 0.0
    %1082 = vmatprep.subr.mxu0 0.0
    %1083 = vmatpush1.msra.mxu0 0.0
    %1084 = vmatprep.subr.mxu0 0.0
    %1085 = vmatpush1.msra.mxu0 0.0
    %1086 = vmatprep.subr.mxu0 0.0
    %1087 = vmatpush1.msra.mxu0 0.0
    %1088 = vmatprep.subr.mxu0 0.0
    %1089 = vmatpush1.msra.mxu0 0.0
    %1090 = vmatprep.subr.mxu0 0.0
    %1091 = vmatpush1.msra.mxu0 0.0
    %1092 = vmatprep.subr.mxu0 0.0
    %1093 = vmatpush1.msra.mxu0 0.0
    %1094 = vmatprep.subr.mxu0 0.0
    %1095 = vmatpush1.msra.mxu0 0.0
    %1096 = vmatprep.subr.mxu0 0.0
    %1097 = vmatpush1.msra.mxu0 0.0
    %1098 = vmatprep.subr.mxu0 0.0
    %1099 = vmatpush1.msra.mxu0 0.0
    %1100 = vmatprep.subr.mxu0 0.0
    %1101 = vmatpush1.msra.mxu0 0.0
    %1102 = vmatprep.subr.mxu0 0.0
    %1103 = vmatpush1.msra.mxu0 0.0
    %1104 = vmatprep.subr.mxu0 0.0
    %1105 = vmatpush1.msra.mxu0 0.0
    %1106 = vmatprep.mubr.f32.mxu0 0.0
    %1107 = vmatmul.mubr.f32.gmra.mrb[0].mxu0 %v664
    %v1108 = vpop.f32.mrb[0].mxu0
    %v1109 = vadd.f32 %v221, %v1108
    %v1110 = vpop.f32.mrb[0].mxu0
    %1111 = vdwg.mxu0
    %v1112 = vadd.f32 %v968, %v1038
    %v1113 = vxor.u32 %v1112, 2147483648
    %v1114 = vmul.f32 %v1113, 1.442695
    %v1115 = vpow.pop %v1114
    %v1116 = vadd.f32 %v1115, 1.0
    %v1117 = vrcp.pop %v1116
    %v1118 = vmul.f32 1.0, %v1117
    %v1119 = vadd.f32 %v969, %v1040
    %v1120 = vxor.u32 %v1119, 2147483648
    %v1121 = vmul.f32 %v1120, 1.442695
    %v1122 = vpow.pop %v1121
    %v1123 = vadd.f32 %v1122, 1.0
    %v1124 = vrcp.pop %v1123
    %v1125 = vmul.f32 1.0, %v1124
    %v1126 = vmul.f32 %v1118, %v1109
    %v1127 = vadd.f32 %v970, %v1126
    %v1128 = vtanh.pop %v1127
    %v1129 = vsub.f32 1.0, %v1125
    %v1130 = vmul.f32 %v1129, %v1128
    %v1131 = vmul.f32 %v1125, %v664
    %v1132 = vadd.f32 %v1130, %v1131
    %1133 = vmatprep.subr.mxu0 %v125
    %1134 = vmatpush1.msra.mxu0 %v124
    %1135 = vmatprep.subr.mxu0 %v128
    %1136 = vmatpush1.msra.mxu0 %v127
    %1137 = vmatprep.subr.mxu0 %v131
    %1138 = vmatpush1.msra.mxu0 %v130
    %1139 = vmatprep.subr.mxu0 %v134
    %1140 = vmatpush1.msra.mxu0 %v133
    %1141 = vmatprep.subr.mxu0 %v137
    %1142 = vmatpush1.msra.mxu0 %v136
    %1143 = vmatprep.subr.mxu0 %v140
    %1144 = vmatpush1.msra.mxu0 %v139
    %1145 = vmatprep.subr.mxu0 %v143
    %1146 = vmatpush1.msra.mxu0 %v142
    %1147 = vmatprep.subr.mxu0 %v146
    %1148 = vmatpush1.msra.mxu0 %v145
    %1149 = vmatprep.subr.mxu0 %v149
    %1150 = vmatpush1.msra.mxu0 %v148
    %1151 = vmatprep.subr.mxu0 %v152
    %1152 = vmatpush1.msra.mxu0 %v151
    %1153 = vmatprep.subr.mxu0 %v155
    %1154 = vmatpush1.msra.mxu0 %v154
    %1155 = vmatprep.subr.mxu0 %v158
    %1156 = vmatpush1.msra.mxu0 %v157
    %1157 = vmatprep.subr.mxu0 %v161
    %1158 = vmatpush1.msra.mxu0 %v160
    %1159 = vmatprep.subr.mxu0 %v164
    %1160 = vmatpush1.msra.mxu0 %v163
    %1161 = vmatprep.subr.mxu0 %v167
    %1162 = vmatpush1.msra.mxu0 %v166
    %1163 = vmatprep.subr.mxu0 %v170
    %1164 = vmatpush1.msra.mxu0 %v169
    %1165 = vmatprep.subr.mxu0 0.0
    %1166 = vmatpush1.msra.mxu0 0.0
    %1167 = vmatprep.subr.mxu0 0.0
    %1168 = vmatpush1.msra.mxu0 0.0
    %1169 = vmatprep.subr.mxu0 0.0
    %1170 = vmatpush1.msra.mxu0 0.0
    %1171 = vmatprep.subr.mxu0 0.0
    %1172 = vmatpush1.msra.mxu0 0.0
    %1173 = vmatprep.subr.mxu0 0.0
    %1174 = vmatpush1.msra.mxu0 0.0
    %1175 = vmatprep.subr.mxu0 0.0
    %1176 = vmatpush1.msra.mxu0 0.0
    %1177 = vmatprep.subr.mxu0 0.0
    %1178 = vmatpush1.msra.mxu0 0.0
    %1179 = vmatprep.subr.mxu0 0.0
    %1180 = vmatpush1.msra.mxu0 0.0
    %1181 = vmatprep.subr.mxu0 0.0
    %1182 = vmatpush1.msra.mxu0 0.0
    %1183 = vmatprep.subr.mxu0 0.0
    %1184 = vmatpush1.msra.mxu0 0.0
    %1185 = vmatprep.subr.mxu0 0.0
    %1186 = vmatpush1.msra.mxu0 0.0
    %1187 = vmatprep.subr.mxu0 0.0
    %1188 = vmatpush1.msra.mxu0 0.0
    %1189 = vmatprep.subr.mxu0 0.0
    %1190 = vmatpush1.msra.mxu0 0.0
    %1191 = vmatprep.subr.mxu0 0.0
    %1192 = vmatpush1.msra.mxu0 0.0
    %1193 = vmatprep.subr.mxu0 0.0
    %1194 = vmatpush1.msra.mxu0 0.0
    %1195 = vmatprep.subr.mxu0 0.0
    %1196 = vmatpush1.msra.mxu0 0.0
    %1197 = vmatprep.mubr.f32.mxu0 0.0
    %1198 = vmatmul.mubr.f32.gmra.mrb[0].mxu0 %v1132
    %v1199 = vpop.f32.mrb[0].mxu0
    %v1200 = vadd.f32 %v195, %v1199
    %v1201 = vpop.f32.mrb[0].mxu0
    %v1202 = vadd.f32 %v199, %v1201
    %1203 = vdwg.mxu0
    %1204 = vmatprep.subr.mxu0 0.0
    %1205 = vmatpush1.msra.mxu0 %v126
    %1206 = vmatprep.subr.mxu0 0.0
    %1207 = vmatpush1.msra.mxu0 %v129
    %1208 = vmatprep.subr.mxu0 0.0
    %1209 = vmatpush1.msra.mxu0 %v132
    %1210 = vmatprep.subr.mxu0 0.0
    %1211 = vmatpush1.msra.mxu0 %v135
    %1212 = vmatprep.subr.mxu0 0.0
    %1213 = vmatpush1.msra.mxu0 %v138
    %1214 = vmatprep.subr.mxu0 0.0
    %1215 = vmatpush1.msra.mxu0 %v141
    %1216 = vmatprep.subr.mxu0 0.0
    %1217 = vmatpush1.msra.mxu0 %v144
    %1218 = vmatprep.subr.mxu0 0.0
    %1219 = vmatpush1.msra.mxu0 %v147
    %1220 = vmatprep.subr.mxu0 0.0
    %1221 = vmatpush1.msra.mxu0 %v150
    %1222 = vmatprep.subr.mxu0 0.0
    %1223 = vmatpush1.msra.mxu0 %v153
    %1224 = vmatprep.subr.mxu0 0.0
    %1225 = vmatpush1.msra.mxu0 %v156
    %1226 = vmatprep.subr.mxu0 0.0
    %1227 = vmatpush1.msra.mxu0 %v159
    %1228 = vmatprep.subr.mxu0 0.0
    %1229 = vmatpush1.msra.mxu0 %v162
    %1230 = vmatprep.subr.mxu0 0.0
    %1231 = vmatpush1.msra.mxu0 %v165
    %1232 = vmatprep.subr.mxu0 0.0
    %1233 = vmatpush1.msra.mxu0 %v168
    %1234 = vmatprep.subr.mxu0 0.0
    %1235 = vmatpush1.msra.mxu0 %v171
    %1236 = vmatprep.subr.mxu0 0.0
    %1237 = vmatpush1.msra.mxu0 0.0
    %1238 = vmatprep.subr.mxu0 0.0
    %1239 = vmatpush1.msra.mxu0 0.0
    %1240 = vmatprep.subr.mxu0 0.0
    %1241 = vmatpush1.msra.mxu0 0.0
    %1242 = vmatprep.subr.mxu0 0.0
    %1243 = vmatpush1.msra.mxu0 0.0
    %1244 = vmatprep.subr.mxu0 0.0
    %1245 = vmatpush1.msra.mxu0 0.0
    %1246 = vmatprep.subr.mxu0 0.0
    %1247 = vmatpush1.msra.mxu0 0.0
    %1248 = vmatprep.subr.mxu0 0.0
    %1249 = vmatpush1.msra.mxu0 0.0
    %1250 = vmatprep.subr.mxu0 0.0
    %1251 = vmatpush1.msra.mxu0 0.0
    %1252 = vmatprep.subr.mxu0 0.0
    %1253 = vmatpush1.msra.mxu0 0.0
    %1254 = vmatprep.subr.mxu0 0.0
    %1255 = vmatpush1.msra.mxu0 0.0
    %1256 = vmatprep.subr.mxu0 0.0
    %1257 = vmatpush1.msra.mxu0 0.0
    %1258 = vmatprep.subr.mxu0 0.0
    %1259 = vmatpush1.msra.mxu0 0.0
    %1260 = vmatprep.subr.mxu0 0.0
    %1261 = vmatpush1.msra.mxu0 0.0
    %1262 = vmatprep.subr.mxu0 0.0
    %1263 = vmatpush1.msra.mxu0 0.0
    %1264 = vmatprep.subr.mxu0 0.0
    %1265 = vmatpush1.msra.mxu0 0.0
    %1266 = vmatprep.subr.mxu0 0.0
    %1267 = vmatpush1.msra.mxu0 0.0
    %1268 = vmatprep.mubr.f32.mxu0 0.0
    %1269 = vmatmul.mubr.f32.gmra.mrb[0].mxu0 %v1132
    %v1270 = vpop.f32.mrb[0].mxu0
    %v1271 = vadd.f32 %v203, %v1270
    %v1272 = vpop.f32.mrb[0].mxu0
    %1273 = vdwg.mxu0
    %1274 = vmatprep.subr.mxu0 %v77
    %1275 = vmatpush1.msra.mxu0 %v76
    %1276 = vmatprep.subr.mxu0 %v80
    %1277 = vmatpush1.msra.mxu0 %v79
    %1278 = vmatprep.subr.mxu0 %v83
    %1279 = vmatpush1.msra.mxu0 %v82
    %1280 = vmatprep.subr.mxu0 %v86
    %1281 = vmatpush1.msra.mxu0 %v85
    %1282 = vmatprep.subr.mxu0 %v89
    %1283 = vmatpush1.msra.mxu0 %v88
    %1284 = vmatprep.subr.mxu0 %v92
    %1285 = vmatpush1.msra.mxu0 %v91
    %1286 = vmatprep.subr.mxu0 %v95
    %1287 = vmatpush1.msra.mxu0 %v94
    %1288 = vmatprep.subr.mxu0 %v98
    %1289 = vmatpush1.msra.mxu0 %v97
    %1290 = vmatprep.subr.mxu0 %v101
    %1291 = vmatpush1.msra.mxu0 %v100
    %1292 = vmatprep.subr.mxu0 %v104
    %1293 = vmatpush1.msra.mxu0 %v103
    %1294 = vmatprep.subr.mxu0 %v107
    %1295 = vmatpush1.msra.mxu0 %v106
    %1296 = vmatprep.subr.mxu0 %v110
    %1297 = vmatpush1.msra.mxu0 %v109
    %1298 = vmatprep.subr.mxu0 %v113
    %1299 = vmatpush1.msra.mxu0 %v112
    %1300 = vmatprep.subr.mxu0 %v116
    %1301 = vmatpush1.msra.mxu0 %v115
    %1302 = vmatprep.subr.mxu0 %v119
    %1303 = vmatpush1.msra.mxu0 %v118
    %1304 = vmatprep.subr.mxu0 %v122
    %1305 = vmatpush1.msra.mxu0 %v121
    %1306 = vmatprep.subr.mxu0 0.0
    %1307 = vmatpush1.msra.mxu0 0.0
    %1308 = vmatprep.subr.mxu0 0.0
    %1309 = vmatpush1.msra.mxu0 0.0
    %1310 = vmatprep.subr.mxu0 0.0
    %1311 = vmatpush1.msra.mxu0 0.0
    %1312 = vmatprep.subr.mxu0 0.0
    %1313 = vmatpush1.msra.mxu0 0.0
    %1314 = vmatprep.subr.mxu0 0.0
    %1315 = vmatpush1.msra.mxu0 0.0
    %1316 = vmatprep.subr.mxu0 0.0
    %1317 = vmatpush1.msra.mxu0 0.0
    %1318 = vmatprep.subr.mxu0 0.0
    %1319 = vmatpush1.msra.mxu0 0.0
    %1320 = vmatprep.subr.mxu0 0.0
    %1321 = vmatpush1.msra.mxu0 0.0
    %1322 = vmatprep.subr.mxu0 0.0
    %1323 = vmatpush1.msra.mxu0 0.0
    %1324 = vmatprep.subr.mxu0 0.0
    %1325 = vmatpush1.msra.mxu0 0.0
    %1326 = vmatprep.subr.mxu0 0.0
    %1327 = vmatpush1.msra.mxu0 0.0
    %1328 = vmatprep.subr.mxu0 0.0
    %1329 = vmatpush1.msra.mxu0 0.0
    %1330 = vmatprep.subr.mxu0 0.0
    %1331 = vmatpush1.msra.mxu0 0.0
    %1332 = vmatprep.subr.mxu0 0.0
    %1333 = vmatpush1.msra.mxu0 0.0
    %1334 = vmatprep.subr.mxu0 0.0
    %1335 = vmatpush1.msra.mxu0 0.0
    %1336 = vmatprep.subr.mxu0 0.0
    %1337 = vmatpush1.msra.mxu0 0.0
    %1338 = vmatprep.mubr.f32.mxu0 0.0
    %1339 = vmatmul.mubr.f32.gmra.mrb[0].mxu0 %v967
    %v1340 = vpop.f32.mrb[0].mxu0
    %v1341 = vadd.f32 %v231, %v1340
    %v1342 = vpop.f32.mrb[0].mxu0
    %v1343 = vadd.f32 %v235, %v1342
    %1344 = vdwg.mxu0
    %1345 = vmatprep.subr.mxu0 0.0
    %1346 = vmatpush1.msra.mxu0 %v78
    %1347 = vmatprep.subr.mxu0 0.0
    %1348 = vmatpush1.msra.mxu0 %v81
    %1349 = vmatprep.subr.mxu0 0.0
    %1350 = vmatpush1.msra.mxu0 %v84
    %1351 = vmatprep.subr.mxu0 0.0
    %1352 = vmatpush1.msra.mxu0 %v87
    %1353 = vmatprep.subr.mxu0 0.0
    %1354 = vmatpush1.msra.mxu0 %v90
    %1355 = vmatprep.subr.mxu0 0.0
    %1356 = vmatpush1.msra.mxu0 %v93
    %1357 = vmatprep.subr.mxu0 0.0
    %1358 = vmatpush1.msra.mxu0 %v96
    %1359 = vmatprep.subr.mxu0 0.0
    %1360 = vmatpush1.msra.mxu0 %v99
    %1361 = vmatprep.subr.mxu0 0.0
    %1362 = vmatpush1.msra.mxu0 %v102
    %1363 = vmatprep.subr.mxu0 0.0
    %1364 = vmatpush1.msra.mxu0 %v105
    %1365 = vmatprep.subr.mxu0 0.0
    %1366 = vmatpush1.msra.mxu0 %v108
    %1367 = vmatprep.subr.mxu0 0.0
    %1368 = vmatpush1.msra.mxu0 %v111
    %1369 = vmatprep.subr.mxu0 0.0
    %1370 = vmatpush1.msra.mxu0 %v114
    %1371 = vmatprep.subr.mxu0 0.0
    %1372 = vmatpush1.msra.mxu0 %v117
    %1373 = vmatprep.subr.mxu0 0.0
    %1374 = vmatpush1.msra.mxu0 %v120
    %1375 = vmatprep.subr.mxu0 0.0
    %1376 = vmatpush1.msra.mxu0 %v123
    %1377 = vmatprep.subr.mxu0 0.0
    %1378 = vmatpush1.msra.mxu0 0.0
    %1379 = vmatprep.subr.mxu0 0.0
    %1380 = vmatpush1.msra.mxu0 0.0
    %1381 = vmatprep.subr.mxu0 0.0
    %1382 = vmatpush1.msra.mxu0 0.0
    %1383 = vmatprep.subr.mxu0 0.0
    %1384 = vmatpush1.msra.mxu0 0.0
    %1385 = vmatprep.subr.mxu0 0.0
    %1386 = vmatpush1.msra.mxu0 0.0
    %1387 = vmatprep.subr.mxu0 0.0
    %1388 = vmatpush1.msra.mxu0 0.0
    %1389 = vmatprep.subr.mxu0 0.0
    %1390 = vmatpush1.msra.mxu0 0.0
    %1391 = vmatprep.subr.mxu0 0.0
    %1392 = vmatpush1.msra.mxu0 0.0
    %1393 = vmatprep.subr.mxu0 0.0
    %1394 = vmatpush1.msra.mxu0 0.0
    %1395 = vmatprep.subr.mxu0 0.0
    %1396 = vmatpush1.msra.mxu0 0.0
    %1397 = vmatprep.subr.mxu0 0.0
    %1398 = vmatpush1.msra.mxu0 0.0
    %1399 = vmatprep.subr.mxu0 0.0
    %1400 = vmatpush1.msra.mxu0 0.0
    %1401 = vmatprep.subr.mxu0 0.0
    %1402 = vmatpush1.msra.mxu0 0.0
    %1403 = vmatprep.subr.mxu0 0.0
    %1404 = vmatpush1.msra.mxu0 0.0
    %1405 = vmatprep.subr.mxu0 0.0
    %1406 = vmatpush1.msra.mxu0 0.0
    %1407 = vmatprep.subr.mxu0 0.0
    %1408 = vmatpush1.msra.mxu0 0.0
    %1409 = vmatprep.mubr.f32.mxu0 0.0
    %1410 = vmatmul.mubr.f32.gmra.mrb[0].mxu0 %v967
    %v1411 = vpop.f32.mrb[0].mxu0
    %v1412 = vadd.f32 %v239, %v1411
    %v1413 = vpop.f32.mrb[0].mxu0
    %1414 = vdwg.mxu0
    %v1415 = vadd.f32 %v1200, %v1341
    %v1416 = vxor.u32 %v1415, 2147483648
    %v1417 = vmul.f32 %v1416, 1.442695
    %v1418 = vpow.pop %v1417
    %v1419 = vadd.f32 %v1418, 1.0
    %v1420 = vrcp.pop %v1419
    %v1421 = vmul.f32 1.0, %v1420
    %v1422 = vadd.f32 %v1202, %v1343
    %v1423 = vxor.u32 %v1422, 2147483648
    %v1424 = vmul.f32 %v1423, 1.442695
    %v1425 = vpow.pop %v1424
    %v1426 = vadd.f32 %v1425, 1.0
    %v1427 = vrcp.pop %v1426
    %v1428 = vmul.f32 1.0, %v1427
    %v1429 = vmul.f32 %v1421, %v1412
    %v1430 = vadd.f32 %v1271, %v1429
    %v1431 = vtanh.pop %v1430
    %v1432 = vsub.f32 1.0, %v1428
    %v1433 = vmul.f32 %v1432, %v1431
    %v1434 = vmul.f32 %v1428, %v967
    %v1435 = vadd.f32 %v1433, %v1434
    %v1436 = vadd.f32 %v361, %v177
    %v1437 = vadd.f32 %v363, %v181
    %v1438 = vadd.f32 %v472, %v185
    %1439 = vmatprep.subr.mxu0 %v28
    %1440 = vmatpush1.msra.mxu0 %v27
    %1441 = vmatprep.subr.mxu0 %v31
    %1442 = vmatpush1.msra.mxu0 %v30
    %1443 = vmatprep.subr.mxu0 %v34
    %1444 = vmatpush1.msra.mxu0 %v33
    %1445 = vmatprep.subr.mxu0 %v37
    %1446 = vmatpush1.msra.mxu0 %v36
    %1447 = vmatprep.subr.mxu0 %v40
    %1448 = vmatpush1.msra.mxu0 %v39
    %1449 = vmatprep.subr.mxu0 %v43
    %1450 = vmatpush1.msra.mxu0 %v42
    %1451 = vmatprep.subr.mxu0 %v46
    %1452 = vmatpush1.msra.mxu0 %v45
    %1453 = vmatprep.subr.mxu0 %v49
    %1454 = vmatpush1.msra.mxu0 %v48
    %1455 = vmatprep.subr.mxu0 %v52
    %1456 = vmatpush1.msra.mxu0 %v51
    %1457 = vmatprep.subr.mxu0 %v55
    %1458 = vmatpush1.msra.mxu0 %v54
    %1459 = vmatprep.subr.mxu0 %v58
    %1460 = vmatpush1.msra.mxu0 %v57
    %1461 = vmatprep.subr.mxu0 %v61
    %1462 = vmatpush1.msra.mxu0 %v60
    %1463 = vmatprep.subr.mxu0 %v64
    %1464 = vmatpush1.msra.mxu0 %v63
    %1465 = vmatprep.subr.mxu0 %v67
    %1466 = vmatpush1.msra.mxu0 %v66
    %1467 = vmatprep.subr.mxu0 %v70
    %1468 = vmatpush1.msra.mxu0 %v69
    %1469 = vmatprep.subr.mxu0 %v73
    %1470 = vmatpush1.msra.mxu0 %v72
    %1471 = vmatprep.subr.mxu0 0.0
    %1472 = vmatpush1.msra.mxu0 0.0
    %1473 = vmatprep.subr.mxu0 0.0
    %1474 = vmatpush1.msra.mxu0 0.0
    %1475 = vmatprep.subr.mxu0 0.0
    %1476 = vmatpush1.msra.mxu0 0.0
    %1477 = vmatprep.subr.mxu0 0.0
    %1478 = vmatpush1.msra.mxu0 0.0
    %1479 = vmatprep.subr.mxu0 0.0
    %1480 = vmatpush1.msra.mxu0 0.0
    %1481 = vmatprep.subr.mxu0 0.0
    %1482 = vmatpush1.msra.mxu0 0.0
    %1483 = vmatprep.subr.mxu0 0.0
    %1484 = vmatpush1.msra.mxu0 0.0
    %1485 = vmatprep.subr.mxu0 0.0
    %1486 = vmatpush1.msra.mxu0 0.0
    %1487 = vmatprep.subr.mxu0 0.0
    %1488 = vmatpush1.msra.mxu0 0.0
    %1489 = vmatprep.subr.mxu0 0.0
    %1490 = vmatpush1.msra.mxu0 0.0
    %1491 = vmatprep.subr.mxu0 0.0
    %1492 = vmatpush1.msra.mxu0 0.0
    %1493 = vmatprep.subr.mxu0 0.0
    %1494 = vmatpush1.msra.mxu0 0.0
    %1495 = vmatprep.subr.mxu0 0.0
    %1496 = vmatpush1.msra.mxu0 0.0
    %1497 = vmatprep.subr.mxu0 0.0
    %1498 = vmatpush1.msra.mxu0 0.0
    %1499 = vmatprep.subr.mxu0 0.0
    %1500 = vmatpush1.msra.mxu0 0.0
    %1501 = vmatprep.subr.mxu0 0.0
    %1502 = vmatpush1.msra.mxu0 0.0
    %1503 = vmatprep.mubr.f32.mxu0 0.0
    %1504 = vmatmul.mubr.f32.gmra.mrb[0].mxu0 %v1132
    %v1505 = vpop.f32.mrb[0].mxu0
    %v1506 = vadd.f32 %v213, %v1505
    %v1507 = vpop.f32.mrb[0].mxu0
    %v1508 = vadd.f32 %v217, %v1507
    %1509 = vdwg.mxu0
    %1510 = vmatprep.subr.mxu0 0.0
    %1511 = vmatpush1.msra.mxu0 %v29
    %1512 = vmatprep.subr.mxu0 0.0
    %1513 = vmatpush1.msra.mxu0 %v32
    %1514 = vmatprep.subr.mxu0 0.0
    %1515 = vmatpush1.msra.mxu0 %v35
    %1516 = vmatprep.subr.mxu0 0.0
    %1517 = vmatpush1.msra.mxu0 %v38
    %1518 = vmatprep.subr.mxu0 0.0
    %1519 = vmatpush1.msra.mxu0 %v41
    %1520 = vmatprep.subr.mxu0 0.0
    %1521 = vmatpush1.msra.mxu0 %v44
    %1522 = vmatprep.subr.mxu0 0.0
    %1523 = vmatpush1.msra.mxu0 %v47
    %1524 = vmatprep.subr.mxu0 0.0
    %1525 = vmatpush1.msra.mxu0 %v50
    %1526 = vmatprep.subr.mxu0 0.0
    %1527 = vmatpush1.msra.mxu0 %v53
    %1528 = vmatprep.subr.mxu0 0.0
    %1529 = vmatpush1.msra.mxu0 %v56
    %1530 = vmatprep.subr.mxu0 0.0
    %1531 = vmatpush1.msra.mxu0 %v59
    %1532 = vmatprep.subr.mxu0 0.0
    %1533 = vmatpush1.msra.mxu0 %v62
    %1534 = vmatprep.subr.mxu0 0.0
    %1535 = vmatpush1.msra.mxu0 %v65
    %1536 = vmatprep.subr.mxu0 0.0
    %1537 = vmatpush1.msra.mxu0 %v68
    %1538 = vmatprep.subr.mxu0 0.0
    %1539 = vmatpush1.msra.mxu0 %v71
    %1540 = vmatprep.subr.mxu0 0.0
    %1541 = vmatpush1.msra.mxu0 %v74
    %1542 = vmatprep.subr.mxu0 0.0
    %1543 = vmatpush1.msra.mxu0 0.0
    %1544 = vmatprep.subr.mxu0 0.0
    %1545 = vmatpush1.msra.mxu0 0.0
    %1546 = vmatprep.subr.mxu0 0.0
    %1547 = vmatpush1.msra.mxu0 0.0
    %1548 = vmatprep.subr.mxu0 0.0
    %1549 = vmatpush1.msra.mxu0 0.0
    %1550 = vmatprep.subr.mxu0 0.0
    %1551 = vmatpush1.msra.mxu0 0.0
    %1552 = vmatprep.subr.mxu0 0.0
    %1553 = vmatpush1.msra.mxu0 0.0
    %1554 = vmatprep.subr.mxu0 0.0
    %1555 = vmatpush1.msra.mxu0 0.0
    %1556 = vmatprep.subr.mxu0 0.0
    %1557 = vmatpush1.msra.mxu0 0.0
    %1558 = vmatprep.subr.mxu0 0.0
    %1559 = vmatpush1.msra.mxu0 0.0
    %1560 = vmatprep.subr.mxu0 0.0
    %1561 = vmatpush1.msra.mxu0 0.0
    %1562 = vmatprep.subr.mxu0 0.0
    %1563 = vmatpush1.msra.mxu0 0.0
    %1564 = vmatprep.subr.mxu0 0.0
    %1565 = vmatpush1.msra.mxu0 0.0
    %1566 = vmatprep.subr.mxu0 0.0
    %1567 = vmatpush1.msra.mxu0 0.0
    %1568 = vmatprep.subr.mxu0 0.0
    %1569 = vmatpush1.msra.mxu0 0.0
    %1570 = vmatprep.subr.mxu0 0.0
    %1571 = vmatpush1.msra.mxu0 0.0
    %1572 = vmatprep.subr.mxu0 0.0
    %1573 = vmatpush1.msra.mxu0 0.0
    %1574 = vmatprep.mubr.f32.mxu0 0.0
    %1575 = vmatmul.mubr.f32.gmra.mrb[0].mxu0 %v1132
    %v1576 = vpop.f32.mrb[0].mxu0
    %v1577 = vadd.f32 %v221, %v1576
    %v1578 = vpop.f32.mrb[0].mxu0
    %1579 = vdwg.mxu0
    %v1580 = vadd.f32 %v1436, %v1506
    %v1581 = vxor.u32 %v1580, 2147483648
    %v1582 = vmul.f32 %v1581, 1.442695
    %v1583 = vpow.pop %v1582
    %v1584 = vadd.f32 %v1583, 1.0
    %v1585 = vrcp.pop %v1584
    %v1586 = vmul.f32 1.0, %v1585
    %v1587 = vadd.f32 %v1437, %v1508
    %v1588 = vxor.u32 %v1587, 2147483648
    %v1589 = vmul.f32 %v1588, 1.442695
    %v1590 = vpow.pop %v1589
    %v1591 = vadd.f32 %v1590, 1.0
    %v1592 = vrcp.pop %v1591
    %v1593 = vmul.f32 1.0, %v1592
    %v1594 = vmul.f32 %v1586, %v1577
    %v1595 = vadd.f32 %v1438, %v1594
    %v1596 = vtanh.pop %v1595
    %v1597 = vsub.f32 1.0, %v1593
    %v1598 = vmul.f32 %v1597, %v1596
    %v1599 = vmul.f32 %v1593, %v1132
    %v1600 = vadd.f32 %v1598, %v1599
    %1601 = vmatprep.subr.mxu0 %v125
    %1602 = vmatpush1.msra.mxu0 %v124
    %1603 = vmatprep.subr.mxu0 %v128
    %1604 = vmatpush1.msra.mxu0 %v127
    %1605 = vmatprep.subr.mxu0 %v131
    %1606 = vmatpush1.msra.mxu0 %v130
    %1607 = vmatprep.subr.mxu0 %v134
    %1608 = vmatpush1.msra.mxu0 %v133
    %1609 = vmatprep.subr.mxu0 %v137
    %1610 = vmatpush1.msra.mxu0 %v136
    %1611 = vmatprep.subr.mxu0 %v140
    %1612 = vmatpush1.msra.mxu0 %v139
    %1613 = vmatprep.subr.mxu0 %v143
    %1614 = vmatpush1.msra.mxu0 %v142
    %1615 = vmatprep.subr.mxu0 %v146
    %1616 = vmatpush1.msra.mxu0 %v145
    %1617 = vmatprep.subr.mxu0 %v149
    %1618 = vmatpush1.msra.mxu0 %v148
    %1619 = vmatprep.subr.mxu0 %v152
    %1620 = vmatpush1.msra.mxu0 %v151
    %1621 = vmatprep.subr.mxu0 %v155
    %1622 = vmatpush1.msra.mxu0 %v154
    %1623 = vmatprep.subr.mxu0 %v158
    %1624 = vmatpush1.msra.mxu0 %v157
    %1625 = vmatprep.subr.mxu0 %v161
    %1626 = vmatpush1.msra.mxu0 %v160
    %1627 = vmatprep.subr.mxu0 %v164
    %1628 = vmatpush1.msra.mxu0 %v163
    %1629 = vmatprep.subr.mxu0 %v167
    %1630 = vmatpush1.msra.mxu0 %v166
    %1631 = vmatprep.subr.mxu0 %v170
    %1632 = vmatpush1.msra.mxu0 %v169
    %1633 = vmatprep.subr.mxu0 0.0
    %1634 = vmatpush1.msra.mxu0 0.0
    %1635 = vmatprep.subr.mxu0 0.0
    %1636 = vmatpush1.msra.mxu0 0.0
    %1637 = vmatprep.subr.mxu0 0.0
    %1638 = vmatpush1.msra.mxu0 0.0
    %1639 = vmatprep.subr.mxu0 0.0
    %1640 = vmatpush1.msra.mxu0 0.0
    %1641 = vmatprep.subr.mxu0 0.0
    %1642 = vmatpush1.msra.mxu0 0.0
    %1643 = vmatprep.subr.mxu0 0.0
    %1644 = vmatpush1.msra.mxu0 0.0
    %1645 = vmatprep.subr.mxu0 0.0
    %1646 = vmatpush1.msra.mxu0 0.0
    %1647 = vmatprep.subr.mxu0 0.0
    %1648 = vmatpush1.msra.mxu0 0.0
    %1649 = vmatprep.subr.mxu0 0.0
    %1650 = vmatpush1.msra.mxu0 0.0
    %1651 = vmatprep.subr.mxu0 0.0
    %1652 = vmatpush1.msra.mxu0 0.0
    %1653 = vmatprep.subr.mxu0 0.0
    %1654 = vmatpush1.msra.mxu0 0.0
    %1655 = vmatprep.subr.mxu0 0.0
    %1656 = vmatpush1.msra.mxu0 0.0
    %1657 = vmatprep.subr.mxu0 0.0
    %1658 = vmatpush1.msra.mxu0 0.0
    %1659 = vmatprep.subr.mxu0 0.0
    %1660 = vmatpush1.msra.mxu0 0.0
    %1661 = vmatprep.subr.mxu0 0.0
    %1662 = vmatpush1.msra.mxu0 0.0
    %1663 = vmatprep.subr.mxu0 0.0
    %1664 = vmatpush1.msra.mxu0 0.0
    %1665 = vmatprep.mubr.f32.mxu0 0.0
    %1666 = vmatmul.mubr.f32.gmra.mrb[0].mxu0 %v1600
    %v1667 = vpop.f32.mrb[0].mxu0
    %v1668 = vadd.f32 %v195, %v1667
    %v1669 = vpop.f32.mrb[0].mxu0
    %v1670 = vadd.f32 %v199, %v1669
    %1671 = vdwg.mxu0
    %1672 = vmatprep.subr.mxu0 0.0
    %1673 = vmatpush1.msra.mxu0 %v126
    %1674 = vmatprep.subr.mxu0 0.0
    %1675 = vmatpush1.msra.mxu0 %v129
    %1676 = vmatprep.subr.mxu0 0.0
    %1677 = vmatpush1.msra.mxu0 %v132
    %1678 = vmatprep.subr.mxu0 0.0
    %1679 = vmatpush1.msra.mxu0 %v135
    %1680 = vmatprep.subr.mxu0 0.0
    %1681 = vmatpush1.msra.mxu0 %v138
    %1682 = vmatprep.subr.mxu0 0.0
    %1683 = vmatpush1.msra.mxu0 %v141
    %1684 = vmatprep.subr.mxu0 0.0
    %1685 = vmatpush1.msra.mxu0 %v144
    %1686 = vmatprep.subr.mxu0 0.0
    %1687 = vmatpush1.msra.mxu0 %v147
    %1688 = vmatprep.subr.mxu0 0.0
    %1689 = vmatpush1.msra.mxu0 %v150
    %1690 = vmatprep.subr.mxu0 0.0
    %1691 = vmatpush1.msra.mxu0 %v153
    %1692 = vmatprep.subr.mxu0 0.0
    %1693 = vmatpush1.msra.mxu0 %v156
    %1694 = vmatprep.subr.mxu0 0.0
    %1695 = vmatpush1.msra.mxu0 %v159
    %1696 = vmatprep.subr.mxu0 0.0
    %1697 = vmatpush1.msra.mxu0 %v162
    %1698 = vmatprep.subr.mxu0 0.0
    %1699 = vmatpush1.msra.mxu0 %v165
    %1700 = vmatprep.subr.mxu0 0.0
    %1701 = vmatpush1.msra.mxu0 %v168
    %1702 = vmatprep.subr.mxu0 0.0
    %1703 = vmatpush1.msra.mxu0 %v171
    %1704 = vmatprep.subr.mxu0 0.0
    %1705 = vmatpush1.msra.mxu0 0.0
    %1706 = vmatprep.subr.mxu0 0.0
    %1707 = vmatpush1.msra.mxu0 0.0
    %1708 = vmatprep.subr.mxu0 0.0
    %1709 = vmatpush1.msra.mxu0 0.0
    %1710 = vmatprep.subr.mxu0 0.0
    %1711 = vmatpush1.msra.mxu0 0.0
    %1712 = vmatprep.subr.mxu0 0.0
    %1713 = vmatpush1.msra.mxu0 0.0
    %1714 = vmatprep.subr.mxu0 0.0
    %1715 = vmatpush1.msra.mxu0 0.0
    %1716 = vmatprep.subr.mxu0 0.0
    %1717 = vmatpush1.msra.mxu0 0.0
    %1718 = vmatprep.subr.mxu0 0.0
    %1719 = vmatpush1.msra.mxu0 0.0
    %1720 = vmatprep.subr.mxu0 0.0
    %1721 = vmatpush1.msra.mxu0 0.0
    %1722 = vmatprep.subr.mxu0 0.0
    %1723 = vmatpush1.msra.mxu0 0.0
    %1724 = vmatprep.subr.mxu0 0.0
    %1725 = vmatpush1.msra.mxu0 0.0
    %1726 = vmatprep.subr.mxu0 0.0
    %1727 = vmatpush1.msra.mxu0 0.0
    %1728 = vmatprep.subr.mxu0 0.0
    %1729 = vmatpush1.msra.mxu0 0.0
    %1730 = vmatprep.subr.mxu0 0.0
    %1731 = vmatpush1.msra.mxu0 0.0
    %1732 = vmatprep.subr.mxu0 0.0
    %1733 = vmatpush1.msra.mxu0 0.0
    %1734 = vmatprep.subr.mxu0 0.0
    %1735 = vmatpush1.msra.mxu0 0.0
    %1736 = vmatprep.mubr.f32.mxu0 0.0
    %1737 = vmatmul.mubr.f32.gmra.mrb[0].mxu0 %v1600
    %v1738 = vpop.f32.mrb[0].mxu0
    %v1739 = vadd.f32 %v203, %v1738
    %v1740 = vpop.f32.mrb[0].mxu0
    %1741 = vdwg.mxu0
    %1742 = vmatprep.subr.mxu0 %v77
    %1743 = vmatpush1.msra.mxu0 %v76
    %1744 = vmatprep.subr.mxu0 %v80
    %1745 = vmatpush1.msra.mxu0 %v79
    %1746 = vmatprep.subr.mxu0 %v83
    %1747 = vmatpush1.msra.mxu0 %v82
    %1748 = vmatprep.subr.mxu0 %v86
    %1749 = vmatpush1.msra.mxu0 %v85
    %1750 = vmatprep.subr.mxu0 %v89
    %1751 = vmatpush1.msra.mxu0 %v88
    %1752 = vmatprep.subr.mxu0 %v92
    %1753 = vmatpush1.msra.mxu0 %v91
    %1754 = vmatprep.subr.mxu0 %v95
    %1755 = vmatpush1.msra.mxu0 %v94
    %1756 = vmatprep.subr.mxu0 %v98
    %1757 = vmatpush1.msra.mxu0 %v97
    %1758 = vmatprep.subr.mxu0 %v101
    %1759 = vmatpush1.msra.mxu0 %v100
    %1760 = vmatprep.subr.mxu0 %v104
    %1761 = vmatpush1.msra.mxu0 %v103
    %1762 = vmatprep.subr.mxu0 %v107
    %1763 = vmatpush1.msra.mxu0 %v106
    %1764 = vmatprep.subr.mxu0 %v110
    %1765 = vmatpush1.msra.mxu0 %v109
    %1766 = vmatprep.subr.mxu0 %v113
    %1767 = vmatpush1.msra.mxu0 %v112
    %1768 = vmatprep.subr.mxu0 %v116
    %1769 = vmatpush1.msra.mxu0 %v115
    %1770 = vmatprep.subr.mxu0 %v119
    %1771 = vmatpush1.msra.mxu0 %v118
    %1772 = vmatprep.subr.mxu0 %v122
    %1773 = vmatpush1.msra.mxu0 %v121
    %1774 = vmatprep.subr.mxu0 0.0
    %1775 = vmatpush1.msra.mxu0 0.0
    %1776 = vmatprep.subr.mxu0 0.0
    %1777 = vmatpush1.msra.mxu0 0.0
    %1778 = vmatprep.subr.mxu0 0.0
    %1779 = vmatpush1.msra.mxu0 0.0
    %1780 = vmatprep.subr.mxu0 0.0
    %1781 = vmatpush1.msra.mxu0 0.0
    %1782 = vmatprep.subr.mxu0 0.0
    %1783 = vmatpush1.msra.mxu0 0.0
    %1784 = vmatprep.subr.mxu0 0.0
    %1785 = vmatpush1.msra.mxu0 0.0
    %1786 = vmatprep.subr.mxu0 0.0
    %1787 = vmatpush1.msra.mxu0 0.0
    %1788 = vmatprep.subr.mxu0 0.0
    %1789 = vmatpush1.msra.mxu0 0.0
    %1790 = vmatprep.subr.mxu0 0.0
    %1791 = vmatpush1.msra.mxu0 0.0
    %1792 = vmatprep.subr.mxu0 0.0
    %1793 = vmatpush1.msra.mxu0 0.0
    %1794 = vmatprep.subr.mxu0 0.0
    %1795 = vmatpush1.msra.mxu0 0.0
    %1796 = vmatprep.subr.mxu0 0.0
    %1797 = vmatpush1.msra.mxu0 0.0
    %1798 = vmatprep.subr.mxu0 0.0
    %1799 = vmatpush1.msra.mxu0 0.0
    %1800 = vmatprep.subr.mxu0 0.0
    %1801 = vmatpush1.msra.mxu0 0.0
    %1802 = vmatprep.subr.mxu0 0.0
    %1803 = vmatpush1.msra.mxu0 0.0
    %1804 = vmatprep.subr.mxu0 0.0
    %1805 = vmatpush1.msra.mxu0 0.0
    %1806 = vmatprep.mubr.f32.mxu0 0.0
    %1807 = vmatmul.mubr.f32.gmra.mrb[0].mxu0 %v1435
    %v1808 = vpop.f32.mrb[0].mxu0
    %v1809 = vadd.f32 %v231, %v1808
    %v1810 = vpop.f32.mrb[0].mxu0
    %v1811 = vadd.f32 %v235, %v1810
    %1812 = vdwg.mxu0
    %1813 = vmatprep.subr.mxu0 0.0
    %1814 = vmatpush1.msra.mxu0 %v78
    %1815 = vmatprep.subr.mxu0 0.0
    %1816 = vmatpush1.msra.mxu0 %v81
    %1817 = vmatprep.subr.mxu0 0.0
    %1818 = vmatpush1.msra.mxu0 %v84
    %1819 = vmatprep.subr.mxu0 0.0
    %1820 = vmatpush1.msra.mxu0 %v87
    %1821 = vmatprep.subr.mxu0 0.0
    %1822 = vmatpush1.msra.mxu0 %v90
    %1823 = vmatprep.subr.mxu0 0.0
    %1824 = vmatpush1.msra.mxu0 %v93
    %1825 = vmatprep.subr.mxu0 0.0
    %1826 = vmatpush1.msra.mxu0 %v96
    %1827 = vmatprep.subr.mxu0 0.0
    %1828 = vmatpush1.msra.mxu0 %v99
    %1829 = vmatprep.subr.mxu0 0.0
    %1830 = vmatpush1.msra.mxu0 %v102
    %1831 = vmatprep.subr.mxu0 0.0
    %1832 = vmatpush1.msra.mxu0 %v105
    %1833 = vmatprep.subr.mxu0 0.0
    %1834 = vmatpush1.msra.mxu0 %v108
    %1835 = vmatprep.subr.mxu0 0.0
    %1836 = vmatpush1.msra.mxu0 %v111
    %1837 = vmatprep.subr.mxu0 0.0
    %1838 = vmatpush1.msra.mxu0 %v114
    %1839 = vmatprep.subr.mxu0 0.0
    %1840 = vmatpush1.msra.mxu0 %v117
    %1841 = vmatprep.subr.mxu0 0.0
    %1842 = vmatpush1.msra.mxu0 %v120
    %1843 = vmatprep.subr.mxu0 0.0
    %1844 = vmatpush1.msra.mxu0 %v123
    %1845 = vmatprep.subr.mxu0 0.0
    %1846 = vmatpush1.msra.mxu0 0.0
    %1847 = vmatprep.subr.mxu0 0.0
    %1848 = vmatpush1.msra.mxu0 0.0
    %1849 = vmatprep.subr.mxu0 0.0
    %1850 = vmatpush1.msra.mxu0 0.0
    %1851 = vmatprep.subr.mxu0 0.0
    %1852 = vmatpush1.msra.mxu0 0.0
    %1853 = vmatprep.subr.mxu0 0.0
    %1854 = vmatpush1.msra.mxu0 0.0
    %1855 = vmatprep.subr.mxu0 0.0
    %1856 = vmatpush1.msra.mxu0 0.0
    %1857 = vmatprep.subr.mxu0 0.0
    %1858 = vmatpush1.msra.mxu0 0.0
    %1859 = vmatprep.subr.mxu0 0.0
    %1860 = vmatpush1.msra.mxu0 0.0
    %1861 = vmatprep.subr.mxu0 0.0
    %1862 = vmatpush1.msra.mxu0 0.0
    %1863 = vmatprep.subr.mxu0 0.0
    %1864 = vmatpush1.msra.mxu0 0.0
    %1865 = vmatprep.subr.mxu0 0.0
    %1866 = vmatpush1.msra.mxu0 0.0
    %1867 = vmatprep.subr.mxu0 0.0
    %1868 = vmatpush1.msra.mxu0 0.0
    %1869 = vmatprep.subr.mxu0 0.0
    %1870 = vmatpush1.msra.mxu0 0.0
    %1871 = vmatprep.subr.mxu0 0.0
    %1872 = vmatpush1.msra.mxu0 0.0
    %1873 = vmatprep.subr.mxu0 0.0
    %1874 = vmatpush1.msra.mxu0 0.0
    %1875 = vmatprep.subr.mxu0 0.0
    %1876 = vmatpush1.msra.mxu0 0.0
    %1877 = vmatprep.mubr.f32.mxu0 0.0
    %1878 = vmatmul.mubr.f32.gmra.mrb[0].mxu0 %v1435
    %v1879 = vpop.f32.mrb[0].mxu0
    %v1880 = vadd.f32 %v239, %v1879
    %v1881 = vpop.f32.mrb[0].mxu0
    %1882 = vdwg.mxu0
    %v1883 = vadd.f32 %v1668, %v1809
    %v1884 = vxor.u32 %v1883, 2147483648
    %v1885 = vmul.f32 %v1884, 1.442695
    %v1886 = vpow.pop %v1885
    %v1887 = vadd.f32 %v1886, 1.0
    %v1888 = vrcp.pop %v1887
    %v1889 = vmul.f32 1.0, %v1888
    %v1890 = vadd.f32 %v1670, %v1811
    %v1891 = vxor.u32 %v1890, 2147483648
    %v1892 = vmul.f32 %v1891, 1.442695
    %v1893 = vpow.pop %v1892
    %v1894 = vadd.f32 %v1893, 1.0
    %v1895 = vrcp.pop %v1894
    %v1896 = vmul.f32 1.0, %v1895
    %v1897 = vmul.f32 %v1889, %v1880
    %v1898 = vadd.f32 %v1739, %v1897
    %v1899 = vtanh.pop %v1898
    %v1900 = vsub.f32 1.0, %v1896
    %v1901 = vmul.f32 %v1900, %v1899
    %v1902 = vmul.f32 %v1896, %v1435
    %v1903 = vadd.f32 %v1901, %v1902
    %v1904 = vadd.f32 %v367, %v177
    %v1905 = vadd.f32 %v369, %v181
    %v1906 = vadd.f32 %v477, %v185
    %1907 = vmatprep.subr.mxu0 %v28
    %1908 = vmatpush1.msra.mxu0 %v27
    %1909 = vmatprep.subr.mxu0 %v31
    %1910 = vmatpush1.msra.mxu0 %v30
    %1911 = vmatprep.subr.mxu0 %v34
    %1912 = vmatpush1.msra.mxu0 %v33
    %1913 = vmatprep.subr.mxu0 %v37
    %1914 = vmatpush1.msra.mxu0 %v36
    %1915 = vmatprep.subr.mxu0 %v40
    %1916 = vmatpush1.msra.mxu0 %v39
    %1917 = vmatprep.subr.mxu0 %v43
    %1918 = vmatpush1.msra.mxu0 %v42
    %1919 = vmatprep.subr.mxu0 %v46
    %1920 = vmatpush1.msra.mxu0 %v45
    %1921 = vmatprep.subr.mxu0 %v49
    %1922 = vmatpush1.msra.mxu0 %v48
    %1923 = vmatprep.subr.mxu0 %v52
    %1924 = vmatpush1.msra.mxu0 %v51
    %1925 = vmatprep.subr.mxu0 %v55
    %1926 = vmatpush1.msra.mxu0 %v54
    %1927 = vmatprep.subr.mxu0 %v58
    %1928 = vmatpush1.msra.mxu0 %v57
    %1929 = vmatprep.subr.mxu0 %v61
    %1930 = vmatpush1.msra.mxu0 %v60
    %1931 = vmatprep.subr.mxu0 %v64
    %1932 = vmatpush1.msra.mxu0 %v63
    %1933 = vmatprep.subr.mxu0 %v67
    %1934 = vmatpush1.msra.mxu0 %v66
    %1935 = vmatprep.subr.mxu0 %v70
    %1936 = vmatpush1.msra.mxu0 %v69
    %1937 = vmatprep.subr.mxu0 %v73
    %1938 = vmatpush1.msra.mxu0 %v72
    %1939 = vmatprep.subr.mxu0 0.0
    %1940 = vmatpush1.msra.mxu0 0.0
    %1941 = vmatprep.subr.mxu0 0.0
    %1942 = vmatpush1.msra.mxu0 0.0
    %1943 = vmatprep.subr.mxu0 0.0
    %1944 = vmatpush1.msra.mxu0 0.0
    %1945 = vmatprep.subr.mxu0 0.0
    %1946 = vmatpush1.msra.mxu0 0.0
    %1947 = vmatprep.subr.mxu0 0.0
    %1948 = vmatpush1.msra.mxu0 0.0
    %1949 = vmatprep.subr.mxu0 0.0
    %1950 = vmatpush1.msra.mxu0 0.0
    %1951 = vmatprep.subr.mxu0 0.0
    %1952 = vmatpush1.msra.mxu0 0.0
    %1953 = vmatprep.subr.mxu0 0.0
    %1954 = vmatpush1.msra.mxu0 0.0
    %1955 = vmatprep.subr.mxu0 0.0
    %1956 = vmatpush1.msra.mxu0 0.0
    %1957 = vmatprep.subr.mxu0 0.0
    %1958 = vmatpush1.msra.mxu0 0.0
    %1959 = vmatprep.subr.mxu0 0.0
    %1960 = vmatpush1.msra.mxu0 0.0
    %1961 = vmatprep.subr.mxu0 0.0
    %1962 = vmatpush1.msra.mxu0 0.0
    %1963 = vmatprep.subr.mxu0 0.0
    %1964 = vmatpush1.msra.mxu0 0.0
    %1965 = vmatprep.subr.mxu0 0.0
    %1966 = vmatpush1.msra.mxu0 0.0
    %1967 = vmatprep.subr.mxu0 0.0
    %1968 = vmatpush1.msra.mxu0 0.0
    %1969 = vmatprep.subr.mxu0 0.0
    %1970 = vmatpush1.msra.mxu0 0.0
    %1971 = vmatprep.mubr.f32.mxu0 0.0
    %1972 = vmatmul.mubr.f32.gmra.mrb[0].mxu0 %v1600
    %v1973 = vpop.f32.mrb[0].mxu0
    %v1974 = vadd.f32 %v213, %v1973
    %v1975 = vpop.f32.mrb[0].mxu0
    %v1976 = vadd.f32 %v217, %v1975
    %1977 = vdwg.mxu0
    %1978 = vmatprep.subr.mxu0 0.0
    %1979 = vmatpush1.msra.mxu0 %v29
    %1980 = vmatprep.subr.mxu0 0.0
    %1981 = vmatpush1.msra.mxu0 %v32
    %1982 = vmatprep.subr.mxu0 0.0
    %1983 = vmatpush1.msra.mxu0 %v35
    %1984 = vmatprep.subr.mxu0 0.0
    %1985 = vmatpush1.msra.mxu0 %v38
    %1986 = vmatprep.subr.mxu0 0.0
    %1987 = vmatpush1.msra.mxu0 %v41
    %1988 = vmatprep.subr.mxu0 0.0
    %1989 = vmatpush1.msra.mxu0 %v44
    %1990 = vmatprep.subr.mxu0 0.0
    %1991 = vmatpush1.msra.mxu0 %v47
    %1992 = vmatprep.subr.mxu0 0.0
    %1993 = vmatpush1.msra.mxu0 %v50
    %1994 = vmatprep.subr.mxu0 0.0
    %1995 = vmatpush1.msra.mxu0 %v53
    %1996 = vmatprep.subr.mxu0 0.0
    %1997 = vmatpush1.msra.mxu0 %v56
    %1998 = vmatprep.subr.mxu0 0.0
    %1999 = vmatpush1.msra.mxu0 %v59
    %2000 = vmatprep.subr.mxu0 0.0
    %2001 = vmatpush1.msra.mxu0 %v62
    %2002 = vmatprep.subr.mxu0 0.0
    %2003 = vmatpush1.msra.mxu0 %v65
    %2004 = vmatprep.subr.mxu0 0.0
    %2005 = vmatpush1.msra.mxu0 %v68
    %2006 = vmatprep.subr.mxu0 0.0
    %2007 = vmatpush1.msra.mxu0 %v71
    %2008 = vmatprep.subr.mxu0 0.0
    %2009 = vmatpush1.msra.mxu0 %v74
    %2010 = vmatprep.subr.mxu0 0.0
    %2011 = vmatpush1.msra.mxu0 0.0
    %2012 = vmatprep.subr.mxu0 0.0
    %2013 = vmatpush1.msra.mxu0 0.0
    %2014 = vmatprep.subr.mxu0 0.0
    %2015 = vmatpush1.msra.mxu0 0.0
    %2016 = vmatprep.subr.mxu0 0.0
    %2017 = vmatpush1.msra.mxu0 0.0
    %2018 = vmatprep.subr.mxu0 0.0
    %2019 = vmatpush1.msra.mxu0 0.0
    %2020 = vmatprep.subr.mxu0 0.0
    %2021 = vmatpush1.msra.mxu0 0.0
    %2022 = vmatprep.subr.mxu0 0.0
    %2023 = vmatpush1.msra.mxu0 0.0
    %2024 = vmatprep.subr.mxu0 0.0
    %2025 = vmatpush1.msra.mxu0 0.0
    %2026 = vmatprep.subr.mxu0 0.0
    %2027 = vmatpush1.msra.mxu0 0.0
    %2028 = vmatprep.subr.mxu0 0.0
    %2029 = vmatpush1.msra.mxu0 0.0
    %2030 = vmatprep.subr.mxu0 0.0
    %2031 = vmatpush1.msra.mxu0 0.0
    %2032 = vmatprep.subr.mxu0 0.0
    %2033 = vmatpush1.msra.mxu0 0.0
    %2034 = vmatprep.subr.mxu0 0.0
    %2035 = vmatpush1.msra.mxu0 0.0
    %2036 = vmatprep.subr.mxu0 0.0
    %2037 = vmatpush1.msra.mxu0 0.0
    %2038 = vmatprep.subr.mxu0 0.0
    %2039 = vmatpush1.msra.mxu0 0.0
    %2040 = vmatprep.subr.mxu0 0.0
    %2041 = vmatpush1.msra.mxu0 0.0
    %2042 = vmatprep.mubr.f32.mxu0 0.0
    %2043 = vmatmul.mubr.f32.gmra.mrb[0].mxu0 %v1600
    %v2044 = vpop.f32.mrb[0].mxu0
    %v2045 = vadd.f32 %v221, %v2044
    %v2046 = vpop.f32.mrb[0].mxu0
    %2047 = vdwg.mxu0
    %v2048 = vadd.f32 %v1904, %v1974
    %v2049 = vxor.u32 %v2048, 2147483648
    %v2050 = vmul.f32 %v2049, 1.442695
    %v2051 = vpow.pop %v2050
    %v2052 = vadd.f32 %v2051, 1.0
    %v2053 = vrcp.pop %v2052
    %v2054 = vmul.f32 1.0, %v2053
    %v2055 = vadd.f32 %v1905, %v1976
    %v2056 = vxor.u32 %v2055, 2147483648
    %v2057 = vmul.f32 %v2056, 1.442695
    %v2058 = vpow.pop %v2057
    %v2059 = vadd.f32 %v2058, 1.0
    %v2060 = vrcp.pop %v2059
    %v2061 = vmul.f32 1.0, %v2060
    %v2062 = vmul.f32 %v2054, %v2045
    %v2063 = vadd.f32 %v1906, %v2062
    %v2064 = vtanh.pop %v2063
    %v2065 = vsub.f32 1.0, %v2061
    %v2066 = vmul.f32 %v2065, %v2064
    %v2067 = vmul.f32 %v2061, %v1600
    %v2068 = vadd.f32 %v2066, %v2067
    %2069 = vmatprep.subr.mxu0 %v125
    %2070 = vmatpush1.msra.mxu0 %v124
    %2071 = vmatprep.subr.mxu0 %v128
    %2072 = vmatpush1.msra.mxu0 %v127
    %2073 = vmatprep.subr.mxu0 %v131
    %2074 = vmatpush1.msra.mxu0 %v130
    %2075 = vmatprep.subr.mxu0 %v134
    %2076 = vmatpush1.msra.mxu0 %v133
    %2077 = vmatprep.subr.mxu0 %v137
    %2078 = vmatpush1.msra.mxu0 %v136
    %2079 = vmatprep.subr.mxu0 %v140
    %2080 = vmatpush1.msra.mxu0 %v139
    %2081 = vmatprep.subr.mxu0 %v143
    %2082 = vmatpush1.msra.mxu0 %v142
    %2083 = vmatprep.subr.mxu0 %v146
    %2084 = vmatpush1.msra.mxu0 %v145
    %2085 = vmatprep.subr.mxu0 %v149
    %2086 = vmatpush1.msra.mxu0 %v148
    %2087 = vmatprep.subr.mxu0 %v152
    %2088 = vmatpush1.msra.mxu0 %v151
    %2089 = vmatprep.subr.mxu0 %v155
    %2090 = vmatpush1.msra.mxu0 %v154
    %2091 = vmatprep.subr.mxu0 %v158
    %2092 = vmatpush1.msra.mxu0 %v157
    %2093 = vmatprep.subr.mxu0 %v161
    %2094 = vmatpush1.msra.mxu0 %v160
    %2095 = vmatprep.subr.mxu0 %v164
    %2096 = vmatpush1.msra.mxu0 %v163
    %2097 = vmatprep.subr.mxu0 %v167
    %2098 = vmatpush1.msra.mxu0 %v166
    %2099 = vmatprep.subr.mxu0 %v170
    %2100 = vmatpush1.msra.mxu0 %v169
    %2101 = vmatprep.subr.mxu0 0.0
    %2102 = vmatpush1.msra.mxu0 0.0
    %2103 = vmatprep.subr.mxu0 0.0
    %2104 = vmatpush1.msra.mxu0 0.0
    %2105 = vmatprep.subr.mxu0 0.0
    %2106 = vmatpush1.msra.mxu0 0.0
    %2107 = vmatprep.subr.mxu0 0.0
    %2108 = vmatpush1.msra.mxu0 0.0
    %2109 = vmatprep.subr.mxu0 0.0
    %2110 = vmatpush1.msra.mxu0 0.0
    %2111 = vmatprep.subr.mxu0 0.0
    %2112 = vmatpush1.msra.mxu0 0.0
    %2113 = vmatprep.subr.mxu0 0.0
    %2114 = vmatpush1.msra.mxu0 0.0
    %2115 = vmatprep.subr.mxu0 0.0
    %2116 = vmatpush1.msra.mxu0 0.0
    %2117 = vmatprep.subr.mxu0 0.0
    %2118 = vmatpush1.msra.mxu0 0.0
    %2119 = vmatprep.subr.mxu0 0.0
    %2120 = vmatpush1.msra.mxu0 0.0
    %2121 = vmatprep.subr.mxu0 0.0
    %2122 = vmatpush1.msra.mxu0 0.0
    %2123 = vmatprep.subr.mxu0 0.0
    %2124 = vmatpush1.msra.mxu0 0.0
    %2125 = vmatprep.subr.mxu0 0.0
    %2126 = vmatpush1.msra.mxu0 0.0
    %2127 = vmatprep.subr.mxu0 0.0
    %2128 = vmatpush1.msra.mxu0 0.0
    %2129 = vmatprep.subr.mxu0 0.0
    %2130 = vmatpush1.msra.mxu0 0.0
    %2131 = vmatprep.subr.mxu0 0.0
    %2132 = vmatpush1.msra.mxu0 0.0
    %2133 = vmatprep.mubr.f32.mxu0 0.0
    %2134 = vmatmul.mubr.f32.gmra.mrb[0].mxu0 %v2068
    %v2135 = vpop.f32.mrb[0].mxu0
    %v2136 = vadd.f32 %v195, %v2135
    %v2137 = vpop.f32.mrb[0].mxu0
    %v2138 = vadd.f32 %v199, %v2137
    %2139 = vdwg.mxu0
    %2140 = vmatprep.subr.mxu0 0.0
    %2141 = vmatpush1.msra.mxu0 %v126
    %2142 = vmatprep.subr.mxu0 0.0
    %2143 = vmatpush1.msra.mxu0 %v129
    %2144 = vmatprep.subr.mxu0 0.0
    %2145 = vmatpush1.msra.mxu0 %v132
    %2146 = vmatprep.subr.mxu0 0.0
    %2147 = vmatpush1.msra.mxu0 %v135
    %2148 = vmatprep.subr.mxu0 0.0
    %2149 = vmatpush1.msra.mxu0 %v138
    %2150 = vmatprep.subr.mxu0 0.0
    %2151 = vmatpush1.msra.mxu0 %v141
    %2152 = vmatprep.subr.mxu0 0.0
    %2153 = vmatpush1.msra.mxu0 %v144
    %2154 = vmatprep.subr.mxu0 0.0
    %2155 = vmatpush1.msra.mxu0 %v147
    %2156 = vmatprep.subr.mxu0 0.0
    %2157 = vmatpush1.msra.mxu0 %v150
    %2158 = vmatprep.subr.mxu0 0.0
    %2159 = vmatpush1.msra.mxu0 %v153
    %2160 = vmatprep.subr.mxu0 0.0
    %2161 = vmatpush1.msra.mxu0 %v156
    %2162 = vmatprep.subr.mxu0 0.0
    %2163 = vmatpush1.msra.mxu0 %v159
    %2164 = vmatprep.subr.mxu0 0.0
    %2165 = vmatpush1.msra.mxu0 %v162
    %2166 = vmatprep.subr.mxu0 0.0
    %2167 = vmatpush1.msra.mxu0 %v165
    %2168 = vmatprep.subr.mxu0 0.0
    %2169 = vmatpush1.msra.mxu0 %v168
    %2170 = vmatprep.subr.mxu0 0.0
    %2171 = vmatpush1.msra.mxu0 %v171
    %2172 = vmatprep.subr.mxu0 0.0
    %2173 = vmatpush1.msra.mxu0 0.0
    %2174 = vmatprep.subr.mxu0 0.0
    %2175 = vmatpush1.msra.mxu0 0.0
    %2176 = vmatprep.subr.mxu0 0.0
    %2177 = vmatpush1.msra.mxu0 0.0
    %2178 = vmatprep.subr.mxu0 0.0
    %2179 = vmatpush1.msra.mxu0 0.0
    %2180 = vmatprep.subr.mxu0 0.0
    %2181 = vmatpush1.msra.mxu0 0.0
    %2182 = vmatprep.subr.mxu0 0.0
    %2183 = vmatpush1.msra.mxu0 0.0
    %2184 = vmatprep.subr.mxu0 0.0
    %2185 = vmatpush1.msra.mxu0 0.0
    %2186 = vmatprep.subr.mxu0 0.0
    %2187 = vmatpush1.msra.mxu0 0.0
    %2188 = vmatprep.subr.mxu0 0.0
    %2189 = vmatpush1.msra.mxu0 0.0
    %2190 = vmatprep.subr.mxu0 0.0
    %2191 = vmatpush1.msra.mxu0 0.0
    %2192 = vmatprep.subr.mxu0 0.0
    %2193 = vmatpush1.msra.mxu0 0.0
    %2194 = vmatprep.subr.mxu0 0.0
    %2195 = vmatpush1.msra.mxu0 0.0
    %2196 = vmatprep.subr.mxu0 0.0
    %2197 = vmatpush1.msra.mxu0 0.0
    %2198 = vmatprep.subr.mxu0 0.0
    %2199 = vmatpush1.msra.mxu0 0.0
    %2200 = vmatprep.subr.mxu0 0.0
    %2201 = vmatpush1.msra.mxu0 0.0
    %2202 = vmatprep.subr.mxu0 0.0
    %2203 = vmatpush1.msra.mxu0 0.0
    %2204 = vmatprep.mubr.f32.mxu0 0.0
    %2205 = vmatmul.mubr.f32.gmra.mrb[0].mxu0 %v2068
    %v2206 = vpop.f32.mrb[0].mxu0
    %v2207 = vadd.f32 %v203, %v2206
    %v2208 = vpop.f32.mrb[0].mxu0
    %2209 = vdwg.mxu0
    %2210 = vmatprep.subr.mxu0 %v77
    %2211 = vmatpush1.msra.mxu0 %v76
    %2212 = vmatprep.subr.mxu0 %v80
    %2213 = vmatpush1.msra.mxu0 %v79
    %2214 = vmatprep.subr.mxu0 %v83
    %2215 = vmatpush1.msra.mxu0 %v82
    %2216 = vmatprep.subr.mxu0 %v86
    %2217 = vmatpush1.msra.mxu0 %v85
    %2218 = vmatprep.subr.mxu0 %v89
    %2219 = vmatpush1.msra.mxu0 %v88
    %2220 = vmatprep.subr.mxu0 %v92
    %2221 = vmatpush1.msra.mxu0 %v91
    %2222 = vmatprep.subr.mxu0 %v95
    %2223 = vmatpush1.msra.mxu0 %v94
    %2224 = vmatprep.subr.mxu0 %v98
    %2225 = vmatpush1.msra.mxu0 %v97
    %2226 = vmatprep.subr.mxu0 %v101
    %2227 = vmatpush1.msra.mxu0 %v100
    %2228 = vmatprep.subr.mxu0 %v104
    %2229 = vmatpush1.msra.mxu0 %v103
    %2230 = vmatprep.subr.mxu0 %v107
    %2231 = vmatpush1.msra.mxu0 %v106
    %2232 = vmatprep.subr.mxu0 %v110
    %2233 = vmatpush1.msra.mxu0 %v109
    %2234 = vmatprep.subr.mxu0 %v113
    %2235 = vmatpush1.msra.mxu0 %v112
    %2236 = vmatprep.subr.mxu0 %v116
    %2237 = vmatpush1.msra.mxu0 %v115
    %2238 = vmatprep.subr.mxu0 %v119
    %2239 = vmatpush1.msra.mxu0 %v118
    %2240 = vmatprep.subr.mxu0 %v122
    %2241 = vmatpush1.msra.mxu0 %v121
    %2242 = vmatprep.subr.mxu0 0.0
    %2243 = vmatpush1.msra.mxu0 0.0
    %2244 = vmatprep.subr.mxu0 0.0
    %2245 = vmatpush1.msra.mxu0 0.0
    %2246 = vmatprep.subr.mxu0 0.0
    %2247 = vmatpush1.msra.mxu0 0.0
    %2248 = vmatprep.subr.mxu0 0.0
    %2249 = vmatpush1.msra.mxu0 0.0
    %2250 = vmatprep.subr.mxu0 0.0
    %2251 = vmatpush1.msra.mxu0 0.0
    %2252 = vmatprep.subr.mxu0 0.0
    %2253 = vmatpush1.msra.mxu0 0.0
    %2254 = vmatprep.subr.mxu0 0.0
    %2255 = vmatpush1.msra.mxu0 0.0
    %2256 = vmatprep.subr.mxu0 0.0
    %2257 = vmatpush1.msra.mxu0 0.0
    %2258 = vmatprep.subr.mxu0 0.0
    %2259 = vmatpush1.msra.mxu0 0.0
    %2260 = vmatprep.subr.mxu0 0.0
    %2261 = vmatpush1.msra.mxu0 0.0
    %2262 = vmatprep.subr.mxu0 0.0
    %2263 = vmatpush1.msra.mxu0 0.0
    %2264 = vmatprep.subr.mxu0 0.0
    %2265 = vmatpush1.msra.mxu0 0.0
    %2266 = vmatprep.subr.mxu0 0.0
    %2267 = vmatpush1.msra.mxu0 0.0
    %2268 = vmatprep.subr.mxu0 0.0
    %2269 = vmatpush1.msra.mxu0 0.0
    %2270 = vmatprep.subr.mxu0 0.0
    %2271 = vmatpush1.msra.mxu0 0.0
    %2272 = vmatprep.subr.mxu0 0.0
    %2273 = vmatpush1.msra.mxu0 0.0
    %2274 = vmatprep.mubr.f32.mxu0 0.0
    %2275 = vmatmul.mubr.f32.gmra.mrb[0].mxu0 %v1903
    %v2276 = vpop.f32.mrb[0].mxu0
    %v2277 = vadd.f32 %v231, %v2276
    %v2278 = vpop.f32.mrb[0].mxu0
    %v2279 = vadd.f32 %v235, %v2278
    %2280 = vdwg.mxu0
    %2281 = vmatprep.subr.mxu0 0.0
    %2282 = vmatpush1.msra.mxu0 %v78
    %2283 = vmatprep.subr.mxu0 0.0
    %2284 = vmatpush1.msra.mxu0 %v81
    %2285 = vmatprep.subr.mxu0 0.0
    %2286 = vmatpush1.msra.mxu0 %v84
    %2287 = vmatprep.subr.mxu0 0.0
    %2288 = vmatpush1.msra.mxu0 %v87
    %2289 = vmatprep.subr.mxu0 0.0
    %2290 = vmatpush1.msra.mxu0 %v90
    %2291 = vmatprep.subr.mxu0 0.0
    %2292 = vmatpush1.msra.mxu0 %v93
    %2293 = vmatprep.subr.mxu0 0.0
    %2294 = vmatpush1.msra.mxu0 %v96
    %2295 = vmatprep.subr.mxu0 0.0
    %2296 = vmatpush1.msra.mxu0 %v99
    %2297 = vmatprep.subr.mxu0 0.0
    %2298 = vmatpush1.msra.mxu0 %v102
    %2299 = vmatprep.subr.mxu0 0.0
    %2300 = vmatpush1.msra.mxu0 %v105
    %2301 = vmatprep.subr.mxu0 0.0
    %2302 = vmatpush1.msra.mxu0 %v108
    %2303 = vmatprep.subr.mxu0 0.0
    %2304 = vmatpush1.msra.mxu0 %v111
    %2305 = vmatprep.subr.mxu0 0.0
    %2306 = vmatpush1.msra.mxu0 %v114
    %2307 = vmatprep.subr.mxu0 0.0
    %2308 = vmatpush1.msra.mxu0 %v117
    %2309 = vmatprep.subr.mxu0 0.0
    %2310 = vmatpush1.msra.mxu0 %v120
    %2311 = vmatprep.subr.mxu0 0.0
    %2312 = vmatpush1.msra.mxu0 %v123
    %2313 = vmatprep.subr.mxu0 0.0
    %2314 = vmatpush1.msra.mxu0 0.0
    %2315 = vmatprep.subr.mxu0 0.0
    %2316 = vmatpush1.msra.mxu0 0.0
    %2317 = vmatprep.subr.mxu0 0.0
    %2318 = vmatpush1.msra.mxu0 0.0
    %2319 = vmatprep.subr.mxu0 0.0
    %2320 = vmatpush1.msra.mxu0 0.0
    %2321 = vmatprep.subr.mxu0 0.0
    %2322 = vmatpush1.msra.mxu0 0.0
    %2323 = vmatprep.subr.mxu0 0.0
    %2324 = vmatpush1.msra.mxu0 0.0
    %2325 = vmatprep.subr.mxu0 0.0
    %2326 = vmatpush1.msra.mxu0 0.0
    %2327 = vmatprep.subr.mxu0 0.0
    %2328 = vmatpush1.msra.mxu0 0.0
    %2329 = vmatprep.subr.mxu0 0.0
    %2330 = vmatpush1.msra.mxu0 0.0
    %2331 = vmatprep.subr.mxu0 0.0
    %2332 = vmatpush1.msra.mxu0 0.0
    %2333 = vmatprep.subr.mxu0 0.0
    %2334 = vmatpush1.msra.mxu0 0.0
    %2335 = vmatprep.subr.mxu0 0.0
    %2336 = vmatpush1.msra.mxu0 0.0
    %2337 = vmatprep.subr.mxu0 0.0
    %2338 = vmatpush1.msra.mxu0 0.0
    %2339 = vmatprep.subr.mxu0 0.0
    %2340 = vmatpush1.msra.mxu0 0.0
    %2341 = vmatprep.subr.mxu0 0.0
    %2342 = vmatpush1.msra.mxu0 0.0
    %2343 = vmatprep.subr.mxu0 0.0
    %2344 = vmatpush1.msra.mxu0 0.0
    %2345 = vmatprep.mubr.f32.mxu0 0.0
    %2346 = vmatmul.mubr.f32.gmra.mrb[0].mxu0 %v1903
    %v2347 = vpop.f32.mrb[0].mxu0
    %v2348 = vadd.f32 %v239, %v2347
    %v2349 = vpop.f32.mrb[0].mxu0
    %2350 = vdwg.mxu0
    %v2351 = vadd.f32 %v2136, %v2277
    %v2352 = vxor.u32 %v2351, 2147483648
    %v2353 = vmul.f32 %v2352, 1.442695
    %v2354 = vpow.pop %v2353
    %v2355 = vadd.f32 %v2354, 1.0
    %v2356 = vrcp.pop %v2355
    %v2357 = vmul.f32 1.0, %v2356
    %v2358 = vadd.f32 %v2138, %v2279
    %v2359 = vxor.u32 %v2358, 2147483648
    %v2360 = vmul.f32 %v2359, 1.442695
    %v2361 = vpow.pop %v2360
    %v2362 = vadd.f32 %v2361, 1.0
    %v2363 = vrcp.pop %v2362
    %v2364 = vmul.f32 1.0, %v2363
    %v2365 = vmul.f32 %v2357, %v2348
    %v2366 = vadd.f32 %v2207, %v2365
    %v2367 = vtanh.pop %v2366
    %v2368 = vsub.f32 1.0, %v2364
    %v2369 = vmul.f32 %v2368, %v2367
    %v2370 = vmul.f32 %v2364, %v1903
    %v2371 = vadd.f32 %v2369, %v2370
    %v2372 = vadd.f32 %v373, %v177
    %v2373 = vadd.f32 %v375, %v181
    %v2374 = vadd.f32 %v482, %v185
    %2375 = vmatprep.subr.mxu0 %v28
    %2376 = vmatpush1.msra.mxu0 %v27
    %2377 = vmatprep.subr.mxu0 %v31
    %2378 = vmatpush1.msra.mxu0 %v30
    %2379 = vmatprep.subr.mxu0 %v34
    %2380 = vmatpush1.msra.mxu0 %v33
    %2381 = vmatprep.subr.mxu0 %v37
    %2382 = vmatpush1.msra.mxu0 %v36
    %2383 = vmatprep.subr.mxu0 %v40
    %2384 = vmatpush1.msra.mxu0 %v39
    %2385 = vmatprep.subr.mxu0 %v43
    %2386 = vmatpush1.msra.mxu0 %v42
    %2387 = vmatprep.subr.mxu0 %v46
    %2388 = vmatpush1.msra.mxu0 %v45
    %2389 = vmatprep.subr.mxu0 %v49
    %2390 = vmatpush1.msra.mxu0 %v48
    %2391 = vmatprep.subr.mxu0 %v52
    %2392 = vmatpush1.msra.mxu0 %v51
    %2393 = vmatprep.subr.mxu0 %v55
    %2394 = vmatpush1.msra.mxu0 %v54
    %2395 = vmatprep.subr.mxu0 %v58
    %2396 = vmatpush1.msra.mxu0 %v57
    %2397 = vmatprep.subr.mxu0 %v61
    %2398 = vmatpush1.msra.mxu0 %v60
    %2399 = vmatprep.subr.mxu0 %v64
    %2400 = vmatpush1.msra.mxu0 %v63
    %2401 = vmatprep.subr.mxu0 %v67
    %2402 = vmatpush1.msra.mxu0 %v66
    %2403 = vmatprep.subr.mxu0 %v70
    %2404 = vmatpush1.msra.mxu0 %v69
    %2405 = vmatprep.subr.mxu0 %v73
    %2406 = vmatpush1.msra.mxu0 %v72
    %2407 = vmatprep.subr.mxu0 0.0
    %2408 = vmatpush1.msra.mxu0 0.0
    %2409 = vmatprep.subr.mxu0 0.0
    %2410 = vmatpush1.msra.mxu0 0.0
    %2411 = vmatprep.subr.mxu0 0.0
    %2412 = vmatpush1.msra.mxu0 0.0
    %2413 = vmatprep.subr.mxu0 0.0
    %2414 = vmatpush1.msra.mxu0 0.0
    %2415 = vmatprep.subr.mxu0 0.0
    %2416 = vmatpush1.msra.mxu0 0.0
    %2417 = vmatprep.subr.mxu0 0.0
    %2418 = vmatpush1.msra.mxu0 0.0
    %2419 = vmatprep.subr.mxu0 0.0
    %2420 = vmatpush1.msra.mxu0 0.0
    %2421 = vmatprep.subr.mxu0 0.0
    %2422 = vmatpush1.msra.mxu0 0.0
    %2423 = vmatprep.subr.mxu0 0.0
    %2424 = vmatpush1.msra.mxu0 0.0
    %2425 = vmatprep.subr.mxu0 0.0
    %2426 = vmatpush1.msra.mxu0 0.0
    %2427 = vmatprep.subr.mxu0 0.0
    %2428 = vmatpush1.msra.mxu0 0.0
    %2429 = vmatprep.subr.mxu0 0.0
    %2430 = vmatpush1.msra.mxu0 0.0
    %2431 = vmatprep.subr.mxu0 0.0
    %2432 = vmatpush1.msra.mxu0 0.0
    %2433 = vmatprep.subr.mxu0 0.0
    %2434 = vmatpush1.msra.mxu0 0.0
    %2435 = vmatprep.subr.mxu0 0.0
    %2436 = vmatpush1.msra.mxu0 0.0
    %2437 = vmatprep.subr.mxu0 0.0
    %2438 = vmatpush1.msra.mxu0 0.0
    %2439 = vmatprep.mubr.f32.mxu0 0.0
    %2440 = vmatmul.mubr.f32.gmra.mrb[0].mxu0 %v2068
    %v2441 = vpop.f32.mrb[0].mxu0
    %v2442 = vadd.f32 %v213, %v2441
    %v2443 = vpop.f32.mrb[0].mxu0
    %v2444 = vadd.f32 %v217, %v2443
    %2445 = vdwg.mxu0
    %2446 = vmatprep.subr.mxu0 0.0
    %2447 = vmatpush1.msra.mxu0 %v29
    %2448 = vmatprep.subr.mxu0 0.0
    %2449 = vmatpush1.msra.mxu0 %v32
    %2450 = vmatprep.subr.mxu0 0.0
    %2451 = vmatpush1.msra.mxu0 %v35
    %2452 = vmatprep.subr.mxu0 0.0
    %2453 = vmatpush1.msra.mxu0 %v38
    %2454 = vmatprep.subr.mxu0 0.0
    %2455 = vmatpush1.msra.mxu0 %v41
    %2456 = vmatprep.subr.mxu0 0.0
    %2457 = vmatpush1.msra.mxu0 %v44
    %2458 = vmatprep.subr.mxu0 0.0
    %2459 = vmatpush1.msra.mxu0 %v47
    %2460 = vmatprep.subr.mxu0 0.0
    %2461 = vmatpush1.msra.mxu0 %v50
    %2462 = vmatprep.subr.mxu0 0.0
    %2463 = vmatpush1.msra.mxu0 %v53
    %2464 = vmatprep.subr.mxu0 0.0
    %2465 = vmatpush1.msra.mxu0 %v56
    %2466 = vmatprep.subr.mxu0 0.0
    %2467 = vmatpush1.msra.mxu0 %v59
    %2468 = vmatprep.subr.mxu0 0.0
    %2469 = vmatpush1.msra.mxu0 %v62
    %2470 = vmatprep.subr.mxu0 0.0
    %2471 = vmatpush1.msra.mxu0 %v65
    %2472 = vmatprep.subr.mxu0 0.0
    %2473 = vmatpush1.msra.mxu0 %v68
    %2474 = vmatprep.subr.mxu0 0.0
    %2475 = vmatpush1.msra.mxu0 %v71
    %2476 = vmatprep.subr.mxu0 0.0
    %2477 = vmatpush1.msra.mxu0 %v74
    %2478 = vmatprep.subr.mxu0 0.0
    %2479 = vmatpush1.msra.mxu0 0.0
    %2480 = vmatprep.subr.mxu0 0.0
    %2481 = vmatpush1.msra.mxu0 0.0
    %2482 = vmatprep.subr.mxu0 0.0
    %2483 = vmatpush1.msra.mxu0 0.0
    %2484 = vmatprep.subr.mxu0 0.0
    %2485 = vmatpush1.msra.mxu0 0.0
    %2486 = vmatprep.subr.mxu0 0.0
    %2487 = vmatpush1.msra.mxu0 0.0
    %2488 = vmatprep.subr.mxu0 0.0
    %2489 = vmatpush1.msra.mxu0 0.0
    %2490 = vmatprep.subr.mxu0 0.0
    %2491 = vmatpush1.msra.mxu0 0.0
    %2492 = vmatprep.subr.mxu0 0.0
    %2493 = vmatpush1.msra.mxu0 0.0
    %2494 = vmatprep.subr.mxu0 0.0
    %2495 = vmatpush1.msra.mxu0 0.0
    %2496 = vmatprep.subr.mxu0 0.0
    %2497 = vmatpush1.msra.mxu0 0.0
    %2498 = vmatprep.subr.mxu0 0.0
    %2499 = vmatpush1.msra.mxu0 0.0
    %2500 = vmatprep.subr.mxu0 0.0
    %2501 = vmatpush1.msra.mxu0 0.0
    %2502 = vmatprep.subr.mxu0 0.0
    %2503 = vmatpush1.msra.mxu0 0.0
    %2504 = vmatprep.subr.mxu0 0.0
    %2505 = vmatpush1.msra.mxu0 0.0
    %2506 = vmatprep.subr.mxu0 0.0
    %2507 = vmatpush1.msra.mxu0 0.0
    %2508 = vmatprep.subr.mxu0 0.0
    %2509 = vmatpush1.msra.mxu0 0.0
    %2510 = vmatprep.mubr.f32.mxu0 0.0
    %2511 = vmatmul.mubr.f32.gmra.mrb[0].mxu0 %v2068
    %v2512 = vpop.f32.mrb[0].mxu0
    %v2513 = vadd.f32 %v221, %v2512
    %v2514 = vpop.f32.mrb[0].mxu0
    %2515 = vdwg.mxu0
    %v2516 = vadd.f32 %v2372, %v2442
    %v2517 = vxor.u32 %v2516, 2147483648
    %v2518 = vmul.f32 %v2517, 1.442695
    %v2519 = vpow.pop %v2518
    %v2520 = vadd.f32 %v2519, 1.0
    %v2521 = vrcp.pop %v2520
    %v2522 = vmul.f32 1.0, %v2521
    %v2523 = vadd.f32 %v2373, %v2444
    %v2524 = vxor.u32 %v2523, 2147483648
    %v2525 = vmul.f32 %v2524, 1.442695
    %v2526 = vpow.pop %v2525
    %v2527 = vadd.f32 %v2526, 1.0
    %v2528 = vrcp.pop %v2527
    %v2529 = vmul.f32 1.0, %v2528
    %v2530 = vmul.f32 %v2522, %v2513
    %v2531 = vadd.f32 %v2374, %v2530
    %v2532 = vtanh.pop %v2531
    %v2533 = vsub.f32 1.0, %v2529
    %v2534 = vmul.f32 %v2533, %v2532
    %v2535 = vmul.f32 %v2529, %v2068
    %v2536 = vadd.f32 %v2534, %v2535
    %2537 = vmatprep.subr.mxu0 %v125
    %2538 = vmatpush1.msra.mxu0 %v124
    %2539 = vmatprep.subr.mxu0 %v128
    %2540 = vmatpush1.msra.mxu0 %v127
    %2541 = vmatprep.subr.mxu0 %v131
    %2542 = vmatpush1.msra.mxu0 %v130
    %2543 = vmatprep.subr.mxu0 %v134
    %2544 = vmatpush1.msra.mxu0 %v133
    %2545 = vmatprep.subr.mxu0 %v137
    %2546 = vmatpush1.msra.mxu0 %v136
    %2547 = vmatprep.subr.mxu0 %v140
    %2548 = vmatpush1.msra.mxu0 %v139
    %2549 = vmatprep.subr.mxu0 %v143
    %2550 = vmatpush1.msra.mxu0 %v142
    %2551 = vmatprep.subr.mxu0 %v146
    %2552 = vmatpush1.msra.mxu0 %v145
    %2553 = vmatprep.subr.mxu0 %v149
    %2554 = vmatpush1.msra.mxu0 %v148
    %2555 = vmatprep.subr.mxu0 %v152
    %2556 = vmatpush1.msra.mxu0 %v151
    %2557 = vmatprep.subr.mxu0 %v155
    %2558 = vmatpush1.msra.mxu0 %v154
    %2559 = vmatprep.subr.mxu0 %v158
    %2560 = vmatpush1.msra.mxu0 %v157
    %2561 = vmatprep.subr.mxu0 %v161
    %2562 = vmatpush1.msra.mxu0 %v160
    %2563 = vmatprep.subr.mxu0 %v164
    %2564 = vmatpush1.msra.mxu0 %v163
    %2565 = vmatprep.subr.mxu0 %v167
    %2566 = vmatpush1.msra.mxu0 %v166
    %2567 = vmatprep.subr.mxu0 %v170
    %2568 = vmatpush1.msra.mxu0 %v169
    %2569 = vmatprep.subr.mxu0 0.0
    %2570 = vmatpush1.msra.mxu0 0.0
    %2571 = vmatprep.subr.mxu0 0.0
    %2572 = vmatpush1.msra.mxu0 0.0
    %2573 = vmatprep.subr.mxu0 0.0
    %2574 = vmatpush1.msra.mxu0 0.0
    %2575 = vmatprep.subr.mxu0 0.0
    %2576 = vmatpush1.msra.mxu0 0.0
    %2577 = vmatprep.subr.mxu0 0.0
    %2578 = vmatpush1.msra.mxu0 0.0
    %2579 = vmatprep.subr.mxu0 0.0
    %2580 = vmatpush1.msra.mxu0 0.0
    %2581 = vmatprep.subr.mxu0 0.0
    %2582 = vmatpush1.msra.mxu0 0.0
    %2583 = vmatprep.subr.mxu0 0.0
    %2584 = vmatpush1.msra.mxu0 0.0
    %2585 = vmatprep.subr.mxu0 0.0
    %2586 = vmatpush1.msra.mxu0 0.0
    %2587 = vmatprep.subr.mxu0 0.0
    %2588 = vmatpush1.msra.mxu0 0.0
    %2589 = vmatprep.subr.mxu0 0.0
    %2590 = vmatpush1.msra.mxu0 0.0
    %2591 = vmatprep.subr.mxu0 0.0
    %2592 = vmatpush1.msra.mxu0 0.0
    %2593 = vmatprep.subr.mxu0 0.0
    %2594 = vmatpush1.msra.mxu0 0.0
    %2595 = vmatprep.subr.mxu0 0.0
    %2596 = vmatpush1.msra.mxu0 0.0
    %2597 = vmatprep.subr.mxu0 0.0
    %2598 = vmatpush1.msra.mxu0 0.0
    %2599 = vmatprep.subr.mxu0 0.0
    %2600 = vmatpush1.msra.mxu0 0.0
    %2601 = vmatprep.mubr.f32.mxu0 0.0
    %2602 = vmatmul.mubr.f32.gmra.mrb[0].mxu0 %v2536
    %v2603 = vpop.f32.mrb[0].mxu0
    %v2604 = vadd.f32 %v195, %v2603
    %v2605 = vpop.f32.mrb[0].mxu0
    %v2606 = vadd.f32 %v199, %v2605
    %2607 = vdwg.mxu0
    %2608 = vmatprep.subr.mxu0 0.0
    %2609 = vmatpush1.msra.mxu0 %v126
    %2610 = vmatprep.subr.mxu0 0.0
    %2611 = vmatpush1.msra.mxu0 %v129
    %2612 = vmatprep.subr.mxu0 0.0
    %2613 = vmatpush1.msra.mxu0 %v132
    %2614 = vmatprep.subr.mxu0 0.0
    %2615 = vmatpush1.msra.mxu0 %v135
    %2616 = vmatprep.subr.mxu0 0.0
    %2617 = vmatpush1.msra.mxu0 %v138
    %2618 = vmatprep.subr.mxu0 0.0
    %2619 = vmatpush1.msra.mxu0 %v141
    %2620 = vmatprep.subr.mxu0 0.0
    %2621 = vmatpush1.msra.mxu0 %v144
    %2622 = vmatprep.subr.mxu0 0.0
    %2623 = vmatpush1.msra.mxu0 %v147
    %2624 = vmatprep.subr.mxu0 0.0
    %2625 = vmatpush1.msra.mxu0 %v150
    %2626 = vmatprep.subr.mxu0 0.0
    %2627 = vmatpush1.msra.mxu0 %v153
    %2628 = vmatprep.subr.mxu0 0.0
    %2629 = vmatpush1.msra.mxu0 %v156
    %2630 = vmatprep.subr.mxu0 0.0
    %2631 = vmatpush1.msra.mxu0 %v159
    %2632 = vmatprep.subr.mxu0 0.0
    %2633 = vmatpush1.msra.mxu0 %v162
    %2634 = vmatprep.subr.mxu0 0.0
    %2635 = vmatpush1.msra.mxu0 %v165
    %2636 = vmatprep.subr.mxu0 0.0
    %2637 = vmatpush1.msra.mxu0 %v168
    %2638 = vmatprep.subr.mxu0 0.0
    %2639 = vmatpush1.msra.mxu0 %v171
    %2640 = vmatprep.subr.mxu0 0.0
    %2641 = vmatpush1.msra.mxu0 0.0
    %2642 = vmatprep.subr.mxu0 0.0
    %2643 = vmatpush1.msra.mxu0 0.0
    %2644 = vmatprep.subr.mxu0 0.0
    %2645 = vmatpush1.msra.mxu0 0.0
    %2646 = vmatprep.subr.mxu0 0.0
    %2647 = vmatpush1.msra.mxu0 0.0
    %2648 = vmatprep.subr.mxu0 0.0
    %2649 = vmatpush1.msra.mxu0 0.0
    %2650 = vmatprep.subr.mxu0 0.0
    %2651 = vmatpush1.msra.mxu0 0.0
    %2652 = vmatprep.subr.mxu0 0.0
    %2653 = vmatpush1.msra.mxu0 0.0
    %2654 = vmatprep.subr.mxu0 0.0
    %2655 = vmatpush1.msra.mxu0 0.0
    %2656 = vmatprep.subr.mxu0 0.0
    %2657 = vmatpush1.msra.mxu0 0.0
    %2658 = vmatprep.subr.mxu0 0.0
    %2659 = vmatpush1.msra.mxu0 0.0
    %2660 = vmatprep.subr.mxu0 0.0
    %2661 = vmatpush1.msra.mxu0 0.0
    %2662 = vmatprep.subr.mxu0 0.0
    %2663 = vmatpush1.msra.mxu0 0.0
    %2664 = vmatprep.subr.mxu0 0.0
    %2665 = vmatpush1.msra.mxu0 0.0
    %2666 = vmatprep.subr.mxu0 0.0
    %2667 = vmatpush1.msra.mxu0 0.0
    %2668 = vmatprep.subr.mxu0 0.0
    %2669 = vmatpush1.msra.mxu0 0.0
    %2670 = vmatprep.subr.mxu0 0.0
    %2671 = vmatpush1.msra.mxu0 0.0
    %2672 = vmatprep.mubr.f32.mxu0 0.0
    %2673 = vmatmul.mubr.f32.gmra.mrb[0].mxu0 %v2536
    %v2674 = vpop.f32.mrb[0].mxu0
    %v2675 = vadd.f32 %v203, %v2674
    %v2676 = vpop.f32.mrb[0].mxu0
    %2677 = vdwg.mxu0
    %2678 = vmatprep.subr.mxu0 %v77
    %2679 = vmatpush1.msra.mxu0 %v76
    %2680 = vmatprep.subr.mxu0 %v80
    %2681 = vmatpush1.msra.mxu0 %v79
    %2682 = vmatprep.subr.mxu0 %v83
    %2683 = vmatpush1.msra.mxu0 %v82
    %2684 = vmatprep.subr.mxu0 %v86
    %2685 = vmatpush1.msra.mxu0 %v85
    %2686 = vmatprep.subr.mxu0 %v89
    %2687 = vmatpush1.msra.mxu0 %v88
    %2688 = vmatprep.subr.mxu0 %v92
    %2689 = vmatpush1.msra.mxu0 %v91
    %2690 = vmatprep.subr.mxu0 %v95
    %2691 = vmatpush1.msra.mxu0 %v94
    %2692 = vmatprep.subr.mxu0 %v98
    %2693 = vmatpush1.msra.mxu0 %v97
    %2694 = vmatprep.subr.mxu0 %v101
    %2695 = vmatpush1.msra.mxu0 %v100
    %2696 = vmatprep.subr.mxu0 %v104
    %2697 = vmatpush1.msra.mxu0 %v103
    %2698 = vmatprep.subr.mxu0 %v107
    %2699 = vmatpush1.msra.mxu0 %v106
    %2700 = vmatprep.subr.mxu0 %v110
    %2701 = vmatpush1.msra.mxu0 %v109
    %2702 = vmatprep.subr.mxu0 %v113
    %2703 = vmatpush1.msra.mxu0 %v112
    %2704 = vmatprep.subr.mxu0 %v116
    %2705 = vmatpush1.msra.mxu0 %v115
    %2706 = vmatprep.subr.mxu0 %v119
    %2707 = vmatpush1.msra.mxu0 %v118
    %2708 = vmatprep.subr.mxu0 %v122
    %2709 = vmatpush1.msra.mxu0 %v121
    %2710 = vmatprep.subr.mxu0 0.0
    %2711 = vmatpush1.msra.mxu0 0.0
    %2712 = vmatprep.subr.mxu0 0.0
    %2713 = vmatpush1.msra.mxu0 0.0
    %2714 = vmatprep.subr.mxu0 0.0
    %2715 = vmatpush1.msra.mxu0 0.0
    %2716 = vmatprep.subr.mxu0 0.0
    %2717 = vmatpush1.msra.mxu0 0.0
    %2718 = vmatprep.subr.mxu0 0.0
    %2719 = vmatpush1.msra.mxu0 0.0
    %2720 = vmatprep.subr.mxu0 0.0
    %2721 = vmatpush1.msra.mxu0 0.0
    %2722 = vmatprep.subr.mxu0 0.0
    %2723 = vmatpush1.msra.mxu0 0.0
    %2724 = vmatprep.subr.mxu0 0.0
    %2725 = vmatpush1.msra.mxu0 0.0
    %2726 = vmatprep.subr.mxu0 0.0
    %2727 = vmatpush1.msra.mxu0 0.0
    %2728 = vmatprep.subr.mxu0 0.0
    %2729 = vmatpush1.msra.mxu0 0.0
    %2730 = vmatprep.subr.mxu0 0.0
    %2731 = vmatpush1.msra.mxu0 0.0
    %2732 = vmatprep.subr.mxu0 0.0
    %2733 = vmatpush1.msra.mxu0 0.0
    %2734 = vmatprep.subr.mxu0 0.0
    %2735 = vmatpush1.msra.mxu0 0.0
    %2736 = vmatprep.subr.mxu0 0.0
    %2737 = vmatpush1.msra.mxu0 0.0
    %2738 = vmatprep.subr.mxu0 0.0
    %2739 = vmatpush1.msra.mxu0 0.0
    %2740 = vmatprep.subr.mxu0 0.0
    %2741 = vmatpush1.msra.mxu0 0.0
    %2742 = vmatprep.mubr.f32.mxu0 0.0
    %2743 = vmatmul.mubr.f32.gmra.mrb[0].mxu0 %v2371
    %v2744 = vpop.f32.mrb[0].mxu0
    %v2745 = vadd.f32 %v231, %v2744
    %v2746 = vpop.f32.mrb[0].mxu0
    %v2747 = vadd.f32 %v235, %v2746
    %2748 = vdwg.mxu0
    %2749 = vmatprep.subr.mxu0 0.0
    %2750 = vmatpush1.msra.mxu0 %v78
    %2751 = vmatprep.subr.mxu0 0.0
    %2752 = vmatpush1.msra.mxu0 %v81
    %2753 = vmatprep.subr.mxu0 0.0
    %2754 = vmatpush1.msra.mxu0 %v84
    %2755 = vmatprep.subr.mxu0 0.0
    %2756 = vmatpush1.msra.mxu0 %v87
    %2757 = vmatprep.subr.mxu0 0.0
    %2758 = vmatpush1.msra.mxu0 %v90
    %2759 = vmatprep.subr.mxu0 0.0
    %2760 = vmatpush1.msra.mxu0 %v93
    %2761 = vmatprep.subr.mxu0 0.0
    %2762 = vmatpush1.msra.mxu0 %v96
    %2763 = vmatprep.subr.mxu0 0.0
    %2764 = vmatpush1.msra.mxu0 %v99
    %2765 = vmatprep.subr.mxu0 0.0
    %2766 = vmatpush1.msra.mxu0 %v102
    %2767 = vmatprep.subr.mxu0 0.0
    %2768 = vmatpush1.msra.mxu0 %v105
    %2769 = vmatprep.subr.mxu0 0.0
    %2770 = vmatpush1.msra.mxu0 %v108
    %2771 = vmatprep.subr.mxu0 0.0
    %2772 = vmatpush1.msra.mxu0 %v111
    %2773 = vmatprep.subr.mxu0 0.0
    %2774 = vmatpush1.msra.mxu0 %v114
    %2775 = vmatprep.subr.mxu0 0.0
    %2776 = vmatpush1.msra.mxu0 %v117
    %2777 = vmatprep.subr.mxu0 0.0
    %2778 = vmatpush1.msra.mxu0 %v120
    %2779 = vmatprep.subr.mxu0 0.0
    %2780 = vmatpush1.msra.mxu0 %v123
    %2781 = vmatprep.subr.mxu0 0.0
    %2782 = vmatpush1.msra.mxu0 0.0
    %2783 = vmatprep.subr.mxu0 0.0
    %2784 = vmatpush1.msra.mxu0 0.0
    %2785 = vmatprep.subr.mxu0 0.0
    %2786 = vmatpush1.msra.mxu0 0.0
    %2787 = vmatprep.subr.mxu0 0.0
    %2788 = vmatpush1.msra.mxu0 0.0
    %2789 = vmatprep.subr.mxu0 0.0
    %2790 = vmatpush1.msra.mxu0 0.0
    %2791 = vmatprep.subr.mxu0 0.0
    %2792 = vmatpush1.msra.mxu0 0.0
    %2793 = vmatprep.subr.mxu0 0.0
    %2794 = vmatpush1.msra.mxu0 0.0
    %2795 = vmatprep.subr.mxu0 0.0
    %2796 = vmatpush1.msra.mxu0 0.0
    %2797 = vmatprep.subr.mxu0 0.0
    %2798 = vmatpush1.msra.mxu0 0.0
    %2799 = vmatprep.subr.mxu0 0.0
    %2800 = vmatpush1.msra.mxu0 0.0
    %2801 = vmatprep.subr.mxu0 0.0
    %2802 = vmatpush1.msra.mxu0 0.0
    %2803 = vmatprep.subr.mxu0 0.0
    %2804 = vmatpush1.msra.mxu0 0.0
    %2805 = vmatprep.subr.mxu0 0.0
    %2806 = vmatpush1.msra.mxu0 0.0
    %2807 = vmatprep.subr.mxu0 0.0
    %2808 = vmatpush1.msra.mxu0 0.0
    %2809 = vmatprep.subr.mxu0 0.0
    %2810 = vmatpush1.msra.mxu0 0.0
    %2811 = vmatprep.subr.mxu0 0.0
    %2812 = vmatpush1.msra.mxu0 0.0
    %2813 = vmatprep.mubr.f32.mxu0 0.0
    %2814 = vmatmul.mubr.f32.gmra.mrb[0].mxu0 %v2371
    %v2815 = vpop.f32.mrb[0].mxu0
    %v2816 = vadd.f32 %v239, %v2815
    %v2817 = vpop.f32.mrb[0].mxu0
    %2818 = vdwg.mxu0
    %v2819 = vadd.f32 %v2604, %v2745
    %v2820 = vxor.u32 %v2819, 2147483648
    %v2821 = vmul.f32 %v2820, 1.442695
    %v2822 = vpow.pop %v2821
    %v2823 = vadd.f32 %v2822, 1.0
    %v2824 = vrcp.pop %v2823
    %v2825 = vmul.f32 1.0, %v2824
    %v2826 = vadd.f32 %v2606, %v2747
    %v2827 = vxor.u32 %v2826, 2147483648
    %v2828 = vmul.f32 %v2827, 1.442695
    %v2829 = vpow.pop %v2828
    %v2830 = vadd.f32 %v2829, 1.0
    %v2831 = vrcp.pop %v2830
    %v2832 = vmul.f32 1.0, %v2831
    %v2833 = vmul.f32 %v2825, %v2816
    %v2834 = vadd.f32 %v2675, %v2833
    %v2835 = vtanh.pop %v2834
    %v2836 = vsub.f32 1.0, %v2832
    %v2837 = vmul.f32 %v2836, %v2835
    %v2838 = vmul.f32 %v2832, %v2371
    %v2839 = vadd.f32 %v2837, %v2838
    %v2840 = vadd.f32 %v379, %v177
    %v2841 = vadd.f32 %v381, %v181
    %v2842 = vadd.f32 %v487, %v185
    %2843 = vmatprep.subr.mxu0 %v28
    %2844 = vmatpush1.msra.mxu0 %v27
    %2845 = vmatprep.subr.mxu0 %v31
    %2846 = vmatpush1.msra.mxu0 %v30
    %2847 = vmatprep.subr.mxu0 %v34
    %2848 = vmatpush1.msra.mxu0 %v33
    %2849 = vmatprep.subr.mxu0 %v37
    %2850 = vmatpush1.msra.mxu0 %v36
    %2851 = vmatprep.subr.mxu0 %v40
    %2852 = vmatpush1.msra.mxu0 %v39
    %2853 = vmatprep.subr.mxu0 %v43
    %2854 = vmatpush1.msra.mxu0 %v42
    %2855 = vmatprep.subr.mxu0 %v46
    %2856 = vmatpush1.msra.mxu0 %v45
    %2857 = vmatprep.subr.mxu0 %v49
    %2858 = vmatpush1.msra.mxu0 %v48
    %2859 = vmatprep.subr.mxu0 %v52
    %2860 = vmatpush1.msra.mxu0 %v51
    %2861 = vmatprep.subr.mxu0 %v55
    %2862 = vmatpush1.msra.mxu0 %v54
    %2863 = vmatprep.subr.mxu0 %v58
    %2864 = vmatpush1.msra.mxu0 %v57
    %2865 = vmatprep.subr.mxu0 %v61
    %2866 = vmatpush1.msra.mxu0 %v60
    %2867 = vmatprep.subr.mxu0 %v64
    %2868 = vmatpush1.msra.mxu0 %v63
    %2869 = vmatprep.subr.mxu0 %v67
    %2870 = vmatpush1.msra.mxu0 %v66
    %2871 = vmatprep.subr.mxu0 %v70
    %2872 = vmatpush1.msra.mxu0 %v69
    %2873 = vmatprep.subr.mxu0 %v73
    %2874 = vmatpush1.msra.mxu0 %v72
    %2875 = vmatprep.subr.mxu0 0.0
    %2876 = vmatpush1.msra.mxu0 0.0
    %2877 = vmatprep.subr.mxu0 0.0
    %2878 = vmatpush1.msra.mxu0 0.0
    %2879 = vmatprep.subr.mxu0 0.0
    %2880 = vmatpush1.msra.mxu0 0.0
    %2881 = vmatprep.subr.mxu0 0.0
    %2882 = vmatpush1.msra.mxu0 0.0
    %2883 = vmatprep.subr.mxu0 0.0
    %2884 = vmatpush1.msra.mxu0 0.0
    %2885 = vmatprep.subr.mxu0 0.0
    %2886 = vmatpush1.msra.mxu0 0.0
    %2887 = vmatprep.subr.mxu0 0.0
    %2888 = vmatpush1.msra.mxu0 0.0
    %2889 = vmatprep.subr.mxu0 0.0
    %2890 = vmatpush1.msra.mxu0 0.0
    %2891 = vmatprep.subr.mxu0 0.0
    %2892 = vmatpush1.msra.mxu0 0.0
    %2893 = vmatprep.subr.mxu0 0.0
    %2894 = vmatpush1.msra.mxu0 0.0
    %2895 = vmatprep.subr.mxu0 0.0
    %2896 = vmatpush1.msra.mxu0 0.0
    %2897 = vmatprep.subr.mxu0 0.0
    %2898 = vmatpush1.msra.mxu0 0.0
    %2899 = vmatprep.subr.mxu0 0.0
    %2900 = vmatpush1.msra.mxu0 0.0
    %2901 = vmatprep.subr.mxu0 0.0
    %2902 = vmatpush1.msra.mxu0 0.0
    %2903 = vmatprep.subr.mxu0 0.0
    %2904 = vmatpush1.msra.mxu0 0.0
    %2905 = vmatprep.subr.mxu0 0.0
    %2906 = vmatpush1.msra.mxu0 0.0
    %2907 = vmatprep.mubr.f32.mxu0 0.0
    %2908 = vmatmul.mubr.f32.gmra.mrb[0].mxu0 %v2536
    %v2909 = vpop.f32.mrb[0].mxu0
    %v2910 = vadd.f32 %v213, %v2909
    %v2911 = vpop.f32.mrb[0].mxu0
    %v2912 = vadd.f32 %v217, %v2911
    %2913 = vdwg.mxu0
    %2914 = vmatprep.subr.mxu0 0.0
    %2915 = vmatpush1.msra.mxu0 %v29
    %2916 = vmatprep.subr.mxu0 0.0
    %2917 = vmatpush1.msra.mxu0 %v32
    %2918 = vmatprep.subr.mxu0 0.0
    %2919 = vmatpush1.msra.mxu0 %v35
    %2920 = vmatprep.subr.mxu0 0.0
    %2921 = vmatpush1.msra.mxu0 %v38
    %2922 = vmatprep.subr.mxu0 0.0
    %2923 = vmatpush1.msra.mxu0 %v41
    %2924 = vmatprep.subr.mxu0 0.0
    %2925 = vmatpush1.msra.mxu0 %v44
    %2926 = vmatprep.subr.mxu0 0.0
    %2927 = vmatpush1.msra.mxu0 %v47
    %2928 = vmatprep.subr.mxu0 0.0
    %2929 = vmatpush1.msra.mxu0 %v50
    %2930 = vmatprep.subr.mxu0 0.0
    %2931 = vmatpush1.msra.mxu0 %v53
    %2932 = vmatprep.subr.mxu0 0.0
    %2933 = vmatpush1.msra.mxu0 %v56
    %2934 = vmatprep.subr.mxu0 0.0
    %2935 = vmatpush1.msra.mxu0 %v59
    %2936 = vmatprep.subr.mxu0 0.0
    %2937 = vmatpush1.msra.mxu0 %v62
    %2938 = vmatprep.subr.mxu0 0.0
    %2939 = vmatpush1.msra.mxu0 %v65
    %2940 = vmatprep.subr.mxu0 0.0
    %2941 = vmatpush1.msra.mxu0 %v68
    %2942 = vmatprep.subr.mxu0 0.0
    %2943 = vmatpush1.msra.mxu0 %v71
    %2944 = vmatprep.subr.mxu0 0.0
    %2945 = vmatpush1.msra.mxu0 %v74
    %2946 = vmatprep.subr.mxu0 0.0
    %2947 = vmatpush1.msra.mxu0 0.0
    %2948 = vmatprep.subr.mxu0 0.0
    %2949 = vmatpush1.msra.mxu0 0.0
    %2950 = vmatprep.subr.mxu0 0.0
    %2951 = vmatpush1.msra.mxu0 0.0
    %2952 = vmatprep.subr.mxu0 0.0
    %2953 = vmatpush1.msra.mxu0 0.0
    %2954 = vmatprep.subr.mxu0 0.0
    %2955 = vmatpush1.msra.mxu0 0.0
    %2956 = vmatprep.subr.mxu0 0.0
    %2957 = vmatpush1.msra.mxu0 0.0
    %2958 = vmatprep.subr.mxu0 0.0
    %2959 = vmatpush1.msra.mxu0 0.0
    %2960 = vmatprep.subr.mxu0 0.0
    %2961 = vmatpush1.msra.mxu0 0.0
    %2962 = vmatprep.subr.mxu0 0.0
    %2963 = vmatpush1.msra.mxu0 0.0
    %2964 = vmatprep.subr.mxu0 0.0
    %2965 = vmatpush1.msra.mxu0 0.0
    %2966 = vmatprep.subr.mxu0 0.0
    %2967 = vmatpush1.msra.mxu0 0.0
    %2968 = vmatprep.subr.mxu0 0.0
    %2969 = vmatpush1.msra.mxu0 0.0
    %2970 = vmatprep.subr.mxu0 0.0
    %2971 = vmatpush1.msra.mxu0 0.0
    %2972 = vmatprep.subr.mxu0 0.0
    %2973 = vmatpush1.msra.mxu0 0.0
    %2974 = vmatprep.subr.mxu0 0.0
    %2975 = vmatpush1.msra.mxu0 0.0
    %2976 = vmatprep.subr.mxu0 0.0
    %2977 = vmatpush1.msra.mxu0 0.0
    %2978 = vmatprep.mubr.f32.mxu0 0.0
    %2979 = vmatmul.mubr.f32.gmra.mrb[0].mxu0 %v2536
    %v2980 = vpop.f32.mrb[0].mxu0
    %v2981 = vadd.f32 %v221, %v2980
    %v2982 = vpop.f32.mrb[0].mxu0
    %2983 = vdwg.mxu0
    %v2984 = vadd.f32 %v2840, %v2910
    %v2985 = vxor.u32 %v2984, 2147483648
    %v2986 = vmul.f32 %v2985, 1.442695
    %v2987 = vpow.pop %v2986
    %v2988 = vadd.f32 %v2987, 1.0
    %v2989 = vrcp.pop %v2988
    %v2990 = vmul.f32 1.0, %v2989
    %v2991 = vadd.f32 %v2841, %v2912
    %v2992 = vxor.u32 %v2991, 2147483648
    %v2993 = vmul.f32 %v2992, 1.442695
    %v2994 = vpow.pop %v2993
    %v2995 = vadd.f32 %v2994, 1.0
    %v2996 = vrcp.pop %v2995
    %v2997 = vmul.f32 1.0, %v2996
    %v2998 = vmul.f32 %v2990, %v2981
    %v2999 = vadd.f32 %v2842, %v2998
    %v3000 = vtanh.pop %v2999
    %v3001 = vsub.f32 1.0, %v2997
    %v3002 = vmul.f32 %v3001, %v3000
    %v3003 = vmul.f32 %v2997, %v2536
    %v3004 = vadd.f32 %v3002, %v3003
    %3005 = vmatprep.subr.mxu0 %v125
    %3006 = vmatpush1.msra.mxu0 %v124
    %3007 = vmatprep.subr.mxu0 %v128
    %3008 = vmatpush1.msra.mxu0 %v127
    %3009 = vmatprep.subr.mxu0 %v131
    %3010 = vmatpush1.msra.mxu0 %v130
    %3011 = vmatprep.subr.mxu0 %v134
    %3012 = vmatpush1.msra.mxu0 %v133
    %3013 = vmatprep.subr.mxu0 %v137
    %3014 = vmatpush1.msra.mxu0 %v136
    %3015 = vmatprep.subr.mxu0 %v140
    %3016 = vmatpush1.msra.mxu0 %v139
    %3017 = vmatprep.subr.mxu0 %v143
    %3018 = vmatpush1.msra.mxu0 %v142
    %3019 = vmatprep.subr.mxu0 %v146
    %3020 = vmatpush1.msra.mxu0 %v145
    %3021 = vmatprep.subr.mxu0 %v149
    %3022 = vmatpush1.msra.mxu0 %v148
    %3023 = vmatprep.subr.mxu0 %v152
    %3024 = vmatpush1.msra.mxu0 %v151
    %3025 = vmatprep.subr.mxu0 %v155
    %3026 = vmatpush1.msra.mxu0 %v154
    %3027 = vmatprep.subr.mxu0 %v158
    %3028 = vmatpush1.msra.mxu0 %v157
    %3029 = vmatprep.subr.mxu0 %v161
    %3030 = vmatpush1.msra.mxu0 %v160
    %3031 = vmatprep.subr.mxu0 %v164
    %3032 = vmatpush1.msra.mxu0 %v163
    %3033 = vmatprep.subr.mxu0 %v167
    %3034 = vmatpush1.msra.mxu0 %v166
    %3035 = vmatprep.subr.mxu0 %v170
    %3036 = vmatpush1.msra.mxu0 %v169
    %3037 = vmatprep.subr.mxu0 0.0
    %3038 = vmatpush1.msra.mxu0 0.0
    %3039 = vmatprep.subr.mxu0 0.0
    %3040 = vmatpush1.msra.mxu0 0.0
    %3041 = vmatprep.subr.mxu0 0.0
    %3042 = vmatpush1.msra.mxu0 0.0
    %3043 = vmatprep.subr.mxu0 0.0
    %3044 = vmatpush1.msra.mxu0 0.0
    %3045 = vmatprep.subr.mxu0 0.0
    %3046 = vmatpush1.msra.mxu0 0.0
    %3047 = vmatprep.subr.mxu0 0.0
    %3048 = vmatpush1.msra.mxu0 0.0
    %3049 = vmatprep.subr.mxu0 0.0
    %3050 = vmatpush1.msra.mxu0 0.0
    %3051 = vmatprep.subr.mxu0 0.0
    %3052 = vmatpush1.msra.mxu0 0.0
    %3053 = vmatprep.subr.mxu0 0.0
    %3054 = vmatpush1.msra.mxu0 0.0
    %3055 = vmatprep.subr.mxu0 0.0
    %3056 = vmatpush1.msra.mxu0 0.0
    %3057 = vmatprep.subr.mxu0 0.0
    %3058 = vmatpush1.msra.mxu0 0.0
    %3059 = vmatprep.subr.mxu0 0.0
    %3060 = vmatpush1.msra.mxu0 0.0
    %3061 = vmatprep.subr.mxu0 0.0
    %3062 = vmatpush1.msra.mxu0 0.0
    %3063 = vmatprep.subr.mxu0 0.0
    %3064 = vmatpush1.msra.mxu0 0.0
    %3065 = vmatprep.subr.mxu0 0.0
    %3066 = vmatpush1.msra.mxu0 0.0
    %3067 = vmatprep.subr.mxu0 0.0
    %3068 = vmatpush1.msra.mxu0 0.0
    %3069 = vmatprep.mubr.f32.mxu0 0.0
    %3070 = vmatmul.mubr.f32.gmra.mrb[0].mxu0 %v3004
    %v3071 = vpop.f32.mrb[0].mxu0
    %v3072 = vadd.f32 %v195, %v3071
    %v3073 = vpop.f32.mrb[0].mxu0
    %v3074 = vadd.f32 %v199, %v3073
    %3075 = vdwg.mxu0
    %3076 = vmatprep.subr.mxu0 0.0
    %3077 = vmatpush1.msra.mxu0 %v126
    %3078 = vmatprep.subr.mxu0 0.0
    %3079 = vmatpush1.msra.mxu0 %v129
    %3080 = vmatprep.subr.mxu0 0.0
    %3081 = vmatpush1.msra.mxu0 %v132
    %3082 = vmatprep.subr.mxu0 0.0
    %3083 = vmatpush1.msra.mxu0 %v135
    %3084 = vmatprep.subr.mxu0 0.0
    %3085 = vmatpush1.msra.mxu0 %v138
    %3086 = vmatprep.subr.mxu0 0.0
    %3087 = vmatpush1.msra.mxu0 %v141
    %3088 = vmatprep.subr.mxu0 0.0
    %3089 = vmatpush1.msra.mxu0 %v144
    %3090 = vmatprep.subr.mxu0 0.0
    %3091 = vmatpush1.msra.mxu0 %v147
    %3092 = vmatprep.subr.mxu0 0.0
    %3093 = vmatpush1.msra.mxu0 %v150
    %3094 = vmatprep.subr.mxu0 0.0
    %3095 = vmatpush1.msra.mxu0 %v153
    %3096 = vmatprep.subr.mxu0 0.0
    %3097 = vmatpush1.msra.mxu0 %v156
    %3098 = vmatprep.subr.mxu0 0.0
    %3099 = vmatpush1.msra.mxu0 %v159
    %3100 = vmatprep.subr.mxu0 0.0
    %3101 = vmatpush1.msra.mxu0 %v162
    %3102 = vmatprep.subr.mxu0 0.0
    %3103 = vmatpush1.msra.mxu0 %v165
    %3104 = vmatprep.subr.mxu0 0.0
    %3105 = vmatpush1.msra.mxu0 %v168
    %3106 = vmatprep.subr.mxu0 0.0
    %3107 = vmatpush1.msra.mxu0 %v171
    %3108 = vmatprep.subr.mxu0 0.0
    %3109 = vmatpush1.msra.mxu0 0.0
    %3110 = vmatprep.subr.mxu0 0.0
    %3111 = vmatpush1.msra.mxu0 0.0
    %3112 = vmatprep.subr.mxu0 0.0
    %3113 = vmatpush1.msra.mxu0 0.0
    %3114 = vmatprep.subr.mxu0 0.0
    %3115 = vmatpush1.msra.mxu0 0.0
    %3116 = vmatprep.subr.mxu0 0.0
    %3117 = vmatpush1.msra.mxu0 0.0
    %3118 = vmatprep.subr.mxu0 0.0
    %3119 = vmatpush1.msra.mxu0 0.0
    %3120 = vmatprep.subr.mxu0 0.0
    %3121 = vmatpush1.msra.mxu0 0.0
    %3122 = vmatprep.subr.mxu0 0.0
    %3123 = vmatpush1.msra.mxu0 0.0
    %3124 = vmatprep.subr.mxu0 0.0
    %3125 = vmatpush1.msra.mxu0 0.0
    %3126 = vmatprep.subr.mxu0 0.0
    %3127 = vmatpush1.msra.mxu0 0.0
    %3128 = vmatprep.subr.mxu0 0.0
    %3129 = vmatpush1.msra.mxu0 0.0
    %3130 = vmatprep.subr.mxu0 0.0
    %3131 = vmatpush1.msra.mxu0 0.0
    %3132 = vmatprep.subr.mxu0 0.0
    %3133 = vmatpush1.msra.mxu0 0.0
    %3134 = vmatprep.subr.mxu0 0.0
    %3135 = vmatpush1.msra.mxu0 0.0
    %3136 = vmatprep.subr.mxu0 0.0
    %3137 = vmatpush1.msra.mxu0 0.0
    %3138 = vmatprep.subr.mxu0 0.0
    %3139 = vmatpush1.msra.mxu0 0.0
    %3140 = vmatprep.mubr.f32.mxu0 0.0
    %3141 = vmatmul.mubr.f32.gmra.mrb[0].mxu0 %v3004
    %v3142 = vpop.f32.mrb[0].mxu0
    %v3143 = vadd.f32 %v203, %v3142
    %v3144 = vpop.f32.mrb[0].mxu0
    %3145 = vdwg.mxu0
    %3146 = vmatprep.subr.mxu0 %v77
    %3147 = vmatpush1.msra.mxu0 %v76
    %3148 = vmatprep.subr.mxu0 %v80
    %3149 = vmatpush1.msra.mxu0 %v79
    %3150 = vmatprep.subr.mxu0 %v83
    %3151 = vmatpush1.msra.mxu0 %v82
    %3152 = vmatprep.subr.mxu0 %v86
    %3153 = vmatpush1.msra.mxu0 %v85
    %3154 = vmatprep.subr.mxu0 %v89
    %3155 = vmatpush1.msra.mxu0 %v88
    %3156 = vmatprep.subr.mxu0 %v92
    %3157 = vmatpush1.msra.mxu0 %v91
    %3158 = vmatprep.subr.mxu0 %v95
    %3159 = vmatpush1.msra.mxu0 %v94
    %3160 = vmatprep.subr.mxu0 %v98
    %3161 = vmatpush1.msra.mxu0 %v97
    %3162 = vmatprep.subr.mxu0 %v101
    %3163 = vmatpush1.msra.mxu0 %v100
    %3164 = vmatprep.subr.mxu0 %v104
    %3165 = vmatpush1.msra.mxu0 %v103
    %3166 = vmatprep.subr.mxu0 %v107
    %3167 = vmatpush1.msra.mxu0 %v106
    %3168 = vmatprep.subr.mxu0 %v110
    %3169 = vmatpush1.msra.mxu0 %v109
    %3170 = vmatprep.subr.mxu0 %v113
    %3171 = vmatpush1.msra.mxu0 %v112
    %3172 = vmatprep.subr.mxu0 %v116
    %3173 = vmatpush1.msra.mxu0 %v115
    %3174 = vmatprep.subr.mxu0 %v119
    %3175 = vmatpush1.msra.mxu0 %v118
    %3176 = vmatprep.subr.mxu0 %v122
    %3177 = vmatpush1.msra.mxu0 %v121
    %3178 = vmatprep.subr.mxu0 0.0
    %3179 = vmatpush1.msra.mxu0 0.0
    %3180 = vmatprep.subr.mxu0 0.0
    %3181 = vmatpush1.msra.mxu0 0.0
    %3182 = vmatprep.subr.mxu0 0.0
    %3183 = vmatpush1.msra.mxu0 0.0
    %3184 = vmatprep.subr.mxu0 0.0
    %3185 = vmatpush1.msra.mxu0 0.0
    %3186 = vmatprep.subr.mxu0 0.0
    %3187 = vmatpush1.msra.mxu0 0.0
    %3188 = vmatprep.subr.mxu0 0.0
    %3189 = vmatpush1.msra.mxu0 0.0
    %3190 = vmatprep.subr.mxu0 0.0
    %3191 = vmatpush1.msra.mxu0 0.0
    %3192 = vmatprep.subr.mxu0 0.0
    %3193 = vmatpush1.msra.mxu0 0.0
    %3194 = vmatprep.subr.mxu0 0.0
    %3195 = vmatpush1.msra.mxu0 0.0
    %3196 = vmatprep.subr.mxu0 0.0
    %3197 = vmatpush1.msra.mxu0 0.0
    %3198 = vmatprep.subr.mxu0 0.0
    %3199 = vmatpush1.msra.mxu0 0.0
    %3200 = vmatprep.subr.mxu0 0.0
    %3201 = vmatpush1.msra.mxu0 0.0
    %3202 = vmatprep.subr.mxu0 0.0
    %3203 = vmatpush1.msra.mxu0 0.0
    %3204 = vmatprep.subr.mxu0 0.0
    %3205 = vmatpush1.msra.mxu0 0.0
    %3206 = vmatprep.subr.mxu0 0.0
    %3207 = vmatpush1.msra.mxu0 0.0
    %3208 = vmatprep.subr.mxu0 0.0
    %3209 = vmatpush1.msra.mxu0 0.0
    %3210 = vmatprep.mubr.f32.mxu0 0.0
    %3211 = vmatmul.mubr.f32.gmra.mrb[0].mxu0 %v2839
    %v3212 = vpop.f32.mrb[0].mxu0
    %v3213 = vadd.f32 %v231, %v3212
    %v3214 = vpop.f32.mrb[0].mxu0
    %v3215 = vadd.f32 %v235, %v3214
    %3216 = vdwg.mxu0
    %3217 = vmatprep.subr.mxu0 0.0
    %3218 = vmatpush1.msra.mxu0 %v78
    %3219 = vmatprep.subr.mxu0 0.0
    %3220 = vmatpush1.msra.mxu0 %v81
    %3221 = vmatprep.subr.mxu0 0.0
    %3222 = vmatpush1.msra.mxu0 %v84
    %3223 = vmatprep.subr.mxu0 0.0
    %3224 = vmatpush1.msra.mxu0 %v87
    %3225 = vmatprep.subr.mxu0 0.0
    %3226 = vmatpush1.msra.mxu0 %v90
    %3227 = vmatprep.subr.mxu0 0.0
    %3228 = vmatpush1.msra.mxu0 %v93
    %3229 = vmatprep.subr.mxu0 0.0
    %3230 = vmatpush1.msra.mxu0 %v96
    %3231 = vmatprep.subr.mxu0 0.0
    %3232 = vmatpush1.msra.mxu0 %v99
    %3233 = vmatprep.subr.mxu0 0.0
    %3234 = vmatpush1.msra.mxu0 %v102
    %3235 = vmatprep.subr.mxu0 0.0
    %3236 = vmatpush1.msra.mxu0 %v105
    %3237 = vmatprep.subr.mxu0 0.0
    %3238 = vmatpush1.msra.mxu0 %v108
    %3239 = vmatprep.subr.mxu0 0.0
    %3240 = vmatpush1.msra.mxu0 %v111
    %3241 = vmatprep.subr.mxu0 0.0
    %3242 = vmatpush1.msra.mxu0 %v114
    %3243 = vmatprep.subr.mxu0 0.0
    %3244 = vmatpush1.msra.mxu0 %v117
    %3245 = vmatprep.subr.mxu0 0.0
    %3246 = vmatpush1.msra.mxu0 %v120
    %3247 = vmatprep.subr.mxu0 0.0
    %3248 = vmatpush1.msra.mxu0 %v123
    %3249 = vmatprep.subr.mxu0 0.0
    %3250 = vmatpush1.msra.mxu0 0.0
    %3251 = vmatprep.subr.mxu0 0.0
    %3252 = vmatpush1.msra.mxu0 0.0
    %3253 = vmatprep.subr.mxu0 0.0
    %3254 = vmatpush1.msra.mxu0 0.0
    %3255 = vmatprep.subr.mxu0 0.0
    %3256 = vmatpush1.msra.mxu0 0.0
    %3257 = vmatprep.subr.mxu0 0.0
    %3258 = vmatpush1.msra.mxu0 0.0
    %3259 = vmatprep.subr.mxu0 0.0
    %3260 = vmatpush1.msra.mxu0 0.0
    %3261 = vmatprep.subr.mxu0 0.0
    %3262 = vmatpush1.msra.mxu0 0.0
    %3263 = vmatprep.subr.mxu0 0.0
    %3264 = vmatpush1.msra.mxu0 0.0
    %3265 = vmatprep.subr.mxu0 0.0
    %3266 = vmatpush1.msra.mxu0 0.0
    %3267 = vmatprep.subr.mxu0 0.0
    %3268 = vmatpush1.msra.mxu0 0.0
    %3269 = vmatprep.subr.mxu0 0.0
    %3270 = vmatpush1.msra.mxu0 0.0
    %3271 = vmatprep.subr.mxu0 0.0
    %3272 = vmatpush1.msra.mxu0 0.0
    %3273 = vmatprep.subr.mxu0 0.0
    %3274 = vmatpush1.msra.mxu0 0.0
    %3275 = vmatprep.subr.mxu0 0.0
    %3276 = vmatpush1.msra.mxu0 0.0
    %3277 = vmatprep.subr.mxu0 0.0
    %3278 = vmatpush1.msra.mxu0 0.0
    %3279 = vmatprep.subr.mxu0 0.0
    %3280 = vmatpush1.msra.mxu0 0.0
    %3281 = vmatprep.mubr.f32.mxu0 0.0
    %3282 = vmatmul.mubr.f32.gmra.mrb[0].mxu0 %v2839
    %v3283 = vpop.f32.mrb[0].mxu0
    %v3284 = vadd.f32 %v239, %v3283
    %v3285 = vpop.f32.mrb[0].mxu0
    %3286 = vdwg.mxu0
    %v3287 = vadd.f32 %v3072, %v3213
    %v3288 = vxor.u32 %v3287, 2147483648
    %v3289 = vmul.f32 %v3288, 1.442695
    %v3290 = vpow.pop %v3289
    %v3291 = vadd.f32 %v3290, 1.0
    %v3292 = vrcp.pop %v3291
    %v3293 = vmul.f32 1.0, %v3292
    %v3294 = vadd.f32 %v3074, %v3215
    %v3295 = vxor.u32 %v3294, 2147483648
    %v3296 = vmul.f32 %v3295, 1.442695
    %v3297 = vpow.pop %v3296
    %v3298 = vadd.f32 %v3297, 1.0
    %v3299 = vrcp.pop %v3298
    %v3300 = vmul.f32 1.0, %v3299
    %v3301 = vmul.f32 %v3293, %v3284
    %v3302 = vadd.f32 %v3143, %v3301
    %v3303 = vtanh.pop %v3302
    %v3304 = vsub.f32 1.0, %v3300
    %v3305 = vmul.f32 %v3304, %v3303
    %v3306 = vmul.f32 %v3300, %v2839
    %v3307 = vadd.f32 %v3305, %v3306
    %v3308 = vadd.f32 %v385, %v177
    %v3309 = vadd.f32 %v387, %v181
    %v3310 = vadd.f32 %v492, %v185
    %3311 = vmatprep.subr.mxu0 %v28
    %3312 = vmatpush1.msra.mxu0 %v27
    %3313 = vmatprep.subr.mxu0 %v31
    %3314 = vmatpush1.msra.mxu0 %v30
    %3315 = vmatprep.subr.mxu0 %v34
    %3316 = vmatpush1.msra.mxu0 %v33
    %3317 = vmatprep.subr.mxu0 %v37
    %3318 = vmatpush1.msra.mxu0 %v36
    %3319 = vmatprep.subr.mxu0 %v40
    %3320 = vmatpush1.msra.mxu0 %v39
    %3321 = vmatprep.subr.mxu0 %v43
    %3322 = vmatpush1.msra.mxu0 %v42
    %3323 = vmatprep.subr.mxu0 %v46
    %3324 = vmatpush1.msra.mxu0 %v45
    %3325 = vmatprep.subr.mxu0 %v49
    %3326 = vmatpush1.msra.mxu0 %v48
    %3327 = vmatprep.subr.mxu0 %v52
    %3328 = vmatpush1.msra.mxu0 %v51
    %3329 = vmatprep.subr.mxu0 %v55
    %3330 = vmatpush1.msra.mxu0 %v54
    %3331 = vmatprep.subr.mxu0 %v58
    %3332 = vmatpush1.msra.mxu0 %v57
    %3333 = vmatprep.subr.mxu0 %v61
    %3334 = vmatpush1.msra.mxu0 %v60
    %3335 = vmatprep.subr.mxu0 %v64
    %3336 = vmatpush1.msra.mxu0 %v63
    %3337 = vmatprep.subr.mxu0 %v67
    %3338 = vmatpush1.msra.mxu0 %v66
    %3339 = vmatprep.subr.mxu0 %v70
    %3340 = vmatpush1.msra.mxu0 %v69
    %3341 = vmatprep.subr.mxu0 %v73
    %3342 = vmatpush1.msra.mxu0 %v72
    %3343 = vmatprep.subr.mxu0 0.0
    %3344 = vmatpush1.msra.mxu0 0.0
    %3345 = vmatprep.subr.mxu0 0.0
    %3346 = vmatpush1.msra.mxu0 0.0
    %3347 = vmatprep.subr.mxu0 0.0
    %3348 = vmatpush1.msra.mxu0 0.0
    %3349 = vmatprep.subr.mxu0 0.0
    %3350 = vmatpush1.msra.mxu0 0.0
    %3351 = vmatprep.subr.mxu0 0.0
    %3352 = vmatpush1.msra.mxu0 0.0
    %3353 = vmatprep.subr.mxu0 0.0
    %3354 = vmatpush1.msra.mxu0 0.0
    %3355 = vmatprep.subr.mxu0 0.0
    %3356 = vmatpush1.msra.mxu0 0.0
    %3357 = vmatprep.subr.mxu0 0.0
    %3358 = vmatpush1.msra.mxu0 0.0
    %3359 = vmatprep.subr.mxu0 0.0
    %3360 = vmatpush1.msra.mxu0 0.0
    %3361 = vmatprep.subr.mxu0 0.0
    %3362 = vmatpush1.msra.mxu0 0.0
    %3363 = vmatprep.subr.mxu0 0.0
    %3364 = vmatpush1.msra.mxu0 0.0
    %3365 = vmatprep.subr.mxu0 0.0
    %3366 = vmatpush1.msra.mxu0 0.0
    %3367 = vmatprep.subr.mxu0 0.0
    %3368 = vmatpush1.msra.mxu0 0.0
    %3369 = vmatprep.subr.mxu0 0.0
    %3370 = vmatpush1.msra.mxu0 0.0
    %3371 = vmatprep.subr.mxu0 0.0
    %3372 = vmatpush1.msra.mxu0 0.0
    %3373 = vmatprep.subr.mxu0 0.0
    %3374 = vmatpush1.msra.mxu0 0.0
    %3375 = vmatprep.mubr.f32.mxu0 0.0
    %3376 = vmatmul.mubr.f32.gmra.mrb[0].mxu0 %v3004
    %v3377 = vpop.f32.mrb[0].mxu0
    %v3378 = vadd.f32 %v213, %v3377
    %v3379 = vpop.f32.mrb[0].mxu0
    %v3380 = vadd.f32 %v217, %v3379
    %3381 = vdwg.mxu0
    %3382 = vmatprep.subr.mxu0 0.0
    %3383 = vmatpush1.msra.mxu0 %v29
    %3384 = vmatprep.subr.mxu0 0.0
    %3385 = vmatpush1.msra.mxu0 %v32
    %3386 = vmatprep.subr.mxu0 0.0
    %3387 = vmatpush1.msra.mxu0 %v35
    %3388 = vmatprep.subr.mxu0 0.0
    %3389 = vmatpush1.msra.mxu0 %v38
    %3390 = vmatprep.subr.mxu0 0.0
    %3391 = vmatpush1.msra.mxu0 %v41
    %3392 = vmatprep.subr.mxu0 0.0
    %3393 = vmatpush1.msra.mxu0 %v44
    %3394 = vmatprep.subr.mxu0 0.0
    %3395 = vmatpush1.msra.mxu0 %v47
    %3396 = vmatprep.subr.mxu0 0.0
    %3397 = vmatpush1.msra.mxu0 %v50
    %3398 = vmatprep.subr.mxu0 0.0
    %3399 = vmatpush1.msra.mxu0 %v53
    %3400 = vmatprep.subr.mxu0 0.0
    %3401 = vmatpush1.msra.mxu0 %v56
    %3402 = vmatprep.subr.mxu0 0.0
    %3403 = vmatpush1.msra.mxu0 %v59
    %3404 = vmatprep.subr.mxu0 0.0
    %3405 = vmatpush1.msra.mxu0 %v62
    %3406 = vmatprep.subr.mxu0 0.0
    %3407 = vmatpush1.msra.mxu0 %v65
    %3408 = vmatprep.subr.mxu0 0.0
    %3409 = vmatpush1.msra.mxu0 %v68
    %3410 = vmatprep.subr.mxu0 0.0
    %3411 = vmatpush1.msra.mxu0 %v71
    %3412 = vmatprep.subr.mxu0 0.0
    %3413 = vmatpush1.msra.mxu0 %v74
    %3414 = vmatprep.subr.mxu0 0.0
    %3415 = vmatpush1.msra.mxu0 0.0
    %3416 = vmatprep.subr.mxu0 0.0
    %3417 = vmatpush1.msra.mxu0 0.0
    %3418 = vmatprep.subr.mxu0 0.0
    %3419 = vmatpush1.msra.mxu0 0.0
    %3420 = vmatprep.subr.mxu0 0.0
    %3421 = vmatpush1.msra.mxu0 0.0
    %3422 = vmatprep.subr.mxu0 0.0
    %3423 = vmatpush1.msra.mxu0 0.0
    %3424 = vmatprep.subr.mxu0 0.0
    %3425 = vmatpush1.msra.mxu0 0.0
    %3426 = vmatprep.subr.mxu0 0.0
    %3427 = vmatpush1.msra.mxu0 0.0
    %3428 = vmatprep.subr.mxu0 0.0
    %3429 = vmatpush1.msra.mxu0 0.0
    %3430 = vmatprep.subr.mxu0 0.0
    %3431 = vmatpush1.msra.mxu0 0.0
    %3432 = vmatprep.subr.mxu0 0.0
    %3433 = vmatpush1.msra.mxu0 0.0
    %3434 = vmatprep.subr.mxu0 0.0
    %3435 = vmatpush1.msra.mxu0 0.0
    %3436 = vmatprep.subr.mxu0 0.0
    %3437 = vmatpush1.msra.mxu0 0.0
    %3438 = vmatprep.subr.mxu0 0.0
    %3439 = vmatpush1.msra.mxu0 0.0
    %3440 = vmatprep.subr.mxu0 0.0
    %3441 = vmatpush1.msra.mxu0 0.0
    %3442 = vmatprep.subr.mxu0 0.0
    %3443 = vmatpush1.msra.mxu0 0.0
    %3444 = vmatprep.subr.mxu0 0.0
    %3445 = vmatpush1.msra.mxu0 0.0
    %3446 = vmatprep.mubr.f32.mxu0 0.0
    %3447 = vmatmul.mubr.f32.gmra.mrb[0].mxu0 %v3004
    %v3448 = vpop.f32.mrb[0].mxu0
    %v3449 = vadd.f32 %v221, %v3448
    %v3450 = vpop.f32.mrb[0].mxu0
    %3451 = vdwg.mxu0
    %v3452 = vadd.f32 %v3308, %v3378
    %v3453 = vxor.u32 %v3452, 2147483648
    %v3454 = vmul.f32 %v3453, 1.442695
    %v3455 = vpow.pop %v3454
    %v3456 = vadd.f32 %v3455, 1.0
    %v3457 = vrcp.pop %v3456
    %v3458 = vmul.f32 1.0, %v3457
    %v3459 = vadd.f32 %v3309, %v3380
    %v3460 = vxor.u32 %v3459, 2147483648
    %v3461 = vmul.f32 %v3460, 1.442695
    %v3462 = vpow.pop %v3461
    %v3463 = vadd.f32 %v3462, 1.0
    %v3464 = vrcp.pop %v3463
    %v3465 = vmul.f32 1.0, %v3464
    %v3466 = vmul.f32 %v3458, %v3449
    %v3467 = vadd.f32 %v3310, %v3466
    %v3468 = vtanh.pop %v3467
    %v3469 = vsub.f32 1.0, %v3465
    %v3470 = vmul.f32 %v3469, %v3468
    %v3471 = vmul.f32 %v3465, %v3004
    %v3472 = vadd.f32 %v3470, %v3471
    %3473 = vmatprep.subr.mxu0 %v125
    %3474 = vmatpush1.msra.mxu0 %v124
    %3475 = vmatprep.subr.mxu0 %v128
    %3476 = vmatpush1.msra.mxu0 %v127
    %3477 = vmatprep.subr.mxu0 %v131
    %3478 = vmatpush1.msra.mxu0 %v130
    %3479 = vmatprep.subr.mxu0 %v134
    %3480 = vmatpush1.msra.mxu0 %v133
    %3481 = vmatprep.subr.mxu0 %v137
    %3482 = vmatpush1.msra.mxu0 %v136
    %3483 = vmatprep.subr.mxu0 %v140
    %3484 = vmatpush1.msra.mxu0 %v139
    %3485 = vmatprep.subr.mxu0 %v143
    %3486 = vmatpush1.msra.mxu0 %v142
    %3487 = vmatprep.subr.mxu0 %v146
    %3488 = vmatpush1.msra.mxu0 %v145
    %3489 = vmatprep.subr.mxu0 %v149
    %3490 = vmatpush1.msra.mxu0 %v148
    %3491 = vmatprep.subr.mxu0 %v152
    %3492 = vmatpush1.msra.mxu0 %v151
    %3493 = vmatprep.subr.mxu0 %v155
    %3494 = vmatpush1.msra.mxu0 %v154
    %3495 = vmatprep.subr.mxu0 %v158
    %3496 = vmatpush1.msra.mxu0 %v157
    %3497 = vmatprep.subr.mxu0 %v161
    %3498 = vmatpush1.msra.mxu0 %v160
    %3499 = vmatprep.subr.mxu0 %v164
    %3500 = vmatpush1.msra.mxu0 %v163
    %3501 = vmatprep.subr.mxu0 %v167
    %3502 = vmatpush1.msra.mxu0 %v166
    %3503 = vmatprep.subr.mxu0 %v170
    %3504 = vmatpush1.msra.mxu0 %v169
    %3505 = vmatprep.subr.mxu0 0.0
    %3506 = vmatpush1.msra.mxu0 0.0
    %3507 = vmatprep.subr.mxu0 0.0
    %3508 = vmatpush1.msra.mxu0 0.0
    %3509 = vmatprep.subr.mxu0 0.0
    %3510 = vmatpush1.msra.mxu0 0.0
    %3511 = vmatprep.subr.mxu0 0.0
    %3512 = vmatpush1.msra.mxu0 0.0
    %3513 = vmatprep.subr.mxu0 0.0
    %3514 = vmatpush1.msra.mxu0 0.0
    %3515 = vmatprep.subr.mxu0 0.0
    %3516 = vmatpush1.msra.mxu0 0.0
    %3517 = vmatprep.subr.mxu0 0.0
    %3518 = vmatpush1.msra.mxu0 0.0
    %3519 = vmatprep.subr.mxu0 0.0
    %3520 = vmatpush1.msra.mxu0 0.0
    %3521 = vmatprep.subr.mxu0 0.0
    %3522 = vmatpush1.msra.mxu0 0.0
    %3523 = vmatprep.subr.mxu0 0.0
    %3524 = vmatpush1.msra.mxu0 0.0
    %3525 = vmatprep.subr.mxu0 0.0
    %3526 = vmatpush1.msra.mxu0 0.0
    %3527 = vmatprep.subr.mxu0 0.0
    %3528 = vmatpush1.msra.mxu0 0.0
    %3529 = vmatprep.subr.mxu0 0.0
    %3530 = vmatpush1.msra.mxu0 0.0
    %3531 = vmatprep.subr.mxu0 0.0
    %3532 = vmatpush1.msra.mxu0 0.0
    %3533 = vmatprep.subr.mxu0 0.0
    %3534 = vmatpush1.msra.mxu0 0.0
    %3535 = vmatprep.subr.mxu0 0.0
    %3536 = vmatpush1.msra.mxu0 0.0
    %3537 = vmatprep.mubr.f32.mxu0 0.0
    %3538 = vmatmul.mubr.f32.gmra.mrb[0].mxu0 %v3472
    %v3539 = vpop.f32.mrb[0].mxu0
    %v3540 = vadd.f32 %v195, %v3539
    %v3541 = vpop.f32.mrb[0].mxu0
    %v3542 = vadd.f32 %v199, %v3541
    %3543 = vdwg.mxu0
    %3544 = vmatprep.subr.mxu0 0.0
    %3545 = vmatpush1.msra.mxu0 %v126
    %3546 = vmatprep.subr.mxu0 0.0
    %3547 = vmatpush1.msra.mxu0 %v129
    %3548 = vmatprep.subr.mxu0 0.0
    %3549 = vmatpush1.msra.mxu0 %v132
    %3550 = vmatprep.subr.mxu0 0.0
    %3551 = vmatpush1.msra.mxu0 %v135
    %3552 = vmatprep.subr.mxu0 0.0
    %3553 = vmatpush1.msra.mxu0 %v138
    %3554 = vmatprep.subr.mxu0 0.0
    %3555 = vmatpush1.msra.mxu0 %v141
    %3556 = vmatprep.subr.mxu0 0.0
    %3557 = vmatpush1.msra.mxu0 %v144
    %3558 = vmatprep.subr.mxu0 0.0
    %3559 = vmatpush1.msra.mxu0 %v147
    %3560 = vmatprep.subr.mxu0 0.0
    %3561 = vmatpush1.msra.mxu0 %v150
    %3562 = vmatprep.subr.mxu0 0.0
    %3563 = vmatpush1.msra.mxu0 %v153
    %3564 = vmatprep.subr.mxu0 0.0
    %3565 = vmatpush1.msra.mxu0 %v156
    %3566 = vmatprep.subr.mxu0 0.0
    %3567 = vmatpush1.msra.mxu0 %v159
    %3568 = vmatprep.subr.mxu0 0.0
    %3569 = vmatpush1.msra.mxu0 %v162
    %3570 = vmatprep.subr.mxu0 0.0
    %3571 = vmatpush1.msra.mxu0 %v165
    %3572 = vmatprep.subr.mxu0 0.0
    %3573 = vmatpush1.msra.mxu0 %v168
    %3574 = vmatprep.subr.mxu0 0.0
    %3575 = vmatpush1.msra.mxu0 %v171
    %3576 = vmatprep.subr.mxu0 0.0
    %3577 = vmatpush1.msra.mxu0 0.0
    %3578 = vmatprep.subr.mxu0 0.0
    %3579 = vmatpush1.msra.mxu0 0.0
    %3580 = vmatprep.subr.mxu0 0.0
    %3581 = vmatpush1.msra.mxu0 0.0
    %3582 = vmatprep.subr.mxu0 0.0
    %3583 = vmatpush1.msra.mxu0 0.0
    %3584 = vmatprep.subr.mxu0 0.0
    %3585 = vmatpush1.msra.mxu0 0.0
    %3586 = vmatprep.subr.mxu0 0.0
    %3587 = vmatpush1.msra.mxu0 0.0
    %3588 = vmatprep.subr.mxu0 0.0
    %3589 = vmatpush1.msra.mxu0 0.0
    %3590 = vmatprep.subr.mxu0 0.0
    %3591 = vmatpush1.msra.mxu0 0.0
    %3592 = vmatprep.subr.mxu0 0.0
    %3593 = vmatpush1.msra.mxu0 0.0
    %3594 = vmatprep.subr.mxu0 0.0
    %3595 = vmatpush1.msra.mxu0 0.0
    %3596 = vmatprep.subr.mxu0 0.0
    %3597 = vmatpush1.msra.mxu0 0.0
    %3598 = vmatprep.subr.mxu0 0.0
    %3599 = vmatpush1.msra.mxu0 0.0
    %3600 = vmatprep.subr.mxu0 0.0
    %3601 = vmatpush1.msra.mxu0 0.0
    %3602 = vmatprep.subr.mxu0 0.0
    %3603 = vmatpush1.msra.mxu0 0.0
    %3604 = vmatprep.subr.mxu0 0.0
    %3605 = vmatpush1.msra.mxu0 0.0
    %3606 = vmatprep.subr.mxu0 0.0
    %3607 = vmatpush1.msra.mxu0 0.0
    %3608 = vmatprep.mubr.f32.mxu0 0.0
    %3609 = vmatmul.mubr.f32.gmra.mrb[0].mxu0 %v3472
    %v3610 = vpop.f32.mrb[0].mxu0
    %v3611 = vadd.f32 %v203, %v3610
    %v3612 = vpop.f32.mrb[0].mxu0
    %3613 = vdwg.mxu0
    %3614 = vmatprep.subr.mxu0 %v77
    %3615 = vmatpush1.msra.mxu0 %v76
    %3616 = vmatprep.subr.mxu0 %v80
    %3617 = vmatpush1.msra.mxu0 %v79
    %3618 = vmatprep.subr.mxu0 %v83
    %3619 = vmatpush1.msra.mxu0 %v82
    %3620 = vmatprep.subr.mxu0 %v86
    %3621 = vmatpush1.msra.mxu0 %v85
    %3622 = vmatprep.subr.mxu0 %v89
    %3623 = vmatpush1.msra.mxu0 %v88
    %3624 = vmatprep.subr.mxu0 %v92
    %3625 = vmatpush1.msra.mxu0 %v91
    %3626 = vmatprep.subr.mxu0 %v95
    %3627 = vmatpush1.msra.mxu0 %v94
    %3628 = vmatprep.subr.mxu0 %v98
    %3629 = vmatpush1.msra.mxu0 %v97
    %3630 = vmatprep.subr.mxu0 %v101
    %3631 = vmatpush1.msra.mxu0 %v100
    %3632 = vmatprep.subr.mxu0 %v104
    %3633 = vmatpush1.msra.mxu0 %v103
    %3634 = vmatprep.subr.mxu0 %v107
    %3635 = vmatpush1.msra.mxu0 %v106
    %3636 = vmatprep.subr.mxu0 %v110
    %3637 = vmatpush1.msra.mxu0 %v109
    %3638 = vmatprep.subr.mxu0 %v113
    %3639 = vmatpush1.msra.mxu0 %v112
    %3640 = vmatprep.subr.mxu0 %v116
    %3641 = vmatpush1.msra.mxu0 %v115
    %3642 = vmatprep.subr.mxu0 %v119
    %3643 = vmatpush1.msra.mxu0 %v118
    %3644 = vmatprep.subr.mxu0 %v122
    %3645 = vmatpush1.msra.mxu0 %v121
    %3646 = vmatprep.subr.mxu0 0.0
    %3647 = vmatpush1.msra.mxu0 0.0
    %3648 = vmatprep.subr.mxu0 0.0
    %3649 = vmatpush1.msra.mxu0 0.0
    %3650 = vmatprep.subr.mxu0 0.0
    %3651 = vmatpush1.msra.mxu0 0.0
    %3652 = vmatprep.subr.mxu0 0.0
    %3653 = vmatpush1.msra.mxu0 0.0
    %3654 = vmatprep.subr.mxu0 0.0
    %3655 = vmatpush1.msra.mxu0 0.0
    %3656 = vmatprep.subr.mxu0 0.0
    %3657 = vmatpush1.msra.mxu0 0.0
    %3658 = vmatprep.subr.mxu0 0.0
    %3659 = vmatpush1.msra.mxu0 0.0
    %3660 = vmatprep.subr.mxu0 0.0
    %3661 = vmatpush1.msra.mxu0 0.0
    %3662 = vmatprep.subr.mxu0 0.0
    %3663 = vmatpush1.msra.mxu0 0.0
    %3664 = vmatprep.subr.mxu0 0.0
    %3665 = vmatpush1.msra.mxu0 0.0
    %3666 = vmatprep.subr.mxu0 0.0
    %3667 = vmatpush1.msra.mxu0 0.0
    %3668 = vmatprep.subr.mxu0 0.0
    %3669 = vmatpush1.msra.mxu0 0.0
    %3670 = vmatprep.subr.mxu0 0.0
    %3671 = vmatpush1.msra.mxu0 0.0
    %3672 = vmatprep.subr.mxu0 0.0
    %3673 = vmatpush1.msra.mxu0 0.0
    %3674 = vmatprep.subr.mxu0 0.0
    %3675 = vmatpush1.msra.mxu0 0.0
    %3676 = vmatprep.subr.mxu0 0.0
    %3677 = vmatpush1.msra.mxu0 0.0
    %3678 = vmatprep.mubr.f32.mxu0 0.0
    %3679 = vmatmul.mubr.f32.gmra.mrb[0].mxu0 %v3307
    %v3680 = vpop.f32.mrb[0].mxu0
    %v3681 = vadd.f32 %v231, %v3680
    %v3682 = vpop.f32.mrb[0].mxu0
    %v3683 = vadd.f32 %v235, %v3682
    %3684 = vdwg.mxu0
    %3685 = vmatprep.subr.mxu0 0.0
    %3686 = vmatpush1.msra.mxu0 %v78
    %3687 = vmatprep.subr.mxu0 0.0
    %3688 = vmatpush1.msra.mxu0 %v81
    %3689 = vmatprep.subr.mxu0 0.0
    %3690 = vmatpush1.msra.mxu0 %v84
    %3691 = vmatprep.subr.mxu0 0.0
    %3692 = vmatpush1.msra.mxu0 %v87
    %3693 = vmatprep.subr.mxu0 0.0
    %3694 = vmatpush1.msra.mxu0 %v90
    %3695 = vmatprep.subr.mxu0 0.0
    %3696 = vmatpush1.msra.mxu0 %v93
    %3697 = vmatprep.subr.mxu0 0.0
    %3698 = vmatpush1.msra.mxu0 %v96
    %3699 = vmatprep.subr.mxu0 0.0
    %3700 = vmatpush1.msra.mxu0 %v99
    %3701 = vmatprep.subr.mxu0 0.0
    %3702 = vmatpush1.msra.mxu0 %v102
    %3703 = vmatprep.subr.mxu0 0.0
    %3704 = vmatpush1.msra.mxu0 %v105
    %3705 = vmatprep.subr.mxu0 0.0
    %3706 = vmatpush1.msra.mxu0 %v108
    %3707 = vmatprep.subr.mxu0 0.0
    %3708 = vmatpush1.msra.mxu0 %v111
    %3709 = vmatprep.subr.mxu0 0.0
    %3710 = vmatpush1.msra.mxu0 %v114
    %3711 = vmatprep.subr.mxu0 0.0
    %3712 = vmatpush1.msra.mxu0 %v117
    %3713 = vmatprep.subr.mxu0 0.0
    %3714 = vmatpush1.msra.mxu0 %v120
    %3715 = vmatprep.subr.mxu0 0.0
    %3716 = vmatpush1.msra.mxu0 %v123
    %3717 = vmatprep.subr.mxu0 0.0
    %3718 = vmatpush1.msra.mxu0 0.0
    %3719 = vmatprep.subr.mxu0 0.0
    %3720 = vmatpush1.msra.mxu0 0.0
    %3721 = vmatprep.subr.mxu0 0.0
    %3722 = vmatpush1.msra.mxu0 0.0
    %3723 = vmatprep.subr.mxu0 0.0
    %3724 = vmatpush1.msra.mxu0 0.0
    %3725 = vmatprep.subr.mxu0 0.0
    %3726 = vmatpush1.msra.mxu0 0.0
    %3727 = vmatprep.subr.mxu0 0.0
    %3728 = vmatpush1.msra.mxu0 0.0
    %3729 = vmatprep.subr.mxu0 0.0
    %3730 = vmatpush1.msra.mxu0 0.0
    %3731 = vmatprep.subr.mxu0 0.0
    %3732 = vmatpush1.msra.mxu0 0.0
    %3733 = vmatprep.subr.mxu0 0.0
    %3734 = vmatpush1.msra.mxu0 0.0
    %3735 = vmatprep.subr.mxu0 0.0
    %3736 = vmatpush1.msra.mxu0 0.0
    %3737 = vmatprep.subr.mxu0 0.0
    %3738 = vmatpush1.msra.mxu0 0.0
    %3739 = vmatprep.subr.mxu0 0.0
    %3740 = vmatpush1.msra.mxu0 0.0
    %3741 = vmatprep.subr.mxu0 0.0
    %3742 = vmatpush1.msra.mxu0 0.0
    %3743 = vmatprep.subr.mxu0 0.0
    %3744 = vmatpush1.msra.mxu0 0.0
    %3745 = vmatprep.subr.mxu0 0.0
    %3746 = vmatpush1.msra.mxu0 0.0
    %3747 = vmatprep.subr.mxu0 0.0
    %3748 = vmatpush1.msra.mxu0 0.0
    %3749 = vmatprep.mubr.f32.mxu0 0.0
    %3750 = vmatmul.mubr.f32.gmra.mrb[0].mxu0 %v3307
    %v3751 = vpop.f32.mrb[0].mxu0
    %v3752 = vadd.f32 %v239, %v3751
    %v3753 = vpop.f32.mrb[0].mxu0
    %3754 = vdwg.mxu0
    %v3755 = vadd.f32 %v3540, %v3681
    %v3756 = vxor.u32 %v3755, 2147483648
    %v3757 = vmul.f32 %v3756, 1.442695
    %v3758 = vpow.pop %v3757
    %v3759 = vadd.f32 %v3758, 1.0
    %v3760 = vrcp.pop %v3759
    %v3761 = vmul.f32 1.0, %v3760
    %v3762 = vadd.f32 %v3542, %v3683
    %v3763 = vxor.u32 %v3762, 2147483648
    %v3764 = vmul.f32 %v3763, 1.442695
    %v3765 = vpow.pop %v3764
    %v3766 = vadd.f32 %v3765, 1.0
    %v3767 = vrcp.pop %v3766
    %v3768 = vmul.f32 1.0, %v3767
    %v3769 = vmul.f32 %v3761, %v3752
    %v3770 = vadd.f32 %v3611, %v3769
    %v3771 = vtanh.pop %v3770
    %v3772 = vsub.f32 1.0, %v3768
    %v3773 = vmul.f32 %v3772, %v3771
    %v3774 = vmul.f32 %v3768, %v3307
    %v3775 = vadd.f32 %v3773, %v3774
    %v3776 = vadd.f32 %v391, %v177
    %v3777 = vadd.f32 %v393, %v181
    %v3778 = vadd.f32 %v497, %v185
    %3779 = vmatprep.subr.mxu0 %v28
    %3780 = vmatpush1.msra.mxu0 %v27
    %3781 = vmatprep.subr.mxu0 %v31
    %3782 = vmatpush1.msra.mxu0 %v30
    %3783 = vmatprep.subr.mxu0 %v34
    %3784 = vmatpush1.msra.mxu0 %v33
    %3785 = vmatprep.subr.mxu0 %v37
    %3786 = vmatpush1.msra.mxu0 %v36
    %3787 = vmatprep.subr.mxu0 %v40
    %3788 = vmatpush1.msra.mxu0 %v39
    %3789 = vmatprep.subr.mxu0 %v43
    %3790 = vmatpush1.msra.mxu0 %v42
    %3791 = vmatprep.subr.mxu0 %v46
    %3792 = vmatpush1.msra.mxu0 %v45
    %3793 = vmatprep.subr.mxu0 %v49
    %3794 = vmatpush1.msra.mxu0 %v48
    %3795 = vmatprep.subr.mxu0 %v52
    %3796 = vmatpush1.msra.mxu0 %v51
    %3797 = vmatprep.subr.mxu0 %v55
    %3798 = vmatpush1.msra.mxu0 %v54
    %3799 = vmatprep.subr.mxu0 %v58
    %3800 = vmatpush1.msra.mxu0 %v57
    %3801 = vmatprep.subr.mxu0 %v61
    %3802 = vmatpush1.msra.mxu0 %v60
    %3803 = vmatprep.subr.mxu0 %v64
    %3804 = vmatpush1.msra.mxu0 %v63
    %3805 = vmatprep.subr.mxu0 %v67
    %3806 = vmatpush1.msra.mxu0 %v66
    %3807 = vmatprep.subr.mxu0 %v70
    %3808 = vmatpush1.msra.mxu0 %v69
    %3809 = vmatprep.subr.mxu0 %v73
    %3810 = vmatpush1.msra.mxu0 %v72
    %3811 = vmatprep.subr.mxu0 0.0
    %3812 = vmatpush1.msra.mxu0 0.0
    %3813 = vmatprep.subr.mxu0 0.0
    %3814 = vmatpush1.msra.mxu0 0.0
    %3815 = vmatprep.subr.mxu0 0.0
    %3816 = vmatpush1.msra.mxu0 0.0
    %3817 = vmatprep.subr.mxu0 0.0
    %3818 = vmatpush1.msra.mxu0 0.0
    %3819 = vmatprep.subr.mxu0 0.0
    %3820 = vmatpush1.msra.mxu0 0.0
    %3821 = vmatprep.subr.mxu0 0.0
    %3822 = vmatpush1.msra.mxu0 0.0
    %3823 = vmatprep.subr.mxu0 0.0
    %3824 = vmatpush1.msra.mxu0 0.0
    %3825 = vmatprep.subr.mxu0 0.0
    %3826 = vmatpush1.msra.mxu0 0.0
    %3827 = vmatprep.subr.mxu0 0.0
    %3828 = vmatpush1.msra.mxu0 0.0
    %3829 = vmatprep.subr.mxu0 0.0
    %3830 = vmatpush1.msra.mxu0 0.0
    %3831 = vmatprep.subr.mxu0 0.0
    %3832 = vmatpush1.msra.mxu0 0.0
    %3833 = vmatprep.subr.mxu0 0.0
    %3834 = vmatpush1.msra.mxu0 0.0
    %3835 = vmatprep.subr.mxu0 0.0
    %3836 = vmatpush1.msra.mxu0 0.0
    %3837 = vmatprep.subr.mxu0 0.0
    %3838 = vmatpush1.msra.mxu0 0.0
    %3839 = vmatprep.subr.mxu0 0.0
    %3840 = vmatpush1.msra.mxu0 0.0
    %3841 = vmatprep.subr.mxu0 0.0
    %3842 = vmatpush1.msra.mxu0 0.0
    %3843 = vmatprep.mubr.f32.mxu0 0.0
    %3844 = vmatmul.mubr.f32.gmra.mrb[0].mxu0 %v3472
    %v3845 = vpop.f32.mrb[0].mxu0
    %v3846 = vadd.f32 %v213, %v3845
    %v3847 = vpop.f32.mrb[0].mxu0
    %v3848 = vadd.f32 %v217, %v3847
    %3849 = vdwg.mxu0
    %3850 = vmatprep.subr.mxu0 0.0
    %3851 = vmatpush1.msra.mxu0 %v29
    %3852 = vmatprep.subr.mxu0 0.0
    %3853 = vmatpush1.msra.mxu0 %v32
    %3854 = vmatprep.subr.mxu0 0.0
    %3855 = vmatpush1.msra.mxu0 %v35
    %3856 = vmatprep.subr.mxu0 0.0
    %3857 = vmatpush1.msra.mxu0 %v38
    %3858 = vmatprep.subr.mxu0 0.0
    %3859 = vmatpush1.msra.mxu0 %v41
    %3860 = vmatprep.subr.mxu0 0.0
    %3861 = vmatpush1.msra.mxu0 %v44
    %3862 = vmatprep.subr.mxu0 0.0
    %3863 = vmatpush1.msra.mxu0 %v47
    %3864 = vmatprep.subr.mxu0 0.0
    %3865 = vmatpush1.msra.mxu0 %v50
    %3866 = vmatprep.subr.mxu0 0.0
    %3867 = vmatpush1.msra.mxu0 %v53
    %3868 = vmatprep.subr.mxu0 0.0
    %3869 = vmatpush1.msra.mxu0 %v56
    %3870 = vmatprep.subr.mxu0 0.0
    %3871 = vmatpush1.msra.mxu0 %v59
    %3872 = vmatprep.subr.mxu0 0.0
    %3873 = vmatpush1.msra.mxu0 %v62
    %3874 = vmatprep.subr.mxu0 0.0
    %3875 = vmatpush1.msra.mxu0 %v65
    %3876 = vmatprep.subr.mxu0 0.0
    %3877 = vmatpush1.msra.mxu0 %v68
    %3878 = vmatprep.subr.mxu0 0.0
    %3879 = vmatpush1.msra.mxu0 %v71
    %3880 = vmatprep.subr.mxu0 0.0
    %3881 = vmatpush1.msra.mxu0 %v74
    %3882 = vmatprep.subr.mxu0 0.0
    %3883 = vmatpush1.msra.mxu0 0.0
    %3884 = vmatprep.subr.mxu0 0.0
    %3885 = vmatpush1.msra.mxu0 0.0
    %3886 = vmatprep.subr.mxu0 0.0
    %3887 = vmatpush1.msra.mxu0 0.0
    %3888 = vmatprep.subr.mxu0 0.0
    %3889 = vmatpush1.msra.mxu0 0.0
    %3890 = vmatprep.subr.mxu0 0.0
    %3891 = vmatpush1.msra.mxu0 0.0
    %3892 = vmatprep.subr.mxu0 0.0
    %3893 = vmatpush1.msra.mxu0 0.0
    %3894 = vmatprep.subr.mxu0 0.0
    %3895 = vmatpush1.msra.mxu0 0.0
    %3896 = vmatprep.subr.mxu0 0.0
    %3897 = vmatpush1.msra.mxu0 0.0
    %3898 = vmatprep.subr.mxu0 0.0
    %3899 = vmatpush1.msra.mxu0 0.0
    %3900 = vmatprep.subr.mxu0 0.0
    %3901 = vmatpush1.msra.mxu0 0.0
    %3902 = vmatprep.subr.mxu0 0.0
    %3903 = vmatpush1.msra.mxu0 0.0
    %3904 = vmatprep.subr.mxu0 0.0
    %3905 = vmatpush1.msra.mxu0 0.0
    %3906 = vmatprep.subr.mxu0 0.0
    %3907 = vmatpush1.msra.mxu0 0.0
    %3908 = vmatprep.subr.mxu0 0.0
    %3909 = vmatpush1.msra.mxu0 0.0
    %3910 = vmatprep.subr.mxu0 0.0
    %3911 = vmatpush1.msra.mxu0 0.0
    %3912 = vmatprep.subr.mxu0 0.0
    %3913 = vmatpush1.msra.mxu0 0.0
    %3914 = vmatprep.mubr.f32.mxu0 0.0
    %3915 = vmatmul.mubr.f32.gmra.mrb[0].mxu0 %v3472
    %v3916 = vpop.f32.mrb[0].mxu0
    %v3917 = vadd.f32 %v221, %v3916
    %v3918 = vpop.f32.mrb[0].mxu0
    %3919 = vdwg.mxu0
    %v3920 = vadd.f32 %v3776, %v3846
    %v3921 = vxor.u32 %v3920, 2147483648
    %v3922 = vmul.f32 %v3921, 1.442695
    %v3923 = vpow.pop %v3922
    %v3924 = vadd.f32 %v3923, 1.0
    %v3925 = vrcp.pop %v3924
    %v3926 = vmul.f32 1.0, %v3925
    %v3927 = vadd.f32 %v3777, %v3848
    %v3928 = vxor.u32 %v3927, 2147483648
    %v3929 = vmul.f32 %v3928, 1.442695
    %v3930 = vpow.pop %v3929
    %v3931 = vadd.f32 %v3930, 1.0
    %v3932 = vrcp.pop %v3931
    %v3933 = vmul.f32 1.0, %v3932
    %v3934 = vmul.f32 %v3926, %v3917
    %v3935 = vadd.f32 %v3778, %v3934
    %v3936 = vtanh.pop %v3935
    %v3937 = vsub.f32 1.0, %v3933
    %v3938 = vmul.f32 %v3937, %v3936
    %v3939 = vmul.f32 %v3933, %v3472
    %v3940 = vadd.f32 %v3938, %v3939
    %3941 = vmatprep.subr.mxu0 %v125
    %3942 = vmatpush1.msra.mxu0 %v124
    %3943 = vmatprep.subr.mxu0 %v128
    %3944 = vmatpush1.msra.mxu0 %v127
    %3945 = vmatprep.subr.mxu0 %v131
    %3946 = vmatpush1.msra.mxu0 %v130
    %3947 = vmatprep.subr.mxu0 %v134
    %3948 = vmatpush1.msra.mxu0 %v133
    %3949 = vmatprep.subr.mxu0 %v137
    %3950 = vmatpush1.msra.mxu0 %v136
    %3951 = vmatprep.subr.mxu0 %v140
    %3952 = vmatpush1.msra.mxu0 %v139
    %3953 = vmatprep.subr.mxu0 %v143
    %3954 = vmatpush1.msra.mxu0 %v142
    %3955 = vmatprep.subr.mxu0 %v146
    %3956 = vmatpush1.msra.mxu0 %v145
    %3957 = vmatprep.subr.mxu0 %v149
    %3958 = vmatpush1.msra.mxu0 %v148
    %3959 = vmatprep.subr.mxu0 %v152
    %3960 = vmatpush1.msra.mxu0 %v151
    %3961 = vmatprep.subr.mxu0 %v155
    %3962 = vmatpush1.msra.mxu0 %v154
    %3963 = vmatprep.subr.mxu0 %v158
    %3964 = vmatpush1.msra.mxu0 %v157
    %3965 = vmatprep.subr.mxu0 %v161
    %3966 = vmatpush1.msra.mxu0 %v160
    %3967 = vmatprep.subr.mxu0 %v164
    %3968 = vmatpush1.msra.mxu0 %v163
    %3969 = vmatprep.subr.mxu0 %v167
    %3970 = vmatpush1.msra.mxu0 %v166
    %3971 = vmatprep.subr.mxu0 %v170
    %3972 = vmatpush1.msra.mxu0 %v169
    %3973 = vmatprep.subr.mxu0 0.0
    %3974 = vmatpush1.msra.mxu0 0.0
    %3975 = vmatprep.subr.mxu0 0.0
    %3976 = vmatpush1.msra.mxu0 0.0
    %3977 = vmatprep.subr.mxu0 0.0
    %3978 = vmatpush1.msra.mxu0 0.0
    %3979 = vmatprep.subr.mxu0 0.0
    %3980 = vmatpush1.msra.mxu0 0.0
    %3981 = vmatprep.subr.mxu0 0.0
    %3982 = vmatpush1.msra.mxu0 0.0
    %3983 = vmatprep.subr.mxu0 0.0
    %3984 = vmatpush1.msra.mxu0 0.0
    %3985 = vmatprep.subr.mxu0 0.0
    %3986 = vmatpush1.msra.mxu0 0.0
    %3987 = vmatprep.subr.mxu0 0.0
    %3988 = vmatpush1.msra.mxu0 0.0
    %3989 = vmatprep.subr.mxu0 0.0
    %3990 = vmatpush1.msra.mxu0 0.0
    %3991 = vmatprep.subr.mxu0 0.0
    %3992 = vmatpush1.msra.mxu0 0.0
    %3993 = vmatprep.subr.mxu0 0.0
    %3994 = vmatpush1.msra.mxu0 0.0
    %3995 = vmatprep.subr.mxu0 0.0
    %3996 = vmatpush1.msra.mxu0 0.0
    %3997 = vmatprep.subr.mxu0 0.0
    %3998 = vmatpush1.msra.mxu0 0.0
    %3999 = vmatprep.subr.mxu0 0.0
    %4000 = vmatpush1.msra.mxu0 0.0
    %4001 = vmatprep.subr.mxu0 0.0
    %4002 = vmatpush1.msra.mxu0 0.0
    %4003 = vmatprep.subr.mxu0 0.0
    %4004 = vmatpush1.msra.mxu0 0.0
    %4005 = vmatprep.mubr.f32.mxu0 0.0
    %4006 = vmatmul.mubr.f32.gmra.mrb[0].mxu0 %v3940
    %v4007 = vpop.f32.mrb[0].mxu0
    %v4008 = vadd.f32 %v195, %v4007
    %v4009 = vpop.f32.mrb[0].mxu0
    %v4010 = vadd.f32 %v199, %v4009
    %4011 = vdwg.mxu0
    %4012 = vmatprep.subr.mxu0 0.0
    %4013 = vmatpush1.msra.mxu0 %v126
    %4014 = vmatprep.subr.mxu0 0.0
    %4015 = vmatpush1.msra.mxu0 %v129
    %4016 = vmatprep.subr.mxu0 0.0
    %4017 = vmatpush1.msra.mxu0 %v132
    %4018 = vmatprep.subr.mxu0 0.0
    %4019 = vmatpush1.msra.mxu0 %v135
    %4020 = vmatprep.subr.mxu0 0.0
    %4021 = vmatpush1.msra.mxu0 %v138
    %4022 = vmatprep.subr.mxu0 0.0
    %4023 = vmatpush1.msra.mxu0 %v141
    %4024 = vmatprep.subr.mxu0 0.0
    %4025 = vmatpush1.msra.mxu0 %v144
    %4026 = vmatprep.subr.mxu0 0.0
    %4027 = vmatpush1.msra.mxu0 %v147
    %4028 = vmatprep.subr.mxu0 0.0
    %4029 = vmatpush1.msra.mxu0 %v150
    %4030 = vmatprep.subr.mxu0 0.0
    %4031 = vmatpush1.msra.mxu0 %v153
    %4032 = vmatprep.subr.mxu0 0.0
    %4033 = vmatpush1.msra.mxu0 %v156
    %4034 = vmatprep.subr.mxu0 0.0
    %4035 = vmatpush1.msra.mxu0 %v159
    %4036 = vmatprep.subr.mxu0 0.0
    %4037 = vmatpush1.msra.mxu0 %v162
    %4038 = vmatprep.subr.mxu0 0.0
    %4039 = vmatpush1.msra.mxu0 %v165
    %4040 = vmatprep.subr.mxu0 0.0
    %4041 = vmatpush1.msra.mxu0 %v168
    %4042 = vmatprep.subr.mxu0 0.0
    %4043 = vmatpush1.msra.mxu0 %v171
    %4044 = vmatprep.subr.mxu0 0.0
    %4045 = vmatpush1.msra.mxu0 0.0
    %4046 = vmatprep.subr.mxu0 0.0
    %4047 = vmatpush1.msra.mxu0 0.0
    %4048 = vmatprep.subr.mxu0 0.0
    %4049 = vmatpush1.msra.mxu0 0.0
    %4050 = vmatprep.subr.mxu0 0.0
    %4051 = vmatpush1.msra.mxu0 0.0
    %4052 = vmatprep.subr.mxu0 0.0
    %4053 = vmatpush1.msra.mxu0 0.0
    %4054 = vmatprep.subr.mxu0 0.0
    %4055 = vmatpush1.msra.mxu0 0.0
    %4056 = vmatprep.subr.mxu0 0.0
    %4057 = vmatpush1.msra.mxu0 0.0
    %4058 = vmatprep.subr.mxu0 0.0
    %4059 = vmatpush1.msra.mxu0 0.0
    %4060 = vmatprep.subr.mxu0 0.0
    %4061 = vmatpush1.msra.mxu0 0.0
    %4062 = vmatprep.subr.mxu0 0.0
    %4063 = vmatpush1.msra.mxu0 0.0
    %4064 = vmatprep.subr.mxu0 0.0
    %4065 = vmatpush1.msra.mxu0 0.0
    %4066 = vmatprep.subr.mxu0 0.0
    %4067 = vmatpush1.msra.mxu0 0.0
    %4068 = vmatprep.subr.mxu0 0.0
    %4069 = vmatpush1.msra.mxu0 0.0
    %4070 = vmatprep.subr.mxu0 0.0
    %4071 = vmatpush1.msra.mxu0 0.0
    %4072 = vmatprep.subr.mxu0 0.0
    %4073 = vmatpush1.msra.mxu0 0.0
    %4074 = vmatprep.subr.mxu0 0.0
    %4075 = vmatpush1.msra.mxu0 0.0
    %4076 = vmatprep.mubr.f32.mxu0 0.0
    %4077 = vmatmul.mubr.f32.gmra.mrb[0].mxu0 %v3940
    %v4078 = vpop.f32.mrb[0].mxu0
    %v4079 = vadd.f32 %v203, %v4078
    %v4080 = vpop.f32.mrb[0].mxu0
    %4081 = vdwg.mxu0
    %4082 = vmatprep.subr.mxu0 %v77
    %4083 = vmatpush1.msra.mxu0 %v76
    %4084 = vmatprep.subr.mxu0 %v80
    %4085 = vmatpush1.msra.mxu0 %v79
    %4086 = vmatprep.subr.mxu0 %v83
    %4087 = vmatpush1.msra.mxu0 %v82
    %4088 = vmatprep.subr.mxu0 %v86
    %4089 = vmatpush1.msra.mxu0 %v85
    %4090 = vmatprep.subr.mxu0 %v89
    %4091 = vmatpush1.msra.mxu0 %v88
    %4092 = vmatprep.subr.mxu0 %v92
    %4093 = vmatpush1.msra.mxu0 %v91
    %4094 = vmatprep.subr.mxu0 %v95
    %4095 = vmatpush1.msra.mxu0 %v94
    %4096 = vmatprep.subr.mxu0 %v98
    %4097 = vmatpush1.msra.mxu0 %v97
    %4098 = vmatprep.subr.mxu0 %v101
    %4099 = vmatpush1.msra.mxu0 %v100
    %4100 = vmatprep.subr.mxu0 %v104
    %4101 = vmatpush1.msra.mxu0 %v103
    %4102 = vmatprep.subr.mxu0 %v107
    %4103 = vmatpush1.msra.mxu0 %v106
    %4104 = vmatprep.subr.mxu0 %v110
    %4105 = vmatpush1.msra.mxu0 %v109
    %4106 = vmatprep.subr.mxu0 %v113
    %4107 = vmatpush1.msra.mxu0 %v112
    %4108 = vmatprep.subr.mxu0 %v116
    %4109 = vmatpush1.msra.mxu0 %v115
    %4110 = vmatprep.subr.mxu0 %v119
    %4111 = vmatpush1.msra.mxu0 %v118
    %4112 = vmatprep.subr.mxu0 %v122
    %4113 = vmatpush1.msra.mxu0 %v121
    %4114 = vmatprep.subr.mxu0 0.0
    %4115 = vmatpush1.msra.mxu0 0.0
    %4116 = vmatprep.subr.mxu0 0.0
    %4117 = vmatpush1.msra.mxu0 0.0
    %4118 = vmatprep.subr.mxu0 0.0
    %4119 = vmatpush1.msra.mxu0 0.0
    %4120 = vmatprep.subr.mxu0 0.0
    %4121 = vmatpush1.msra.mxu0 0.0
    %4122 = vmatprep.subr.mxu0 0.0
    %4123 = vmatpush1.msra.mxu0 0.0
    %4124 = vmatprep.subr.mxu0 0.0
    %4125 = vmatpush1.msra.mxu0 0.0
    %4126 = vmatprep.subr.mxu0 0.0
    %4127 = vmatpush1.msra.mxu0 0.0
    %4128 = vmatprep.subr.mxu0 0.0
    %4129 = vmatpush1.msra.mxu0 0.0
    %4130 = vmatprep.subr.mxu0 0.0
    %4131 = vmatpush1.msra.mxu0 0.0
    %4132 = vmatprep.subr.mxu0 0.0
    %4133 = vmatpush1.msra.mxu0 0.0
    %4134 = vmatprep.subr.mxu0 0.0
    %4135 = vmatpush1.msra.mxu0 0.0
    %4136 = vmatprep.subr.mxu0 0.0
    %4137 = vmatpush1.msra.mxu0 0.0
    %4138 = vmatprep.subr.mxu0 0.0
    %4139 = vmatpush1.msra.mxu0 0.0
    %4140 = vmatprep.subr.mxu0 0.0
    %4141 = vmatpush1.msra.mxu0 0.0
    %4142 = vmatprep.subr.mxu0 0.0
    %4143 = vmatpush1.msra.mxu0 0.0
    %4144 = vmatprep.subr.mxu0 0.0
    %4145 = vmatpush1.msra.mxu0 0.0
    %4146 = vmatprep.mubr.f32.mxu0 0.0
    %4147 = vmatmul.mubr.f32.gmra.mrb[0].mxu0 %v3775
    %v4148 = vpop.f32.mrb[0].mxu0
    %v4149 = vadd.f32 %v231, %v4148
    %v4150 = vpop.f32.mrb[0].mxu0
    %v4151 = vadd.f32 %v235, %v4150
    %4152 = vdwg.mxu0
    %4153 = vmatprep.subr.mxu0 0.0
    %4154 = vmatpush1.msra.mxu0 %v78
    %4155 = vmatprep.subr.mxu0 0.0
    %4156 = vmatpush1.msra.mxu0 %v81
    %4157 = vmatprep.subr.mxu0 0.0
    %4158 = vmatpush1.msra.mxu0 %v84
    %4159 = vmatprep.subr.mxu0 0.0
    %4160 = vmatpush1.msra.mxu0 %v87
    %4161 = vmatprep.subr.mxu0 0.0
    %4162 = vmatpush1.msra.mxu0 %v90
    %4163 = vmatprep.subr.mxu0 0.0
    %4164 = vmatpush1.msra.mxu0 %v93
    %4165 = vmatprep.subr.mxu0 0.0
    %4166 = vmatpush1.msra.mxu0 %v96
    %4167 = vmatprep.subr.mxu0 0.0
    %4168 = vmatpush1.msra.mxu0 %v99
    %4169 = vmatprep.subr.mxu0 0.0
    %4170 = vmatpush1.msra.mxu0 %v102
    %4171 = vmatprep.subr.mxu0 0.0
    %4172 = vmatpush1.msra.mxu0 %v105
    %4173 = vmatprep.subr.mxu0 0.0
    %4174 = vmatpush1.msra.mxu0 %v108
    %4175 = vmatprep.subr.mxu0 0.0
    %4176 = vmatpush1.msra.mxu0 %v111
    %4177 = vmatprep.subr.mxu0 0.0
    %4178 = vmatpush1.msra.mxu0 %v114
    %4179 = vmatprep.subr.mxu0 0.0
    %4180 = vmatpush1.msra.mxu0 %v117
    %4181 = vmatprep.subr.mxu0 0.0
    %4182 = vmatpush1.msra.mxu0 %v120
    %4183 = vmatprep.subr.mxu0 0.0
    %4184 = vmatpush1.msra.mxu0 %v123
    %4185 = vmatprep.subr.mxu0 0.0
    %4186 = vmatpush1.msra.mxu0 0.0
    %4187 = vmatprep.subr.mxu0 0.0
    %4188 = vmatpush1.msra.mxu0 0.0
    %4189 = vmatprep.subr.mxu0 0.0
    %4190 = vmatpush1.msra.mxu0 0.0
    %4191 = vmatprep.subr.mxu0 0.0
    %4192 = vmatpush1.msra.mxu0 0.0
    %4193 = vmatprep.subr.mxu0 0.0
    %4194 = vmatpush1.msra.mxu0 0.0
    %4195 = vmatprep.subr.mxu0 0.0
    %4196 = vmatpush1.msra.mxu0 0.0
    %4197 = vmatprep.subr.mxu0 0.0
    %4198 = vmatpush1.msra.mxu0 0.0
    %4199 = vmatprep.subr.mxu0 0.0
    %4200 = vmatpush1.msra.mxu0 0.0
    %4201 = vmatprep.subr.mxu0 0.0
    %4202 = vmatpush1.msra.mxu0 0.0
    %4203 = vmatprep.subr.mxu0 0.0
    %4204 = vmatpush1.msra.mxu0 0.0
    %4205 = vmatprep.subr.mxu0 0.0
    %4206 = vmatpush1.msra.mxu0 0.0
    %4207 = vmatprep.subr.mxu0 0.0
    %4208 = vmatpush1.msra.mxu0 0.0
    %4209 = vmatprep.subr.mxu0 0.0
    %4210 = vmatpush1.msra.mxu0 0.0
    %4211 = vmatprep.subr.mxu0 0.0
    %4212 = vmatpush1.msra.mxu0 0.0
    %4213 = vmatprep.subr.mxu0 0.0
    %4214 = vmatpush1.msra.mxu0 0.0
    %4215 = vmatprep.subr.mxu0 0.0
    %4216 = vmatpush1.msra.mxu0 0.0
    %4217 = vmatprep.mubr.f32.mxu0 0.0
    %4218 = vmatmul.mubr.f32.gmra.mrb[0].mxu0 %v3775
    %v4219 = vpop.f32.mrb[0].mxu0
    %v4220 = vadd.f32 %v239, %v4219
    %v4221 = vpop.f32.mrb[0].mxu0
    %4222 = vdwg.mxu0
    %v4223 = vadd.f32 %v4008, %v4149
    %v4224 = vxor.u32 %v4223, 2147483648
    %v4225 = vmul.f32 %v4224, 1.442695
    %v4226 = vpow.pop %v4225
    %v4227 = vadd.f32 %v4226, 1.0
    %v4228 = vrcp.pop %v4227
    %v4229 = vmul.f32 1.0, %v4228
    %v4230 = vadd.f32 %v4010, %v4151
    %v4231 = vxor.u32 %v4230, 2147483648
    %v4232 = vmul.f32 %v4231, 1.442695
    %v4233 = vpow.pop %v4232
    %v4234 = vadd.f32 %v4233, 1.0
    %v4235 = vrcp.pop %v4234
    %v4236 = vmul.f32 1.0, %v4235
    %v4237 = vmul.f32 %v4229, %v4220
    %v4238 = vadd.f32 %v4079, %v4237
    %v4239 = vtanh.pop %v4238
    %v4240 = vsub.f32 1.0, %v4236
    %v4241 = vmul.f32 %v4240, %v4239
    %v4242 = vmul.f32 %v4236, %v3775
    %v4243 = vadd.f32 %v4241, %v4242
    %v4244 = vld [vmem:[%s5] sm:$0xff]
    %v4245 = vld [vmem:[%s5 + $0x8] sm:$0xff]
    %v4246 = vld [vmem:[%s5 + $0x10] sm:$0xff]
    %v4247 = vld [vmem:[%s5 + $0x18] sm:$0xff]
    %v4248 = vld [vmem:[%s5 + $0x20] sm:$0xff]
    %v4249 = vld [vmem:[%s5 + $0x28] sm:$0xff]
    %v4250 = vld [vmem:[%s5 + $0x30] sm:$0xff]
    %v4251 = vld [vmem:[%s5 + $0x38] sm:$0xff]
    %v4252 = vld [vmem:[%s5 + $0x40] sm:$0xff]
    %v4253 = vld [vmem:[%s5 + $0x48] sm:$0xff]
    %v4254 = vld [vmem:[%s5 + $0x50] sm:$0xff]
    %v4255 = vld [vmem:[%s5 + $0x58] sm:$0xff]
    %v4256 = vld [vmem:[%s5 + $0x60] sm:$0xff]
    %v4257 = vld [vmem:[%s5 + $0x68] sm:$0xff]
    %v4258 = vld [vmem:[%s5 + $0x70] sm:$0xff]
    %v4259 = vld [vmem:[%s5 + $0x78] sm:$0xff]
    %v4260 = vld [vmem:[%s6] sm:$0x1]
    %v4261 = vlaneseq
    %v4262 = vshrl.u32 %v4261, 7
    %v4263 = vsub.s32 0, %v4262
    %v4264 = vrot.slane %v4260, %v4263
    %4265 = vmatprep.subr.mxu0 0.0
    %4266 = vmatpush1.msra.mxu0 %v4244
    %4267 = vmatprep.subr.mxu0 0.0
    %4268 = vmatpush1.msra.mxu0 %v4245
    %4269 = vmatprep.subr.mxu0 0.0
    %4270 = vmatpush1.msra.mxu0 %v4246
    %4271 = vmatprep.subr.mxu0 0.0
    %4272 = vmatpush1.msra.mxu0 %v4247
    %4273 = vmatprep.subr.mxu0 0.0
    %4274 = vmatpush1.msra.mxu0 %v4248
    %4275 = vmatprep.subr.mxu0 0.0
    %4276 = vmatpush1.msra.mxu0 %v4249
    %4277 = vmatprep.subr.mxu0 0.0
    %4278 = vmatpush1.msra.mxu0 %v4250
    %4279 = vmatprep.subr.mxu0 0.0
    %4280 = vmatpush1.msra.mxu0 %v4251
    %4281 = vmatprep.subr.mxu0 0.0
    %4282 = vmatpush1.msra.mxu0 %v4252
    %4283 = vmatprep.subr.mxu0 0.0
    %4284 = vmatpush1.msra.mxu0 %v4253
    %4285 = vmatprep.subr.mxu0 0.0
    %4286 = vmatpush1.msra.mxu0 %v4254
    %4287 = vmatprep.subr.mxu0 0.0
    %4288 = vmatpush1.msra.mxu0 %v4255
    %4289 = vmatprep.subr.mxu0 0.0
    %4290 = vmatpush1.msra.mxu0 %v4256
    %4291 = vmatprep.subr.mxu0 0.0
    %4292 = vmatpush1.msra.mxu0 %v4257
    %4293 = vmatprep.subr.mxu0 0.0
    %4294 = vmatpush1.msra.mxu0 %v4258
    %4295 = vmatprep.subr.mxu0 0.0
    %4296 = vmatpush1.msra.mxu0 %v4259
    %4297 = vmatprep.subr.mxu0 0.0
    %4298 = vmatpush1.msra.mxu0 0.0
    %4299 = vmatprep.subr.mxu0 0.0
    %4300 = vmatpush1.msra.mxu0 0.0
    %4301 = vmatprep.subr.mxu0 0.0
    %4302 = vmatpush1.msra.mxu0 0.0
    %4303 = vmatprep.subr.mxu0 0.0
    %4304 = vmatpush1.msra.mxu0 0.0
    %4305 = vmatprep.subr.mxu0 0.0
    %4306 = vmatpush1.msra.mxu0 0.0
    %4307 = vmatprep.subr.mxu0 0.0
    %4308 = vmatpush1.msra.mxu0 0.0
    %4309 = vmatprep.subr.mxu0 0.0
    %4310 = vmatpush1.msra.mxu0 0.0
    %4311 = vmatprep.subr.mxu0 0.0
    %4312 = vmatpush1.msra.mxu0 0.0
    %4313 = vmatprep.subr.mxu0 0.0
    %4314 = vmatpush1.msra.mxu0 0.0
    %4315 = vmatprep.subr.mxu0 0.0
    %4316 = vmatpush1.msra.mxu0 0.0
    %4317 = vmatprep.subr.mxu0 0.0
    %4318 = vmatpush1.msra.mxu0 0.0
    %4319 = vmatprep.subr.mxu0 0.0
    %4320 = vmatpush1.msra.mxu0 0.0
    %4321 = vmatprep.subr.mxu0 0.0
    %4322 = vmatpush1.msra.mxu0 0.0
    %4323 = vmatprep.subr.mxu0 0.0
    %4324 = vmatpush1.msra.mxu0 0.0
    %4325 = vmatprep.subr.mxu0 0.0
    %4326 = vmatpush1.msra.mxu0 0.0
    %4327 = vmatprep.subr.mxu0 0.0
    %4328 = vmatpush1.msra.mxu0 0.0
    %4329 = vmatprep.mubr.f32.mxu0 0.0
    %4330 = vmatmul.mubr.f32.gmra.mrb[0].mxu0 %v4243
    %v4331 = vpop.f32.mrb[0].mxu0
    %v4332 = vadd.f32 %v4264, %v4331
    %v4333 = vpop.f32.mrb[0].mxu0
    %4334 = vdwg.mxu0
    %v4335 = vtanh.pop %v4332
    %v4336 = vld [vmem:[%s6 + $0x1] sm:$0x1]
    %v4337 = vlaneseq
    %v4338 = vshrl.u32 %v4337, 7
    %v4339 = vsub.s32 0, %v4338
    %v4340 = vrot.slane %v4336, %v4339
    %v4341 = vmul.f32 %v4335, %v4340
    %4342 = vst [vmem:[#allocation2] sm:$0xff] %v4341
    // Predicated region
    $region30: #{han_forward_pallas.1} parent=1 // pred_check
      _
    $region31: #{han_forward_pallas.1} parent=1 // pred_check_branch
      %4344 = sbr.rel (0) target = $region33
    $region32: #{han_forward_pallas.1} parent=1 // pred_region
      %s4346 = ssub.s32 128, 128
      %4347 = vsyncadd [#allocation3], %s4346
      %s4349 = sshll.u32 [#allocation2], 4
      %s4350 = int_to_ptr.vmem [resolvable:$true] %s4349
      %4352 = dma.vmem_to_hbm [thread:$0]  %s4350, 128, %s7, [#allocation3]
    $region33: #{han_forward_pallas.1} parent=1 // pred_fallthru
      _
    // Predicated region
    $region34: #{han_forward_pallas.1} parent=1 // pred_check
      _
    $region35: #{han_forward_pallas.1} parent=1 // pred_check_branch
      %4354 = sbr.rel (0) target = $region37
    $region36: #{han_forward_pallas.1} parent=1 // pred_region
      %4355 = dma.done [#allocation3], 128
    $region37: #{han_forward_pallas.1} parent=1 // pred_fallthru
      _
    %4356 = vsyncpa [#allocation3], 1

</llo_original>
